<compile_context>
chip_gen: v7x
topology: tpu7x:2x2x1
jax: 0.10.0
libtpu: 0.0.40
codegen_flags: <defaults>
</compile_context>

<pallas_src>
import functools

import jax
import jax.numpy as jnp
import numpy as np
from jax.experimental import pallas as pl
from jax.experimental.pallas import tpu as pltpu


def _lstm_kernel(gx0_ref, whh0_ref, w1ih_ref, w1hh_ref, b1_ref, h1_out_ref,
                 h0_ref, c0_ref, h1_ref, c1_ref, *, Tc, B, H):
    """One time-chunk of the 2-layer LSTM recurrence.

    gx0_ref   : (Tc, B, 4H) f32   precomputed x_t @ W_ih_l0^T + b0 (hoisted GEMM)
    whh0_ref  : (H, 4H)    bf16   W_hh_l0^T
    w1ih_ref  : (H, 4H)    bf16   W_ih_l1^T
    w1hh_ref  : (H, 4H)    bf16   W_hh_l1^T
    b1_ref    : (1, 4H)    f32    b_ih_l1 + b_hh_l1
    h1_out_ref: (Tc, B, H) bf16   top-layer hidden states (lane-dense output)
    h0/c0/h1/c1_ref: (B, H) f32   VMEM scratch carrying state across chunks
    """
    @pl.when(pl.program_id(0) == 0)
    def _():
        h0_ref[...] = jnp.zeros_like(h0_ref)
        c0_ref[...] = jnp.zeros_like(c0_ref)
        h1_ref[...] = jnp.zeros_like(h1_ref)
        c1_ref[...] = jnp.zeros_like(c1_ref)

    # Weight/bias reads (and the bias broadcast) hoisted out of the time loop.
    whh0 = whh0_ref[...]
    w1ih = w1ih_ref[...]
    w1hh = w1hh_ref[...]
    b1 = jnp.broadcast_to(b1_ref[...], (B, 4 * H))

    def gates_to_hc(gates, c_prev):
        # PyTorch gate order along the 4H axis: [i, f, g, o]; all math in f32.
        i = jax.nn.sigmoid(gates[:, 0:H])
        f = jax.nn.sigmoid(gates[:, H:2 * H])
        g = jnp.tanh(gates[:, 2 * H:3 * H])
        o = jax.nn.sigmoid(gates[:, 3 * H:4 * H])
        c = f * c_prev + i * g
        h = o * jnp.tanh(c)
        return h, c

    def body(t, carry):
        h0, c0, h1, c1 = carry
        # Layer 0: only the recurrent dot is inside the loop (bf16 in, f32 acc).
        gates0 = gx0_ref[t] + jnp.dot(h0.astype(jnp.bfloat16), whh0,
                                      preferred_element_type=jnp.float32)
        h0, c0 = gates_to_hc(gates0, c0)
        # Layer 1: two accumulating dots -- no per-step (B, 2H) lane concat.
        gates1 = (jnp.dot(h0.astype(jnp.bfloat16), w1ih,
                          preferred_element_type=jnp.float32)
                  + jnp.dot(h1.astype(jnp.bfloat16), w1hh,
                            preferred_element_type=jnp.float32)
                  + b1)
        h1, c1 = gates_to_hc(gates1, c1)
        h1_out_ref[t] = h1.astype(h1_out_ref.dtype)
        return (h0, c0, h1, c1)

    carry0 = (h0_ref[...], c0_ref[...], h1_ref[...], c1_ref[...])
    h0, c0, h1, c1 = jax.lax.fori_loop(
        0, Tc, body, carry0, unroll=True if Tc <= 8 else 4)
    # Persist state for the next time chunk.
    h0_ref[...] = h0
    c0_ref[...] = c0
    h1_ref[...] = h1
    c1_ref[...] = c1


def _choose_time_chunk(T, B, Hp):
    """Largest time chunk whose streamed buffers (double-buffered f32 gx0 chunk
    + bf16 output chunk) stay within an ~8 MiB budget."""
    bytes_per_step = 2 * (B * 4 * Hp * 4 + B * Hp * 2)  # x2: double buffering
    budget = 8 * 1024 * 1024
    return int(max(1, min(T, budget // max(bytes_per_step, 1))))


def prepare_params(params, hidden):
    """One-time weight preprocessing (call once, reuse across forward calls).

    Per-gate zero-pads hidden H -> Hp (multiple of 128, e.g. 500 -> 512) so the
    i/f/g/o slices stay lane-aligned, pre-transposes everything to (in, 4Hp)
    layout, fuses the biases, splits layer-1 into its ih/hh halves, and casts the
    recurrent weights to bf16.  Padded lanes provably stay exactly 0 (zero gate
    rows/cols -> i=f=o=0.5, g=0 -> padded c/h stay 0), so real outputs are exact.
    """
    H = hidden
    Hp = 128 * pl.cdiv(H, 128)

    def pad_gates_mat(w, in_pad_to=None):
        # w: (4H, IN) PyTorch layout -> (4Hp, IN or in_pad_to), padded entries zero.
        IN = w.shape[1]
        pad_in = 0 if in_pad_to is None else in_pad_to - IN
        w4 = w.reshape(4, H, IN)
        w4 = jnp.pad(w4, ((0, 0), (0, Hp - H), (0, pad_in)))
        return w4.reshape(4 * Hp, IN + pad_in)

    def pad_gates_vec(b):
        return jnp.pad(b.reshape(4, H), ((0, 0), (0, Hp - H))).reshape(4 * Hp)

    wih0 = pad_gates_mat(params["w_ih_l0"])                     # (4Hp, F)
    whh0 = pad_gates_mat(params["w_hh_l0"], in_pad_to=Hp)       # (4Hp, Hp)
    b0 = pad_gates_vec(params["b_ih_l0"] + params["b_hh_l0"])   # (4Hp,)
    wih1 = pad_gates_mat(params["w_ih_l1"], in_pad_to=Hp)       # (4Hp, Hp)
    whh1 = pad_gates_mat(params["w_hh_l1"], in_pad_to=Hp)       # (4Hp, Hp)
    b1 = pad_gates_vec(params["b_ih_l1"] + params["b_hh_l1"])   # (4Hp,)

    return {
        "wih0_t": wih0.T.astype(jnp.float32),                   # (F, 4Hp)  f32
        "b0": b0.reshape(1, 1, 4 * Hp).astype(jnp.float32),
        "whh0_t": whh0.T.astype(jnp.bfloat16),                  # (Hp, 4Hp) bf16
        "w1ih_t": wih1.T.astype(jnp.bfloat16),                  # (Hp, 4Hp) bf16
        "w1hh_t": whh1.T.astype(jnp.bfloat16),                  # (Hp, 4Hp) bf16
        "b1": b1.reshape(1, 4 * Hp).astype(jnp.float32),
        "w_fc_t": params["w_fc"].T.astype(jnp.bfloat16),        # (H, OUT)  bf16
        "b_fc": params["b_fc"].astype(jnp.float32),
    }


@jax.jit
def simple_lstm_forward(x, prep):
    """x: (B, T, F) f32 -> (B, T, OUT) f32, same semantics as SimpleLSTM.forward."""
    B, T, F = x.shape
    Hp = prep["whh0_t"].shape[0]   # padded, lane-aligned hidden size (static)
    H = prep["w_fc_t"].shape[0]    # true hidden size (static)

    # Hoisted non-recurrent layer-0 input projection for all timesteps (one GEMM).
    x_tbf = jnp.transpose(x, (1, 0, 2))                                # (T, B, F)
    gx0 = jnp.einsum("tbf,fg->tbg", x_tbf, prep["wih0_t"],
                     preferred_element_type=jnp.float32) + prep["b0"]  # (T, B, 4Hp)

    Tc = _choose_time_chunk(T, B, Hp)
    n_chunks = pl.cdiv(T, Tc)
    Tp = n_chunks * Tc
    if Tp != T:  # pad streamed activations so time chunks are uniform (extra rows discarded)
        gx0 = jnp.pad(gx0, ((0, Tp - T), (0, 0), (0, 0)))

    h1_seq = pl.pallas_call(
        functools.partial(_lstm_kernel, Tc=Tc, B=B, H=Hp),
        out_shape=jax.ShapeDtypeStruct((Tp, B, Hp), jnp.bfloat16),
        grid_spec=pltpu.PrefetchScalarGridSpec(
            num_scalar_prefetch=0,
            grid=(n_chunks,),
            in_specs=[
                pl.BlockSpec((Tc, B, 4 * Hp), lambda t: (t, 0, 0)),  # streamed gx0 chunk
                pl.BlockSpec((Hp, 4 * Hp), lambda t: (0, 0)),        # resident weights
                pl.BlockSpec((Hp, 4 * Hp), lambda t: (0, 0)),        # (constant index_map
                pl.BlockSpec((Hp, 4 * Hp), lambda t: (0, 0)),        #  -> DMA'd once)
                pl.BlockSpec((1, 4 * Hp), lambda t: (0, 0)),
            ],
            out_specs=pl.BlockSpec((Tc, B, Hp), lambda t: (t, 0, 0)),
            scratch_shapes=[pltpu.VMEM((B, Hp), jnp.float32)] * 4,   # h0, c0, h1, c1
        ),
        compiler_params=pltpu.CompilerParams(
            dimension_semantics=("arbitrary",),          # time chunks are sequential
            vmem_limit_bytes=32 * 1024 * 1024),
    )(gx0, prep["whh0_t"], prep["w1ih_t"], prep["w1hh_t"], prep["b1"])

    # FC head on the unpadded top-layer hidden states: one batched GEMM outside
    # the serial recurrence (bf16 inputs, f32 accumulation).
    y = jnp.einsum("tbh,ho->tbo", h1_seq[:T, :, :H], prep["w_fc_t"],
                   preferred_element_type=jnp.float32) + prep["b_fc"]
    return jnp.transpose(y, (1, 0, 2))  # (B, T, OUT)


def _init_params(key, input_size, hidden, output_size):
    """Deterministic PyTorch-style init: U(-1/sqrt(H), 1/sqrt(H))."""
    k = 1.0 / np.sqrt(hidden)
    shapes = {
        "w_ih_l0": (4 * hidden, input_size),
        "w_hh_l0": (4 * hidden, hidden),
        "b_ih_l0": (4 * hidden,),
        "b_hh_l0": (4 * hidden,),
        "w_ih_l1": (4 * hidden, hidden),
        "w_hh_l1": (4 * hidden, hidden),
        "b_ih_l1": (4 * hidden,),
        "b_hh_l1": (4 * hidden,),
        "w_fc": (output_size, hidden),
        "b_fc": (output_size,),
    }
    params = {}
    keys = jax.random.split(key, len(shapes))
    for sub, (name, shape) in zip(keys, shapes.items()):
        params[name] = jax.random.uniform(sub, shape, jnp.float32, -k, k)
    return params


def _reference_forward(x, params, hidden):
    """Pure-JAX f32 reference (lax.scan) matching PyTorch nn.LSTM semantics."""
    B, T, F = x.shape
    H = hidden

    def cell(x_in, h_prev, c_prev, w_ih, w_hh, b_ih, b_hh):
        gates = x_in @ w_ih.T + h_prev @ w_hh.T + b_ih + b_hh
        i = jax.nn.sigmoid(gates[:, 0:H])
        f = jax.nn.sigmoid(gates[:, H:2 * H])
        g = jnp.tanh(gates[:, 2 * H:3 * H])
        o = jax.nn.sigmoid(gates[:, 3 * H:4 * H])
        c = f * c_prev + i * g
        h = o * jnp.tanh(c)
        return h, c

    def step(carry, x_t):
        h0, c0, h1, c1 = carry
        h0, c0 = cell(x_t, h0, c0, params["w_ih_l0"], params["w_hh_l0"],
                      params["b_ih_l0"], params["b_hh_l0"])
        h1, c1 = cell(h0, h1, c1, params["w_ih_l1"], params["w_hh_l1"],
                      params["b_ih_l1"], params["b_hh_l1"])
        y = h1 @ params["w_fc"].T + params["b_fc"]
        return (h0, c0, h1, c1), y

    zeros = jnp.zeros((B, H), jnp.float32)
    _, ys = jax.lax.scan(step, (zeros, zeros, zeros, zeros),
                         jnp.transpose(x, (1, 0, 2)))
    return jnp.transpose(ys, (1, 0, 2))


if __name__ == "__main__":
    # Small shapes consistent with the module (input_size=1, output_size=1,
    # num_layers=2).  hidden=128 exercises the lane-aligned path; hidden=32
    # exercises the same zero-pad path the module's hidden=500 (-> 512) takes.
    B, T, F, OUT = 2, 8, 1, 1
    key = jax.random.PRNGKey(0)
    k_x, k_p, k_x2, k_p2 = jax.random.split(key, 4)

    H = 128
    x = jax.random.normal(k_x, (B, T, F), jnp.float32)
    params = _init_params(k_p, F, H, OUT)
    prep = prepare_params(params, H)   # one-time weight prep, reused per call
    y = jax.block_until_ready(simple_lstm_forward(x, prep))
    assert y.shape == (B, T, OUT), y.shape
    y_ref = jax.block_until_ready(_reference_forward(x, params, H))
    np.testing.assert_allclose(np.asarray(y), np.asarray(y_ref), rtol=2e-2, atol=2e-2)

    H2 = 32
    x2 = jax.random.normal(k_x2, (B, T, F), jnp.float32)
    params2 = _init_params(k_p2, F, H2, OUT)
    prep2 = prepare_params(params2, H2)
    y2 = jax.block_until_ready(simple_lstm_forward(x2, prep2))
    y2_ref = jax.block_until_ready(_reference_forward(x2, params2, H2))
    np.testing.assert_allclose(np.asarray(y2), np.asarray(y2_ref), rtol=2e-2, atol=2e-2)

    print("KERNEL_OK")
</pallas_src>

<mosaic_0001>
module attributes {stable_mosaic.version = 11 : i64} {
  func.func @_lstm_kernel(%arg0: i32, %arg1: memref<8x2x512xf32, #tpu.memory_space<vmem>>, %arg2: memref<128x512xbf16, #tpu.memory_space<vmem>>, %arg3: memref<128x512xbf16, #tpu.memory_space<vmem>>, %arg4: memref<128x512xbf16, #tpu.memory_space<vmem>>, %arg5: memref<1x512xf32, #tpu.memory_space<vmem>>, %arg6: memref<8x2x128xbf16, #tpu.memory_space<vmem>>, %arg7: memref<2x128xf32, #tpu.memory_space<vmem>>, %arg8: memref<2x128xf32, #tpu.memory_space<vmem>>, %arg9: memref<2x128xf32, #tpu.memory_space<vmem>>, %arg10: memref<2x128xf32, #tpu.memory_space<vmem>>) attributes {dimension_semantics = [#tpu.dimension_semantics<arbitrary>], iteration_bounds = array<i64: 1>, scalar_prefetch = 0 : i64, scratch_operands = 4 : i64, tpu.core_type = #tpu.core_type<tc>, window_params = [{transform_indices = @transform_0, window_bounds = array<i64: 8, 2, 512>}, {pipeline_mode = #tpu.pipeline_mode<synchronous>, transform_indices = @transform_1, window_bounds = array<i64: 128, 512>}, {pipeline_mode = #tpu.pipeline_mode<synchronous>, transform_indices = @transform_2, window_bounds = array<i64: 128, 512>}, {pipeline_mode = #tpu.pipeline_mode<synchronous>, transform_indices = @transform_3, window_bounds = array<i64: 128, 512>}, {pipeline_mode = #tpu.pipeline_mode<synchronous>, transform_indices = @transform_4, window_bounds = array<i64: 1, 512>}, {transform_indices = @transform_5, window_bounds = array<i64: 8, 2, 128>}]} {
    %c0_i32 = arith.constant 0 : i32
    %0 = arith.cmpi eq, %arg0, %c0_i32 : i32
    %1 = arith.extui %0 : i1 to i32
    %c0_i32_0 = arith.constant 0 : i32
    %2 = arith.cmpi ne, %1, %c0_i32_0 : i32
    scf.if %2 {
      %cst_128 = arith.constant 0.000000e+00 : f32
      %553 = vector.broadcast %cst_128 : f32 to vector<2x128xf32>
      %c0_129 = arith.constant 0 : index
      %c0_130 = arith.constant 0 : index
      %554 = vector.load %arg7[%c0_129, %c0_130] : memref<2x128xf32, #tpu.memory_space<vmem>>, vector<2x128xf32>
      tpu.vector_store %arg7[%c0_129, %c0_130], %553 {strides = array<i32>} : memref<2x128xf32, #tpu.memory_space<vmem>>, vector<2x128xf32>,
      %cst_131 = arith.constant 0.000000e+00 : f32
      %555 = vector.broadcast %cst_131 : f32 to vector<2x128xf32>
      %c0_132 = arith.constant 0 : index
      %c0_133 = arith.constant 0 : index
      %556 = vector.load %arg8[%c0_132, %c0_133] : memref<2x128xf32, #tpu.memory_space<vmem>>, vector<2x128xf32>
      tpu.vector_store %arg8[%c0_132, %c0_133], %555 {strides = array<i32>} : memref<2x128xf32, #tpu.memory_space<vmem>>, vector<2x128xf32>,
      %cst_134 = arith.constant 0.000000e+00 : f32
      %557 = vector.broadcast %cst_134 : f32 to vector<2x128xf32>
      %c0_135 = arith.constant 0 : index
      %c0_136 = arith.constant 0 : index
      %558 = vector.load %arg9[%c0_135, %c0_136] : memref<2x128xf32, #tpu.memory_space<vmem>>, vector<2x128xf32>
      tpu.vector_store %arg9[%c0_135, %c0_136], %557 {strides = array<i32>} : memref<2x128xf32, #tpu.memory_space<vmem>>, vector<2x128xf32>,
      %cst_137 = arith.constant 0.000000e+00 : f32
      %559 = vector.broadcast %cst_137 : f32 to vector<2x128xf32>
      %c0_138 = arith.constant 0 : index
      %c0_139 = arith.constant 0 : index
      %560 = vector.load %arg10[%c0_138, %c0_139] : memref<2x128xf32, #tpu.memory_space<vmem>>, vector<2x128xf32>
      tpu.vector_store %arg10[%c0_138, %c0_139], %559 {strides = array<i32>} : memref<2x128xf32, #tpu.memory_space<vmem>>, vector<2x128xf32>,
    } else {
    }
    %c0 = arith.constant 0 : index
    %c0_1 = arith.constant 0 : index
    %3 = vector.load %arg2[%c0, %c0_1] : memref<128x512xbf16, #tpu.memory_space<vmem>>, vector<128x512xbf16>
    %c0_2 = arith.constant 0 : index
    %c0_3 = arith.constant 0 : index
    %4 = vector.load %arg3[%c0_2, %c0_3] : memref<128x512xbf16, #tpu.memory_space<vmem>>, vector<128x512xbf16>
    %c0_4 = arith.constant 0 : index
    %c0_5 = arith.constant 0 : index
    %5 = vector.load %arg4[%c0_4, %c0_5] : memref<128x512xbf16, #tpu.memory_space<vmem>>, vector<128x512xbf16>
    %c0_6 = arith.constant 0 : index
    %c0_7 = arith.constant 0 : index
    %6 = vector.load %arg5[%c0_6, %c0_7] : memref<1x512xf32, #tpu.memory_space<vmem>>, vector<1x512xf32>
    %7 = vector.shape_cast %6 : vector<1x512xf32> to vector<1x512xf32>
    %8 = vector.broadcast %7 : vector<1x512xf32> to vector<2x512xf32>
    %c0_8 = arith.constant 0 : index
    %c0_9 = arith.constant 0 : index
    %9 = vector.load %arg7[%c0_8, %c0_9] : memref<2x128xf32, #tpu.memory_space<vmem>>, vector<2x128xf32>
    %c0_10 = arith.constant 0 : index
    %c0_11 = arith.constant 0 : index
    %10 = vector.load %arg8[%c0_10, %c0_11] : memref<2x128xf32, #tpu.memory_space<vmem>>, vector<2x128xf32>
    %c0_12 = arith.constant 0 : index
    %c0_13 = arith.constant 0 : index
    %11 = vector.load %arg9[%c0_12, %c0_13] : memref<2x128xf32, #tpu.memory_space<vmem>>, vector<2x128xf32>
    %c0_14 = arith.constant 0 : index
    %c0_15 = arith.constant 0 : index
    %12 = vector.load %arg10[%c0_14, %c0_15] : memref<2x128xf32, #tpu.memory_space<vmem>>, vector<2x128xf32>
    %c0_i32_16 = arith.constant 0 : i32
    %13 = arith.index_cast %c0_i32_16 : i32 to index
    %c0_17 = arith.constant 0 : index
    %c0_18 = arith.constant 0 : index
    %14 = vector.load %arg1[%13, %c0_17, %c0_18] : memref<8x2x512xf32, #tpu.memory_space<vmem>>, vector<1x2x512xf32>
    %15 = vector.shape_cast %14 : vector<1x2x512xf32> to vector<2x512xf32>
    %16 = arith.truncf %9 : vector<2x128xf32> to vector<2x128xbf16>
    %cst = arith.constant dense<0.000000e+00> : vector<2x512xf32>
    %17 = tpu.matmul %16, %3, %cst {dimension_numbers = #tpu.dot_dimension_numbers<[1], [0], [0], [1], [0, 0, 1, 1], [], []>} : vector<2x128xbf16>, vector<128x512xbf16>, vector<2x512xf32> -> vector<2x512xf32>
    %18 = arith.addf %15, %17 : vector<2x512xf32>
    %19 = vector.extract_strided_slice %18 {offsets = [0, 0], sizes = [2, 128], strides = [1, 1]} : vector<2x512xf32> to vector<2x128xf32>
    %20 = arith.negf %19 : vector<2x128xf32>
    %21 = math.exp %20 : vector<2x128xf32>
    %cst_19 = arith.constant 1.000000e+00 : f32
    %22 = vector.broadcast %cst_19 : f32 to vector<2x128xf32>
    %23 = arith.addf %22, %21 : vector<2x128xf32>
    %24 = arith.divf %22, %23 : vector<2x128xf32>
    %25 = vector.extract_strided_slice %18 {offsets = [0, 128], sizes = [2, 128], strides = [1, 1]} : vector<2x512xf32> to vector<2x128xf32>
    %26 = arith.negf %25 : vector<2x128xf32>
    %27 = math.exp %26 : vector<2x128xf32>
    %cst_20 = arith.constant 1.000000e+00 : f32
    %28 = vector.broadcast %cst_20 : f32 to vector<2x128xf32>
    %29 = arith.addf %28, %27 : vector<2x128xf32>
    %30 = arith.divf %28, %29 : vector<2x128xf32>
    %31 = vector.extract_strided_slice %18 {offsets = [0, 256], sizes = [2, 128], strides = [1, 1]} : vector<2x512xf32> to vector<2x128xf32>
    %32 = math.tanh %31 : vector<2x128xf32>
    %33 = vector.extract_strided_slice %18 {offsets = [0, 384], sizes = [2, 128], strides = [1, 1]} : vector<2x512xf32> to vector<2x128xf32>
    %34 = arith.negf %33 : vector<2x128xf32>
    %35 = math.exp %34 : vector<2x128xf32>
    %cst_21 = arith.constant 1.000000e+00 : f32
    %36 = vector.broadcast %cst_21 : f32 to vector<2x128xf32>
    %37 = arith.addf %36, %35 : vector<2x128xf32>
    %38 = arith.divf %36, %37 : vector<2x128xf32>
    %39 = arith.mulf %30, %10 : vector<2x128xf32>
    %40 = arith.mulf %24, %32 : vector<2x128xf32>
    %41 = arith.addf %39, %40 : vector<2x128xf32>
    %42 = math.tanh %41 : vector<2x128xf32>
    %43 = arith.mulf %38, %42 : vector<2x128xf32>
    %44 = arith.truncf %43 : vector<2x128xf32> to vector<2x128xbf16>
    %cst_22 = arith.constant dense<0.000000e+00> : vector<2x512xf32>
    %45 = tpu.matmul %44, %4, %cst_22 {dimension_numbers = #tpu.dot_dimension_numbers<[1], [0], [0], [1], [0, 0, 1, 1], [], []>} : vector<2x128xbf16>, vector<128x512xbf16>, vector<2x512xf32> -> vector<2x512xf32>
    %46 = arith.truncf %11 : vector<2x128xf32> to vector<2x128xbf16>
    %cst_23 = arith.constant dense<0.000000e+00> : vector<2x512xf32>
    %47 = tpu.matmul %46, %5, %cst_23 {dimension_numbers = #tpu.dot_dimension_numbers<[1], [0], [0], [1], [0, 0, 1, 1], [], []>} : vector<2x128xbf16>, vector<128x512xbf16>, vector<2x512xf32> -> vector<2x512xf32>
    %48 = arith.addf %45, %47 : vector<2x512xf32>
    %49 = arith.addf %48, %8 : vector<2x512xf32>
    %50 = vector.extract_strided_slice %49 {offsets = [0, 0], sizes = [2, 128], strides = [1, 1]} : vector<2x512xf32> to vector<2x128xf32>
    %51 = arith.negf %50 : vector<2x128xf32>
    %52 = math.exp %51 : vector<2x128xf32>
    %cst_24 = arith.constant 1.000000e+00 : f32
    %53 = vector.broadcast %cst_24 : f32 to vector<2x128xf32>
    %54 = arith.addf %53, %52 : vector<2x128xf32>
    %55 = arith.divf %53, %54 : vector<2x128xf32>
    %56 = vector.extract_strided_slice %49 {offsets = [0, 128], sizes = [2, 128], strides = [1, 1]} : vector<2x512xf32> to vector<2x128xf32>
    %57 = arith.negf %56 : vector<2x128xf32>
    %58 = math.exp %57 : vector<2x128xf32>
    %cst_25 = arith.constant 1.000000e+00 : f32
    %59 = vector.broadcast %cst_25 : f32 to vector<2x128xf32>
    %60 = arith.addf %59, %58 : vector<2x128xf32>
    %61 = arith.divf %59, %60 : vector<2x128xf32>
    %62 = vector.extract_strided_slice %49 {offsets = [0, 256], sizes = [2, 128], strides = [1, 1]} : vector<2x512xf32> to vector<2x128xf32>
    %63 = math.tanh %62 : vector<2x128xf32>
    %64 = vector.extract_strided_slice %49 {offsets = [0, 384], sizes = [2, 128], strides = [1, 1]} : vector<2x512xf32> to vector<2x128xf32>
    %65 = arith.negf %64 : vector<2x128xf32>
    %66 = math.exp %65 : vector<2x128xf32>
    %cst_26 = arith.constant 1.000000e+00 : f32
    %67 = vector.broadcast %cst_26 : f32 to vector<2x128xf32>
    %68 = arith.addf %67, %66 : vector<2x128xf32>
    %69 = arith.divf %67, %68 : vector<2x128xf32>
    %70 = arith.mulf %61, %12 : vector<2x128xf32>
    %71 = arith.mulf %55, %63 : vector<2x128xf32>
    %72 = arith.addf %70, %71 : vector<2x128xf32>
    %73 = math.tanh %72 : vector<2x128xf32>
    %74 = arith.mulf %69, %73 : vector<2x128xf32>
    %75 = arith.truncf %74 : vector<2x128xf32> to vector<2x128xbf16>
    %76 = arith.index_cast %c0_i32_16 : i32 to index
    %c0_27 = arith.constant 0 : index
    %c0_28 = arith.constant 0 : index
    %77 = vector.load %arg6[%76, %c0_27, %c0_28] : memref<8x2x128xbf16, #tpu.memory_space<vmem>>, vector<1x2x128xbf16>
    %78 = vector.shape_cast %77 : vector<1x2x128xbf16> to vector<2x128xbf16>
    %79 = vector.shape_cast %75 : vector<2x128xbf16> to vector<1x2x128xbf16>
    tpu.vector_store %arg6[%76, %c0_27, %c0_28], %79 {strides = array<i32>} : memref<8x2x128xbf16, #tpu.memory_space<vmem>>, vector<1x2x128xbf16>,
    %c1_i32 = arith.constant 1 : i32
    %80 = arith.index_cast %c1_i32 : i32 to index
    %c0_29 = arith.constant 0 : index
    %c0_30 = arith.constant 0 : index
    %81 = vector.load %arg1[%80, %c0_29, %c0_30] : memref<8x2x512xf32, #tpu.memory_space<vmem>>, vector<1x2x512xf32>
    %82 = vector.shape_cast %81 : vector<1x2x512xf32> to vector<2x512xf32>
    %83 = arith.truncf %43 : vector<2x128xf32> to vector<2x128xbf16>
    %cst_31 = arith.constant dense<0.000000e+00> : vector<2x512xf32>
    %84 = tpu.matmul %83, %3, %cst_31 {dimension_numbers = #tpu.dot_dimension_numbers<[1], [0], [0], [1], [0, 0, 1, 1], [], []>} : vector<2x128xbf16>, vector<128x512xbf16>, vector<2x512xf32> -> vector<2x512xf32>
    %85 = arith.addf %82, %84 : vector<2x512xf32>
    %86 = vector.extract_strided_slice %85 {offsets = [0, 0], sizes = [2, 128], strides = [1, 1]} : vector<2x512xf32> to vector<2x128xf32>
    %87 = arith.negf %86 : vector<2x128xf32>
    %88 = math.exp %87 : vector<2x128xf32>
    %cst_32 = arith.constant 1.000000e+00 : f32
    %89 = vector.broadcast %cst_32 : f32 to vector<2x128xf32>
    %90 = arith.addf %89, %88 : vector<2x128xf32>
    %91 = arith.divf %89, %90 : vector<2x128xf32>
    %92 = vector.extract_strided_slice %85 {offsets = [0, 128], sizes = [2, 128], strides = [1, 1]} : vector<2x512xf32> to vector<2x128xf32>
    %93 = arith.negf %92 : vector<2x128xf32>
    %94 = math.exp %93 : vector<2x128xf32>
    %cst_33 = arith.constant 1.000000e+00 : f32
    %95 = vector.broadcast %cst_33 : f32 to vector<2x128xf32>
    %96 = arith.addf %95, %94 : vector<2x128xf32>
    %97 = arith.divf %95, %96 : vector<2x128xf32>
    %98 = vector.extract_strided_slice %85 {offsets = [0, 256], sizes = [2, 128], strides = [1, 1]} : vector<2x512xf32> to vector<2x128xf32>
    %99 = math.tanh %98 : vector<2x128xf32>
    %100 = vector.extract_strided_slice %85 {offsets = [0, 384], sizes = [2, 128], strides = [1, 1]} : vector<2x512xf32> to vector<2x128xf32>
    %101 = arith.negf %100 : vector<2x128xf32>
    %102 = math.exp %101 : vector<2x128xf32>
    %cst_34 = arith.constant 1.000000e+00 : f32
    %103 = vector.broadcast %cst_34 : f32 to vector<2x128xf32>
    %104 = arith.addf %103, %102 : vector<2x128xf32>
    %105 = arith.divf %103, %104 : vector<2x128xf32>
    %106 = arith.mulf %97, %41 : vector<2x128xf32>
    %107 = arith.mulf %91, %99 : vector<2x128xf32>
    %108 = arith.addf %106, %107 : vector<2x128xf32>
    %109 = math.tanh %108 : vector<2x128xf32>
    %110 = arith.mulf %105, %109 : vector<2x128xf32>
    %111 = arith.truncf %110 : vector<2x128xf32> to vector<2x128xbf16>
    %cst_35 = arith.constant dense<0.000000e+00> : vector<2x512xf32>
    %112 = tpu.matmul %111, %4, %cst_35 {dimension_numbers = #tpu.dot_dimension_numbers<[1], [0], [0], [1], [0, 0, 1, 1], [], []>} : vector<2x128xbf16>, vector<128x512xbf16>, vector<2x512xf32> -> vector<2x512xf32>
    %113 = arith.truncf %74 : vector<2x128xf32> to vector<2x128xbf16>
    %cst_36 = arith.constant dense<0.000000e+00> : vector<2x512xf32>
    %114 = tpu.matmul %113, %5, %cst_36 {dimension_numbers = #tpu.dot_dimension_numbers<[1], [0], [0], [1], [0, 0, 1, 1], [], []>} : vector<2x128xbf16>, vector<128x512xbf16>, vector<2x512xf32> -> vector<2x512xf32>
    %115 = arith.addf %112, %114 : vector<2x512xf32>
    %116 = arith.addf %115, %8 : vector<2x512xf32>
    %117 = vector.extract_strided_slice %116 {offsets = [0, 0], sizes = [2, 128], strides = [1, 1]} : vector<2x512xf32> to vector<2x128xf32>
    %118 = arith.negf %117 : vector<2x128xf32>
    %119 = math.exp %118 : vector<2x128xf32>
    %cst_37 = arith.constant 1.000000e+00 : f32
    %120 = vector.broadcast %cst_37 : f32 to vector<2x128xf32>
    %121 = arith.addf %120, %119 : vector<2x128xf32>
    %122 = arith.divf %120, %121 : vector<2x128xf32>
    %123 = vector.extract_strided_slice %116 {offsets = [0, 128], sizes = [2, 128], strides = [1, 1]} : vector<2x512xf32> to vector<2x128xf32>
    %124 = arith.negf %123 : vector<2x128xf32>
    %125 = math.exp %124 : vector<2x128xf32>
    %cst_38 = arith.constant 1.000000e+00 : f32
    %126 = vector.broadcast %cst_38 : f32 to vector<2x128xf32>
    %127 = arith.addf %126, %125 : vector<2x128xf32>
    %128 = arith.divf %126, %127 : vector<2x128xf32>
    %129 = vector.extract_strided_slice %116 {offsets = [0, 256], sizes = [2, 128], strides = [1, 1]} : vector<2x512xf32> to vector<2x128xf32>
    %130 = math.tanh %129 : vector<2x128xf32>
    %131 = vector.extract_strided_slice %116 {offsets = [0, 384], sizes = [2, 128], strides = [1, 1]} : vector<2x512xf32> to vector<2x128xf32>
    %132 = arith.negf %131 : vector<2x128xf32>
    %133 = math.exp %132 : vector<2x128xf32>
    %cst_39 = arith.constant 1.000000e+00 : f32
    %134 = vector.broadcast %cst_39 : f32 to vector<2x128xf32>
    %135 = arith.addf %134, %133 : vector<2x128xf32>
    %136 = arith.divf %134, %135 : vector<2x128xf32>
    %137 = arith.mulf %128, %72 : vector<2x128xf32>
    %138 = arith.mulf %122, %130 : vector<2x128xf32>
    %139 = arith.addf %137, %138 : vector<2x128xf32>
    %140 = math.tanh %139 : vector<2x128xf32>
    %141 = arith.mulf %136, %140 : vector<2x128xf32>
    %142 = arith.truncf %141 : vector<2x128xf32> to vector<2x128xbf16>
    %143 = arith.index_cast %c1_i32 : i32 to index
    %c0_40 = arith.constant 0 : index
    %c0_41 = arith.constant 0 : index
    %144 = vector.load %arg6[%143, %c0_40, %c0_41] : memref<8x2x128xbf16, #tpu.memory_space<vmem>>, vector<1x2x128xbf16>
    %145 = vector.shape_cast %144 : vector<1x2x128xbf16> to vector<2x128xbf16>
    %146 = vector.shape_cast %142 : vector<2x128xbf16> to vector<1x2x128xbf16>
    tpu.vector_store %arg6[%143, %c0_40, %c0_41], %146 {strides = array<i32>} : memref<8x2x128xbf16, #tpu.memory_space<vmem>>, vector<1x2x128xbf16>,
    %c2_i32 = arith.constant 2 : i32
    %147 = arith.index_cast %c2_i32 : i32 to index
    %c0_42 = arith.constant 0 : index
    %c0_43 = arith.constant 0 : index
    %148 = vector.load %arg1[%147, %c0_42, %c0_43] : memref<8x2x512xf32, #tpu.memory_space<vmem>>, vector<1x2x512xf32>
    %149 = vector.shape_cast %148 : vector<1x2x512xf32> to vector<2x512xf32>
    %150 = arith.truncf %110 : vector<2x128xf32> to vector<2x128xbf16>
    %cst_44 = arith.constant dense<0.000000e+00> : vector<2x512xf32>
    %151 = tpu.matmul %150, %3, %cst_44 {dimension_numbers = #tpu.dot_dimension_numbers<[1], [0], [0], [1], [0, 0, 1, 1], [], []>} : vector<2x128xbf16>, vector<128x512xbf16>, vector<2x512xf32> -> vector<2x512xf32>
    %152 = arith.addf %149, %151 : vector<2x512xf32>
    %153 = vector.extract_strided_slice %152 {offsets = [0, 0], sizes = [2, 128], strides = [1, 1]} : vector<2x512xf32> to vector<2x128xf32>
    %154 = arith.negf %153 : vector<2x128xf32>
    %155 = math.exp %154 : vector<2x128xf32>
    %cst_45 = arith.constant 1.000000e+00 : f32
    %156 = vector.broadcast %cst_45 : f32 to vector<2x128xf32>
    %157 = arith.addf %156, %155 : vector<2x128xf32>
    %158 = arith.divf %156, %157 : vector<2x128xf32>
    %159 = vector.extract_strided_slice %152 {offsets = [0, 128], sizes = [2, 128], strides = [1, 1]} : vector<2x512xf32> to vector<2x128xf32>
    %160 = arith.negf %159 : vector<2x128xf32>
    %161 = math.exp %160 : vector<2x128xf32>
    %cst_46 = arith.constant 1.000000e+00 : f32
    %162 = vector.broadcast %cst_46 : f32 to vector<2x128xf32>
    %163 = arith.addf %162, %161 : vector<2x128xf32>
    %164 = arith.divf %162, %163 : vector<2x128xf32>
    %165 = vector.extract_strided_slice %152 {offsets = [0, 256], sizes = [2, 128], strides = [1, 1]} : vector<2x512xf32> to vector<2x128xf32>
    %166 = math.tanh %165 : vector<2x128xf32>
    %167 = vector.extract_strided_slice %152 {offsets = [0, 384], sizes = [2, 128], strides = [1, 1]} : vector<2x512xf32> to vector<2x128xf32>
    %168 = arith.negf %167 : vector<2x128xf32>
    %169 = math.exp %168 : vector<2x128xf32>
    %cst_47 = arith.constant 1.000000e+00 : f32
    %170 = vector.broadcast %cst_47 : f32 to vector<2x128xf32>
    %171 = arith.addf %170, %169 : vector<2x128xf32>
    %172 = arith.divf %170, %171 : vector<2x128xf32>
    %173 = arith.mulf %164, %108 : vector<2x128xf32>
    %174 = arith.mulf %158, %166 : vector<2x128xf32>
    %175 = arith.addf %173, %174 : vector<2x128xf32>
    %176 = math.tanh %175 : vector<2x128xf32>
    %177 = arith.mulf %172, %176 : vector<2x128xf32>
    %178 = arith.truncf %177 : vector<2x128xf32> to vector<2x128xbf16>
    %cst_48 = arith.constant dense<0.000000e+00> : vector<2x512xf32>
    %179 = tpu.matmul %178, %4, %cst_48 {dimension_numbers = #tpu.dot_dimension_numbers<[1], [0], [0], [1], [0, 0, 1, 1], [], []>} : vector<2x128xbf16>, vector<128x512xbf16>, vector<2x512xf32> -> vector<2x512xf32>
    %180 = arith.truncf %141 : vector<2x128xf32> to vector<2x128xbf16>
    %cst_49 = arith.constant dense<0.000000e+00> : vector<2x512xf32>
    %181 = tpu.matmul %180, %5, %cst_49 {dimension_numbers = #tpu.dot_dimension_numbers<[1], [0], [0], [1], [0, 0, 1, 1], [], []>} : vector<2x128xbf16>, vector<128x512xbf16>, vector<2x512xf32> -> vector<2x512xf32>
    %182 = arith.addf %179, %181 : vector<2x512xf32>
    %183 = arith.addf %182, %8 : vector<2x512xf32>
    %184 = vector.extract_strided_slice %183 {offsets = [0, 0], sizes = [2, 128], strides = [1, 1]} : vector<2x512xf32> to vector<2x128xf32>
    %185 = arith.negf %184 : vector<2x128xf32>
    %186 = math.exp %185 : vector<2x128xf32>
    %cst_50 = arith.constant 1.000000e+00 : f32
    %187 = vector.broadcast %cst_50 : f32 to vector<2x128xf32>
    %188 = arith.addf %187, %186 : vector<2x128xf32>
    %189 = arith.divf %187, %188 : vector<2x128xf32>
    %190 = vector.extract_strided_slice %183 {offsets = [0, 128], sizes = [2, 128], strides = [1, 1]} : vector<2x512xf32> to vector<2x128xf32>
    %191 = arith.negf %190 : vector<2x128xf32>
    %192 = math.exp %191 : vector<2x128xf32>
    %cst_51 = arith.constant 1.000000e+00 : f32
    %193 = vector.broadcast %cst_51 : f32 to vector<2x128xf32>
    %194 = arith.addf %193, %192 : vector<2x128xf32>
    %195 = arith.divf %193, %194 : vector<2x128xf32>
    %196 = vector.extract_strided_slice %183 {offsets = [0, 256], sizes = [2, 128], strides = [1, 1]} : vector<2x512xf32> to vector<2x128xf32>
    %197 = math.tanh %196 : vector<2x128xf32>
    %198 = vector.extract_strided_slice %183 {offsets = [0, 384], sizes = [2, 128], strides = [1, 1]} : vector<2x512xf32> to vector<2x128xf32>
    %199 = arith.negf %198 : vector<2x128xf32>
    %200 = math.exp %199 : vector<2x128xf32>
    %cst_52 = arith.constant 1.000000e+00 : f32
    %201 = vector.broadcast %cst_52 : f32 to vector<2x128xf32>
    %202 = arith.addf %201, %200 : vector<2x128xf32>
    %203 = arith.divf %201, %202 : vector<2x128xf32>
    %204 = arith.mulf %195, %139 : vector<2x128xf32>
    %205 = arith.mulf %189, %197 : vector<2x128xf32>
    %206 = arith.addf %204, %205 : vector<2x128xf32>
    %207 = math.tanh %206 : vector<2x128xf32>
    %208 = arith.mulf %203, %207 : vector<2x128xf32>
    %209 = arith.truncf %208 : vector<2x128xf32> to vector<2x128xbf16>
    %210 = arith.index_cast %c2_i32 : i32 to index
    %c0_53 = arith.constant 0 : index
    %c0_54 = arith.constant 0 : index
    %211 = vector.load %arg6[%210, %c0_53, %c0_54] : memref<8x2x128xbf16, #tpu.memory_space<vmem>>, vector<1x2x128xbf16>
    %212 = vector.shape_cast %211 : vector<1x2x128xbf16> to vector<2x128xbf16>
    %213 = vector.shape_cast %209 : vector<2x128xbf16> to vector<1x2x128xbf16>
    tpu.vector_store %arg6[%210, %c0_53, %c0_54], %213 {strides = array<i32>} : memref<8x2x128xbf16, #tpu.memory_space<vmem>>, vector<1x2x128xbf16>,
    %c3_i32 = arith.constant 3 : i32
    %214 = arith.index_cast %c3_i32 : i32 to index
    %c0_55 = arith.constant 0 : index
    %c0_56 = arith.constant 0 : index
    %215 = vector.load %arg1[%214, %c0_55, %c0_56] : memref<8x2x512xf32, #tpu.memory_space<vmem>>, vector<1x2x512xf32>
    %216 = vector.shape_cast %215 : vector<1x2x512xf32> to vector<2x512xf32>
    %217 = arith.truncf %177 : vector<2x128xf32> to vector<2x128xbf16>
    %cst_57 = arith.constant dense<0.000000e+00> : vector<2x512xf32>
    %218 = tpu.matmul %217, %3, %cst_57 {dimension_numbers = #tpu.dot_dimension_numbers<[1], [0], [0], [1], [0, 0, 1, 1], [], []>} : vector<2x128xbf16>, vector<128x512xbf16>, vector<2x512xf32> -> vector<2x512xf32>
    %219 = arith.addf %216, %218 : vector<2x512xf32>
    %220 = vector.extract_strided_slice %219 {offsets = [0, 0], sizes = [2, 128], strides = [1, 1]} : vector<2x512xf32> to vector<2x128xf32>
    %221 = arith.negf %220 : vector<2x128xf32>
    %222 = math.exp %221 : vector<2x128xf32>
    %cst_58 = arith.constant 1.000000e+00 : f32
    %223 = vector.broadcast %cst_58 : f32 to vector<2x128xf32>
    %224 = arith.addf %223, %222 : vector<2x128xf32>
    %225 = arith.divf %223, %224 : vector<2x128xf32>
    %226 = vector.extract_strided_slice %219 {offsets = [0, 128], sizes = [2, 128], strides = [1, 1]} : vector<2x512xf32> to vector<2x128xf32>
    %227 = arith.negf %226 : vector<2x128xf32>
    %228 = math.exp %227 : vector<2x128xf32>
    %cst_59 = arith.constant 1.000000e+00 : f32
    %229 = vector.broadcast %cst_59 : f32 to vector<2x128xf32>
    %230 = arith.addf %229, %228 : vector<2x128xf32>
    %231 = arith.divf %229, %230 : vector<2x128xf32>
    %232 = vector.extract_strided_slice %219 {offsets = [0, 256], sizes = [2, 128], strides = [1, 1]} : vector<2x512xf32> to vector<2x128xf32>
    %233 = math.tanh %232 : vector<2x128xf32>
    %234 = vector.extract_strided_slice %219 {offsets = [0, 384], sizes = [2, 128], strides = [1, 1]} : vector<2x512xf32> to vector<2x128xf32>
    %235 = arith.negf %234 : vector<2x128xf32>
    %236 = math.exp %235 : vector<2x128xf32>
    %cst_60 = arith.constant 1.000000e+00 : f32
    %237 = vector.broadcast %cst_60 : f32 to vector<2x128xf32>
    %238 = arith.addf %237, %236 : vector<2x128xf32>
    %239 = arith.divf %237, %238 : vector<2x128xf32>
    %240 = arith.mulf %231, %175 : vector<2x128xf32>
    %241 = arith.mulf %225, %233 : vector<2x128xf32>
    %242 = arith.addf %240, %241 : vector<2x128xf32>
    %243 = math.tanh %242 : vector<2x128xf32>
    %244 = arith.mulf %239, %243 : vector<2x128xf32>
    %245 = arith.truncf %244 : vector<2x128xf32> to vector<2x128xbf16>
    %cst_61 = arith.constant dense<0.000000e+00> : vector<2x512xf32>
    %246 = tpu.matmul %245, %4, %cst_61 {dimension_numbers = #tpu.dot_dimension_numbers<[1], [0], [0], [1], [0, 0, 1, 1], [], []>} : vector<2x128xbf16>, vector<128x512xbf16>, vector<2x512xf32> -> vector<2x512xf32>
    %247 = arith.truncf %208 : vector<2x128xf32> to vector<2x128xbf16>
    %cst_62 = arith.constant dense<0.000000e+00> : vector<2x512xf32>
    %248 = tpu.matmul %247, %5, %cst_62 {dimension_numbers = #tpu.dot_dimension_numbers<[1], [0], [0], [1], [0, 0, 1, 1], [], []>} : vector<2x128xbf16>, vector<128x512xbf16>, vector<2x512xf32> -> vector<2x512xf32>
    %249 = arith.addf %246, %248 : vector<2x512xf32>
    %250 = arith.addf %249, %8 : vector<2x512xf32>
    %251 = vector.extract_strided_slice %250 {offsets = [0, 0], sizes = [2, 128], strides = [1, 1]} : vector<2x512xf32> to vector<2x128xf32>
    %252 = arith.negf %251 : vector<2x128xf32>
    %253 = math.exp %252 : vector<2x128xf32>
    %cst_63 = arith.constant 1.000000e+00 : f32
    %254 = vector.broadcast %cst_63 : f32 to vector<2x128xf32>
    %255 = arith.addf %254, %253 : vector<2x128xf32>
    %256 = arith.divf %254, %255 : vector<2x128xf32>
    %257 = vector.extract_strided_slice %250 {offsets = [0, 128], sizes = [2, 128], strides = [1, 1]} : vector<2x512xf32> to vector<2x128xf32>
    %258 = arith.negf %257 : vector<2x128xf32>
    %259 = math.exp %258 : vector<2x128xf32>
    %cst_64 = arith.constant 1.000000e+00 : f32
    %260 = vector.broadcast %cst_64 : f32 to vector<2x128xf32>
    %261 = arith.addf %260, %259 : vector<2x128xf32>
    %262 = arith.divf %260, %261 : vector<2x128xf32>
    %263 = vector.extract_strided_slice %250 {offsets = [0, 256], sizes = [2, 128], strides = [1, 1]} : vector<2x512xf32> to vector<2x128xf32>
    %264 = math.tanh %263 : vector<2x128xf32>
    %265 = vector.extract_strided_slice %250 {offsets = [0, 384], sizes = [2, 128], strides = [1, 1]} : vector<2x512xf32> to vector<2x128xf32>
    %266 = arith.negf %265 : vector<2x128xf32>
    %267 = math.exp %266 : vector<2x128xf32>
    %cst_65 = arith.constant 1.000000e+00 : f32
    %268 = vector.broadcast %cst_65 : f32 to vector<2x128xf32>
    %269 = arith.addf %268, %267 : vector<2x128xf32>
    %270 = arith.divf %268, %269 : vector<2x128xf32>
    %271 = arith.mulf %262, %206 : vector<2x128xf32>
    %272 = arith.mulf %256, %264 : vector<2x128xf32>
    %273 = arith.addf %271, %272 : vector<2x128xf32>
    %274 = math.tanh %273 : vector<2x128xf32>
    %275 = arith.mulf %270, %274 : vector<2x128xf32>
    %276 = arith.truncf %275 : vector<2x128xf32> to vector<2x128xbf16>
    %277 = arith.index_cast %c3_i32 : i32 to index
    %c0_66 = arith.constant 0 : index
    %c0_67 = arith.constant 0 : index
    %278 = vector.load %arg6[%277, %c0_66, %c0_67] : memref<8x2x128xbf16, #tpu.memory_space<vmem>>, vector<1x2x128xbf16>
    %279 = vector.shape_cast %278 : vector<1x2x128xbf16> to vector<2x128xbf16>
    %280 = vector.shape_cast %276 : vector<2x128xbf16> to vector<1x2x128xbf16>
    tpu.vector_store %arg6[%277, %c0_66, %c0_67], %280 {strides = array<i32>} : memref<8x2x128xbf16, #tpu.memory_space<vmem>>, vector<1x2x128xbf16>,
    %c4_i32 = arith.constant 4 : i32
    %281 = arith.index_cast %c4_i32 : i32 to index
    %c0_68 = arith.constant 0 : index
    %c0_69 = arith.constant 0 : index
    %282 = vector.load %arg1[%281, %c0_68, %c0_69] : memref<8x2x512xf32, #tpu.memory_space<vmem>>, vector<1x2x512xf32>
    %283 = vector.shape_cast %282 : vector<1x2x512xf32> to vector<2x512xf32>
    %284 = arith.truncf %244 : vector<2x128xf32> to vector<2x128xbf16>
    %cst_70 = arith.constant dense<0.000000e+00> : vector<2x512xf32>
    %285 = tpu.matmul %284, %3, %cst_70 {dimension_numbers = #tpu.dot_dimension_numbers<[1], [0], [0], [1], [0, 0, 1, 1], [], []>} : vector<2x128xbf16>, vector<128x512xbf16>, vector<2x512xf32> -> vector<2x512xf32>
    %286 = arith.addf %283, %285 : vector<2x512xf32>
    %287 = vector.extract_strided_slice %286 {offsets = [0, 0], sizes = [2, 128], strides = [1, 1]} : vector<2x512xf32> to vector<2x128xf32>
    %288 = arith.negf %287 : vector<2x128xf32>
    %289 = math.exp %288 : vector<2x128xf32>
    %cst_71 = arith.constant 1.000000e+00 : f32
    %290 = vector.broadcast %cst_71 : f32 to vector<2x128xf32>
    %291 = arith.addf %290, %289 : vector<2x128xf32>
    %292 = arith.divf %290, %291 : vector<2x128xf32>
    %293 = vector.extract_strided_slice %286 {offsets = [0, 128], sizes = [2, 128], strides = [1, 1]} : vector<2x512xf32> to vector<2x128xf32>
    %294 = arith.negf %293 : vector<2x128xf32>
    %295 = math.exp %294 : vector<2x128xf32>
    %cst_72 = arith.constant 1.000000e+00 : f32
    %296 = vector.broadcast %cst_72 : f32 to vector<2x128xf32>
    %297 = arith.addf %296, %295 : vector<2x128xf32>
    %298 = arith.divf %296, %297 : vector<2x128xf32>
    %299 = vector.extract_strided_slice %286 {offsets = [0, 256], sizes = [2, 128], strides = [1, 1]} : vector<2x512xf32> to vector<2x128xf32>
    %300 = math.tanh %299 : vector<2x128xf32>
    %301 = vector.extract_strided_slice %286 {offsets = [0, 384], sizes = [2, 128], strides = [1, 1]} : vector<2x512xf32> to vector<2x128xf32>
    %302 = arith.negf %301 : vector<2x128xf32>
    %303 = math.exp %302 : vector<2x128xf32>
    %cst_73 = arith.constant 1.000000e+00 : f32
    %304 = vector.broadcast %cst_73 : f32 to vector<2x128xf32>
    %305 = arith.addf %304, %303 : vector<2x128xf32>
    %306 = arith.divf %304, %305 : vector<2x128xf32>
    %307 = arith.mulf %298, %242 : vector<2x128xf32>
    %308 = arith.mulf %292, %300 : vector<2x128xf32>
    %309 = arith.addf %307, %308 : vector<2x128xf32>
    %310 = math.tanh %309 : vector<2x128xf32>
    %311 = arith.mulf %306, %310 : vector<2x128xf32>
    %312 = arith.truncf %311 : vector<2x128xf32> to vector<2x128xbf16>
    %cst_74 = arith.constant dense<0.000000e+00> : vector<2x512xf32>
    %313 = tpu.matmul %312, %4, %cst_74 {dimension_numbers = #tpu.dot_dimension_numbers<[1], [0], [0], [1], [0, 0, 1, 1], [], []>} : vector<2x128xbf16>, vector<128x512xbf16>, vector<2x512xf32> -> vector<2x512xf32>
    %314 = arith.truncf %275 : vector<2x128xf32> to vector<2x128xbf16>
    %cst_75 = arith.constant dense<0.000000e+00> : vector<2x512xf32>
    %315 = tpu.matmul %314, %5, %cst_75 {dimension_numbers = #tpu.dot_dimension_numbers<[1], [0], [0], [1], [0, 0, 1, 1], [], []>} : vector<2x128xbf16>, vector<128x512xbf16>, vector<2x512xf32> -> vector<2x512xf32>
    %316 = arith.addf %313, %315 : vector<2x512xf32>
    %317 = arith.addf %316, %8 : vector<2x512xf32>
    %318 = vector.extract_strided_slice %317 {offsets = [0, 0], sizes = [2, 128], strides = [1, 1]} : vector<2x512xf32> to vector<2x128xf32>
    %319 = arith.negf %318 : vector<2x128xf32>
    %320 = math.exp %319 : vector<2x128xf32>
    %cst_76 = arith.constant 1.000000e+00 : f32
    %321 = vector.broadcast %cst_76 : f32 to vector<2x128xf32>
    %322 = arith.addf %321, %320 : vector<2x128xf32>
    %323 = arith.divf %321, %322 : vector<2x128xf32>
    %324 = vector.extract_strided_slice %317 {offsets = [0, 128], sizes = [2, 128], strides = [1, 1]} : vector<2x512xf32> to vector<2x128xf32>
    %325 = arith.negf %324 : vector<2x128xf32>
    %326 = math.exp %325 : vector<2x128xf32>
    %cst_77 = arith.constant 1.000000e+00 : f32
    %327 = vector.broadcast %cst_77 : f32 to vector<2x128xf32>
    %328 = arith.addf %327, %326 : vector<2x128xf32>
    %329 = arith.divf %327, %328 : vector<2x128xf32>
    %330 = vector.extract_strided_slice %317 {offsets = [0, 256], sizes = [2, 128], strides = [1, 1]} : vector<2x512xf32> to vector<2x128xf32>
    %331 = math.tanh %330 : vector<2x128xf32>
    %332 = vector.extract_strided_slice %317 {offsets = [0, 384], sizes = [2, 128], strides = [1, 1]} : vector<2x512xf32> to vector<2x128xf32>
    %333 = arith.negf %332 : vector<2x128xf32>
    %334 = math.exp %333 : vector<2x128xf32>
    %cst_78 = arith.constant 1.000000e+00 : f32
    %335 = vector.broadcast %cst_78 : f32 to vector<2x128xf32>
    %336 = arith.addf %335, %334 : vector<2x128xf32>
    %337 = arith.divf %335, %336 : vector<2x128xf32>
    %338 = arith.mulf %329, %273 : vector<2x128xf32>
    %339 = arith.mulf %323, %331 : vector<2x128xf32>
    %340 = arith.addf %338, %339 : vector<2x128xf32>
    %341 = math.tanh %340 : vector<2x128xf32>
    %342 = arith.mulf %337, %341 : vector<2x128xf32>
    %343 = arith.truncf %342 : vector<2x128xf32> to vector<2x128xbf16>
    %344 = arith.index_cast %c4_i32 : i32 to index
    %c0_79 = arith.constant 0 : index
    %c0_80 = arith.constant 0 : index
    %345 = vector.load %arg6[%344, %c0_79, %c0_80] : memref<8x2x128xbf16, #tpu.memory_space<vmem>>, vector<1x2x128xbf16>
    %346 = vector.shape_cast %345 : vector<1x2x128xbf16> to vector<2x128xbf16>
    %347 = vector.shape_cast %343 : vector<2x128xbf16> to vector<1x2x128xbf16>
    tpu.vector_store %arg6[%344, %c0_79, %c0_80], %347 {strides = array<i32>} : memref<8x2x128xbf16, #tpu.memory_space<vmem>>, vector<1x2x128xbf16>,
    %c5_i32 = arith.constant 5 : i32
    %348 = arith.index_cast %c5_i32 : i32 to index
    %c0_81 = arith.constant 0 : index
    %c0_82 = arith.constant 0 : index
    %349 = vector.load %arg1[%348, %c0_81, %c0_82] : memref<8x2x512xf32, #tpu.memory_space<vmem>>, vector<1x2x512xf32>
    %350 = vector.shape_cast %349 : vector<1x2x512xf32> to vector<2x512xf32>
    %351 = arith.truncf %311 : vector<2x128xf32> to vector<2x128xbf16>
    %cst_83 = arith.constant dense<0.000000e+00> : vector<2x512xf32>
    %352 = tpu.matmul %351, %3, %cst_83 {dimension_numbers = #tpu.dot_dimension_numbers<[1], [0], [0], [1], [0, 0, 1, 1], [], []>} : vector<2x128xbf16>, vector<128x512xbf16>, vector<2x512xf32> -> vector<2x512xf32>
    %353 = arith.addf %350, %352 : vector<2x512xf32>
    %354 = vector.extract_strided_slice %353 {offsets = [0, 0], sizes = [2, 128], strides = [1, 1]} : vector<2x512xf32> to vector<2x128xf32>
    %355 = arith.negf %354 : vector<2x128xf32>
    %356 = math.exp %355 : vector<2x128xf32>
    %cst_84 = arith.constant 1.000000e+00 : f32
    %357 = vector.broadcast %cst_84 : f32 to vector<2x128xf32>
    %358 = arith.addf %357, %356 : vector<2x128xf32>
    %359 = arith.divf %357, %358 : vector<2x128xf32>
    %360 = vector.extract_strided_slice %353 {offsets = [0, 128], sizes = [2, 128], strides = [1, 1]} : vector<2x512xf32> to vector<2x128xf32>
    %361 = arith.negf %360 : vector<2x128xf32>
    %362 = math.exp %361 : vector<2x128xf32>
    %cst_85 = arith.constant 1.000000e+00 : f32
    %363 = vector.broadcast %cst_85 : f32 to vector<2x128xf32>
    %364 = arith.addf %363, %362 : vector<2x128xf32>
    %365 = arith.divf %363, %364 : vector<2x128xf32>
    %366 = vector.extract_strided_slice %353 {offsets = [0, 256], sizes = [2, 128], strides = [1, 1]} : vector<2x512xf32> to vector<2x128xf32>
    %367 = math.tanh %366 : vector<2x128xf32>
    %368 = vector.extract_strided_slice %353 {offsets = [0, 384], sizes = [2, 128], strides = [1, 1]} : vector<2x512xf32> to vector<2x128xf32>
    %369 = arith.negf %368 : vector<2x128xf32>
    %370 = math.exp %369 : vector<2x128xf32>
    %cst_86 = arith.constant 1.000000e+00 : f32
    %371 = vector.broadcast %cst_86 : f32 to vector<2x128xf32>
    %372 = arith.addf %371, %370 : vector<2x128xf32>
    %373 = arith.divf %371, %372 : vector<2x128xf32>
    %374 = arith.mulf %365, %309 : vector<2x128xf32>
    %375 = arith.mulf %359, %367 : vector<2x128xf32>
    %376 = arith.addf %374, %375 : vector<2x128xf32>
    %377 = math.tanh %376 : vector<2x128xf32>
    %378 = arith.mulf %373, %377 : vector<2x128xf32>
    %379 = arith.truncf %378 : vector<2x128xf32> to vector<2x128xbf16>
    %cst_87 = arith.constant dense<0.000000e+00> : vector<2x512xf32>
    %380 = tpu.matmul %379, %4, %cst_87 {dimension_numbers = #tpu.dot_dimension_numbers<[1], [0], [0], [1], [0, 0, 1, 1], [], []>} : vector<2x128xbf16>, vector<128x512xbf16>, vector<2x512xf32> -> vector<2x512xf32>
    %381 = arith.truncf %342 : vector<2x128xf32> to vector<2x128xbf16>
    %cst_88 = arith.constant dense<0.000000e+00> : vector<2x512xf32>
    %382 = tpu.matmul %381, %5, %cst_88 {dimension_numbers = #tpu.dot_dimension_numbers<[1], [0], [0], [1], [0, 0, 1, 1], [], []>} : vector<2x128xbf16>, vector<128x512xbf16>, vector<2x512xf32> -> vector<2x512xf32>
    %383 = arith.addf %380, %382 : vector<2x512xf32>
    %384 = arith.addf %383, %8 : vector<2x512xf32>
    %385 = vector.extract_strided_slice %384 {offsets = [0, 0], sizes = [2, 128], strides = [1, 1]} : vector<2x512xf32> to vector<2x128xf32>
    %386 = arith.negf %385 : vector<2x128xf32>
    %387 = math.exp %386 : vector<2x128xf32>
    %cst_89 = arith.constant 1.000000e+00 : f32
    %388 = vector.broadcast %cst_89 : f32 to vector<2x128xf32>
    %389 = arith.addf %388, %387 : vector<2x128xf32>
    %390 = arith.divf %388, %389 : vector<2x128xf32>
    %391 = vector.extract_strided_slice %384 {offsets = [0, 128], sizes = [2, 128], strides = [1, 1]} : vector<2x512xf32> to vector<2x128xf32>
    %392 = arith.negf %391 : vector<2x128xf32>
    %393 = math.exp %392 : vector<2x128xf32>
    %cst_90 = arith.constant 1.000000e+00 : f32
    %394 = vector.broadcast %cst_90 : f32 to vector<2x128xf32>
    %395 = arith.addf %394, %393 : vector<2x128xf32>
    %396 = arith.divf %394, %395 : vector<2x128xf32>
    %397 = vector.extract_strided_slice %384 {offsets = [0, 256], sizes = [2, 128], strides = [1, 1]} : vector<2x512xf32> to vector<2x128xf32>
    %398 = math.tanh %397 : vector<2x128xf32>
    %399 = vector.extract_strided_slice %384 {offsets = [0, 384], sizes = [2, 128], strides = [1, 1]} : vector<2x512xf32> to vector<2x128xf32>
    %400 = arith.negf %399 : vector<2x128xf32>
    %401 = math.exp %400 : vector<2x128xf32>
    %cst_91 = arith.constant 1.000000e+00 : f32
    %402 = vector.broadcast %cst_91 : f32 to vector<2x128xf32>
    %403 = arith.addf %402, %401 : vector<2x128xf32>
    %404 = arith.divf %402, %403 : vector<2x128xf32>
    %405 = arith.mulf %396, %340 : vector<2x128xf32>
    %406 = arith.mulf %390, %398 : vector<2x128xf32>
    %407 = arith.addf %405, %406 : vector<2x128xf32>
    %408 = math.tanh %407 : vector<2x128xf32>
    %409 = arith.mulf %404, %408 : vector<2x128xf32>
    %410 = arith.truncf %409 : vector<2x128xf32> to vector<2x128xbf16>
    %411 = arith.index_cast %c5_i32 : i32 to index
    %c0_92 = arith.constant 0 : index
    %c0_93 = arith.constant 0 : index
    %412 = vector.load %arg6[%411, %c0_92, %c0_93] : memref<8x2x128xbf16, #tpu.memory_space<vmem>>, vector<1x2x128xbf16>
    %413 = vector.shape_cast %412 : vector<1x2x128xbf16> to vector<2x128xbf16>
    %414 = vector.shape_cast %410 : vector<2x128xbf16> to vector<1x2x128xbf16>
    tpu.vector_store %arg6[%411, %c0_92, %c0_93], %414 {strides = array<i32>} : memref<8x2x128xbf16, #tpu.memory_space<vmem>>, vector<1x2x128xbf16>,
    %c6_i32 = arith.constant 6 : i32
    %415 = arith.index_cast %c6_i32 : i32 to index
    %c0_94 = arith.constant 0 : index
    %c0_95 = arith.constant 0 : index
    %416 = vector.load %arg1[%415, %c0_94, %c0_95] : memref<8x2x512xf32, #tpu.memory_space<vmem>>, vector<1x2x512xf32>
    %417 = vector.shape_cast %416 : vector<1x2x512xf32> to vector<2x512xf32>
    %418 = arith.truncf %378 : vector<2x128xf32> to vector<2x128xbf16>
    %cst_96 = arith.constant dense<0.000000e+00> : vector<2x512xf32>
    %419 = tpu.matmul %418, %3, %cst_96 {dimension_numbers = #tpu.dot_dimension_numbers<[1], [0], [0], [1], [0, 0, 1, 1], [], []>} : vector<2x128xbf16>, vector<128x512xbf16>, vector<2x512xf32> -> vector<2x512xf32>
    %420 = arith.addf %417, %419 : vector<2x512xf32>
    %421 = vector.extract_strided_slice %420 {offsets = [0, 0], sizes = [2, 128], strides = [1, 1]} : vector<2x512xf32> to vector<2x128xf32>
    %422 = arith.negf %421 : vector<2x128xf32>
    %423 = math.exp %422 : vector<2x128xf32>
    %cst_97 = arith.constant 1.000000e+00 : f32
    %424 = vector.broadcast %cst_97 : f32 to vector<2x128xf32>
    %425 = arith.addf %424, %423 : vector<2x128xf32>
    %426 = arith.divf %424, %425 : vector<2x128xf32>
    %427 = vector.extract_strided_slice %420 {offsets = [0, 128], sizes = [2, 128], strides = [1, 1]} : vector<2x512xf32> to vector<2x128xf32>
    %428 = arith.negf %427 : vector<2x128xf32>
    %429 = math.exp %428 : vector<2x128xf32>
    %cst_98 = arith.constant 1.000000e+00 : f32
    %430 = vector.broadcast %cst_98 : f32 to vector<2x128xf32>
    %431 = arith.addf %430, %429 : vector<2x128xf32>
    %432 = arith.divf %430, %431 : vector<2x128xf32>
    %433 = vector.extract_strided_slice %420 {offsets = [0, 256], sizes = [2, 128], strides = [1, 1]} : vector<2x512xf32> to vector<2x128xf32>
    %434 = math.tanh %433 : vector<2x128xf32>
    %435 = vector.extract_strided_slice %420 {offsets = [0, 384], sizes = [2, 128], strides = [1, 1]} : vector<2x512xf32> to vector<2x128xf32>
    %436 = arith.negf %435 : vector<2x128xf32>
    %437 = math.exp %436 : vector<2x128xf32>
    %cst_99 = arith.constant 1.000000e+00 : f32
    %438 = vector.broadcast %cst_99 : f32 to vector<2x128xf32>
    %439 = arith.addf %438, %437 : vector<2x128xf32>
    %440 = arith.divf %438, %439 : vector<2x128xf32>
    %441 = arith.mulf %432, %376 : vector<2x128xf32>
    %442 = arith.mulf %426, %434 : vector<2x128xf32>
    %443 = arith.addf %441, %442 : vector<2x128xf32>
    %444 = math.tanh %443 : vector<2x128xf32>
    %445 = arith.mulf %440, %444 : vector<2x128xf32>
    %446 = arith.truncf %445 : vector<2x128xf32> to vector<2x128xbf16>
    %cst_100 = arith.constant dense<0.000000e+00> : vector<2x512xf32>
    %447 = tpu.matmul %446, %4, %cst_100 {dimension_numbers = #tpu.dot_dimension_numbers<[1], [0], [0], [1], [0, 0, 1, 1], [], []>} : vector<2x128xbf16>, vector<128x512xbf16>, vector<2x512xf32> -> vector<2x512xf32>
    %448 = arith.truncf %409 : vector<2x128xf32> to vector<2x128xbf16>
    %cst_101 = arith.constant dense<0.000000e+00> : vector<2x512xf32>
    %449 = tpu.matmul %448, %5, %cst_101 {dimension_numbers = #tpu.dot_dimension_numbers<[1], [0], [0], [1], [0, 0, 1, 1], [], []>} : vector<2x128xbf16>, vector<128x512xbf16>, vector<2x512xf32> -> vector<2x512xf32>
    %450 = arith.addf %447, %449 : vector<2x512xf32>
    %451 = arith.addf %450, %8 : vector<2x512xf32>
    %452 = vector.extract_strided_slice %451 {offsets = [0, 0], sizes = [2, 128], strides = [1, 1]} : vector<2x512xf32> to vector<2x128xf32>
    %453 = arith.negf %452 : vector<2x128xf32>
    %454 = math.exp %453 : vector<2x128xf32>
    %cst_102 = arith.constant 1.000000e+00 : f32
    %455 = vector.broadcast %cst_102 : f32 to vector<2x128xf32>
    %456 = arith.addf %455, %454 : vector<2x128xf32>
    %457 = arith.divf %455, %456 : vector<2x128xf32>
    %458 = vector.extract_strided_slice %451 {offsets = [0, 128], sizes = [2, 128], strides = [1, 1]} : vector<2x512xf32> to vector<2x128xf32>
    %459 = arith.negf %458 : vector<2x128xf32>
    %460 = math.exp %459 : vector<2x128xf32>
    %cst_103 = arith.constant 1.000000e+00 : f32
    %461 = vector.broadcast %cst_103 : f32 to vector<2x128xf32>
    %462 = arith.addf %461, %460 : vector<2x128xf32>
    %463 = arith.divf %461, %462 : vector<2x128xf32>
    %464 = vector.extract_strided_slice %451 {offsets = [0, 256], sizes = [2, 128], strides = [1, 1]} : vector<2x512xf32> to vector<2x128xf32>
    %465 = math.tanh %464 : vector<2x128xf32>
    %466 = vector.extract_strided_slice %451 {offsets = [0, 384], sizes = [2, 128], strides = [1, 1]} : vector<2x512xf32> to vector<2x128xf32>
    %467 = arith.negf %466 : vector<2x128xf32>
    %468 = math.exp %467 : vector<2x128xf32>
    %cst_104 = arith.constant 1.000000e+00 : f32
    %469 = vector.broadcast %cst_104 : f32 to vector<2x128xf32>
    %470 = arith.addf %469, %468 : vector<2x128xf32>
    %471 = arith.divf %469, %470 : vector<2x128xf32>
    %472 = arith.mulf %463, %407 : vector<2x128xf32>
    %473 = arith.mulf %457, %465 : vector<2x128xf32>
    %474 = arith.addf %472, %473 : vector<2x128xf32>
    %475 = math.tanh %474 : vector<2x128xf32>
    %476 = arith.mulf %471, %475 : vector<2x128xf32>
    %477 = arith.truncf %476 : vector<2x128xf32> to vector<2x128xbf16>
    %478 = arith.index_cast %c6_i32 : i32 to index
    %c0_105 = arith.constant 0 : index
    %c0_106 = arith.constant 0 : index
    %479 = vector.load %arg6[%478, %c0_105, %c0_106] : memref<8x2x128xbf16, #tpu.memory_space<vmem>>, vector<1x2x128xbf16>
    %480 = vector.shape_cast %479 : vector<1x2x128xbf16> to vector<2x128xbf16>
    %481 = vector.shape_cast %477 : vector<2x128xbf16> to vector<1x2x128xbf16>
    tpu.vector_store %arg6[%478, %c0_105, %c0_106], %481 {strides = array<i32>} : memref<8x2x128xbf16, #tpu.memory_space<vmem>>, vector<1x2x128xbf16>,
    %c7_i32 = arith.constant 7 : i32
    %482 = arith.index_cast %c7_i32 : i32 to index
    %c0_107 = arith.constant 0 : index
    %c0_108 = arith.constant 0 : index
    %483 = vector.load %arg1[%482, %c0_107, %c0_108] : memref<8x2x512xf32, #tpu.memory_space<vmem>>, vector<1x2x512xf32>
    %484 = vector.shape_cast %483 : vector<1x2x512xf32> to vector<2x512xf32>
    %485 = arith.truncf %445 : vector<2x128xf32> to vector<2x128xbf16>
    %cst_109 = arith.constant dense<0.000000e+00> : vector<2x512xf32>
    %486 = tpu.matmul %485, %3, %cst_109 {dimension_numbers = #tpu.dot_dimension_numbers<[1], [0], [0], [1], [0, 0, 1, 1], [], []>} : vector<2x128xbf16>, vector<128x512xbf16>, vector<2x512xf32> -> vector<2x512xf32>
    %487 = arith.addf %484, %486 : vector<2x512xf32>
    %488 = vector.extract_strided_slice %487 {offsets = [0, 0], sizes = [2, 128], strides = [1, 1]} : vector<2x512xf32> to vector<2x128xf32>
    %489 = arith.negf %488 : vector<2x128xf32>
    %490 = math.exp %489 : vector<2x128xf32>
    %cst_110 = arith.constant 1.000000e+00 : f32
    %491 = vector.broadcast %cst_110 : f32 to vector<2x128xf32>
    %492 = arith.addf %491, %490 : vector<2x128xf32>
    %493 = arith.divf %491, %492 : vector<2x128xf32>
    %494 = vector.extract_strided_slice %487 {offsets = [0, 128], sizes = [2, 128], strides = [1, 1]} : vector<2x512xf32> to vector<2x128xf32>
    %495 = arith.negf %494 : vector<2x128xf32>
    %496 = math.exp %495 : vector<2x128xf32>
    %cst_111 = arith.constant 1.000000e+00 : f32
    %497 = vector.broadcast %cst_111 : f32 to vector<2x128xf32>
    %498 = arith.addf %497, %496 : vector<2x128xf32>
    %499 = arith.divf %497, %498 : vector<2x128xf32>
    %500 = vector.extract_strided_slice %487 {offsets = [0, 256], sizes = [2, 128], strides = [1, 1]} : vector<2x512xf32> to vector<2x128xf32>
    %501 = math.tanh %500 : vector<2x128xf32>
    %502 = vector.extract_strided_slice %487 {offsets = [0, 384], sizes = [2, 128], strides = [1, 1]} : vector<2x512xf32> to vector<2x128xf32>
    %503 = arith.negf %502 : vector<2x128xf32>
    %504 = math.exp %503 : vector<2x128xf32>
    %cst_112 = arith.constant 1.000000e+00 : f32
    %505 = vector.broadcast %cst_112 : f32 to vector<2x128xf32>
    %506 = arith.addf %505, %504 : vector<2x128xf32>
    %507 = arith.divf %505, %506 : vector<2x128xf32>
    %508 = arith.mulf %499, %443 : vector<2x128xf32>
    %509 = arith.mulf %493, %501 : vector<2x128xf32>
    %510 = arith.addf %508, %509 : vector<2x128xf32>
    %511 = math.tanh %510 : vector<2x128xf32>
    %512 = arith.mulf %507, %511 : vector<2x128xf32>
    %513 = arith.truncf %512 : vector<2x128xf32> to vector<2x128xbf16>
    %cst_113 = arith.constant dense<0.000000e+00> : vector<2x512xf32>
    %514 = tpu.matmul %513, %4, %cst_113 {dimension_numbers = #tpu.dot_dimension_numbers<[1], [0], [0], [1], [0, 0, 1, 1], [], []>} : vector<2x128xbf16>, vector<128x512xbf16>, vector<2x512xf32> -> vector<2x512xf32>
    %515 = arith.truncf %476 : vector<2x128xf32> to vector<2x128xbf16>
    %cst_114 = arith.constant dense<0.000000e+00> : vector<2x512xf32>
    %516 = tpu.matmul %515, %5, %cst_114 {dimension_numbers = #tpu.dot_dimension_numbers<[1], [0], [0], [1], [0, 0, 1, 1], [], []>} : vector<2x128xbf16>, vector<128x512xbf16>, vector<2x512xf32> -> vector<2x512xf32>
    %517 = arith.addf %514, %516 : vector<2x512xf32>
    %518 = arith.addf %517, %8 : vector<2x512xf32>
    %519 = vector.extract_strided_slice %518 {offsets = [0, 0], sizes = [2, 128], strides = [1, 1]} : vector<2x512xf32> to vector<2x128xf32>
    %520 = arith.negf %519 : vector<2x128xf32>
    %521 = math.exp %520 : vector<2x128xf32>
    %cst_115 = arith.constant 1.000000e+00 : f32
    %522 = vector.broadcast %cst_115 : f32 to vector<2x128xf32>
    %523 = arith.addf %522, %521 : vector<2x128xf32>
    %524 = arith.divf %522, %523 : vector<2x128xf32>
    %525 = vector.extract_strided_slice %518 {offsets = [0, 128], sizes = [2, 128], strides = [1, 1]} : vector<2x512xf32> to vector<2x128xf32>
    %526 = arith.negf %525 : vector<2x128xf32>
    %527 = math.exp %526 : vector<2x128xf32>
    %cst_116 = arith.constant 1.000000e+00 : f32
    %528 = vector.broadcast %cst_116 : f32 to vector<2x128xf32>
    %529 = arith.addf %528, %527 : vector<2x128xf32>
    %530 = arith.divf %528, %529 : vector<2x128xf32>
    %531 = vector.extract_strided_slice %518 {offsets = [0, 256], sizes = [2, 128], strides = [1, 1]} : vector<2x512xf32> to vector<2x128xf32>
    %532 = math.tanh %531 : vector<2x128xf32>
    %533 = vector.extract_strided_slice %518 {offsets = [0, 384], sizes = [2, 128], strides = [1, 1]} : vector<2x512xf32> to vector<2x128xf32>
    %534 = arith.negf %533 : vector<2x128xf32>
    %535 = math.exp %534 : vector<2x128xf32>
    %cst_117 = arith.constant 1.000000e+00 : f32
    %536 = vector.broadcast %cst_117 : f32 to vector<2x128xf32>
    %537 = arith.addf %536, %535 : vector<2x128xf32>
    %538 = arith.divf %536, %537 : vector<2x128xf32>
    %539 = arith.mulf %530, %474 : vector<2x128xf32>
    %540 = arith.mulf %524, %532 : vector<2x128xf32>
    %541 = arith.addf %539, %540 : vector<2x128xf32>
    %542 = math.tanh %541 : vector<2x128xf32>
    %543 = arith.mulf %538, %542 : vector<2x128xf32>
    %544 = arith.truncf %543 : vector<2x128xf32> to vector<2x128xbf16>
    %545 = arith.index_cast %c7_i32 : i32 to index
    %c0_118 = arith.constant 0 : index
    %c0_119 = arith.constant 0 : index
    %546 = vector.load %arg6[%545, %c0_118, %c0_119] : memref<8x2x128xbf16, #tpu.memory_space<vmem>>, vector<1x2x128xbf16>
    %547 = vector.shape_cast %546 : vector<1x2x128xbf16> to vector<2x128xbf16>
    %548 = vector.shape_cast %544 : vector<2x128xbf16> to vector<1x2x128xbf16>
    tpu.vector_store %arg6[%545, %c0_118, %c0_119], %548 {strides = array<i32>} : memref<8x2x128xbf16, #tpu.memory_space<vmem>>, vector<1x2x128xbf16>,
    %c8_i32 = arith.constant 8 : i32
    %c0_120 = arith.constant 0 : index
    %c0_121 = arith.constant 0 : index
    %549 = vector.load %arg7[%c0_120, %c0_121] : memref<2x128xf32, #tpu.memory_space<vmem>>, vector<2x128xf32>
    tpu.vector_store %arg7[%c0_120, %c0_121], %512 {strides = array<i32>} : memref<2x128xf32, #tpu.memory_space<vmem>>, vector<2x128xf32>,
    %c0_122 = arith.constant 0 : index
    %c0_123 = arith.constant 0 : index
    %550 = vector.load %arg8[%c0_122, %c0_123] : memref<2x128xf32, #tpu.memory_space<vmem>>, vector<2x128xf32>
    tpu.vector_store %arg8[%c0_122, %c0_123], %510 {strides = array<i32>} : memref<2x128xf32, #tpu.memory_space<vmem>>, vector<2x128xf32>,
    %c0_124 = arith.constant 0 : index
    %c0_125 = arith.constant 0 : index
    %551 = vector.load %arg9[%c0_124, %c0_125] : memref<2x128xf32, #tpu.memory_space<vmem>>, vector<2x128xf32>
    tpu.vector_store %arg9[%c0_124, %c0_125], %543 {strides = array<i32>} : memref<2x128xf32, #tpu.memory_space<vmem>>, vector<2x128xf32>,
    %c0_126 = arith.constant 0 : index
    %c0_127 = arith.constant 0 : index
    %552 = vector.load %arg10[%c0_126, %c0_127] : memref<2x128xf32, #tpu.memory_space<vmem>>, vector<2x128xf32>
    tpu.vector_store %arg10[%c0_126, %c0_127], %541 {strides = array<i32>} : memref<2x128xf32, #tpu.memory_space<vmem>>, vector<2x128xf32>,
    return
  }
  func.func @transform_0(%arg0: i32) -> (i32, i32, i32) {
    %c0_i32 = arith.constant 0 : i32
    %c0_i32_0 = arith.constant 0 : i32
    %c0_i32_1 = arith.constant 0 : i32
    return %arg0, %c0_i32, %c0_i32_0 : i32, i32, i32
  }
  func.func @transform_1(%arg0: i32) -> (i32, i32) {
    %c0_i32 = arith.constant 0 : i32
    %c0_i32_0 = arith.constant 0 : i32
    %c0_i32_1 = arith.constant 0 : i32
    return %c0_i32, %c0_i32_0 : i32, i32
  }
  func.func @transform_2(%arg0: i32) -> (i32, i32) {
    %c0_i32 = arith.constant 0 : i32
    %c0_i32_0 = arith.constant 0 : i32
    %c0_i32_1 = arith.constant 0 : i32
    return %c0_i32, %c0_i32_0 : i32, i32
  }
  func.func @transform_3(%arg0: i32) -> (i32, i32) {
    %c0_i32 = arith.constant 0 : i32
    %c0_i32_0 = arith.constant 0 : i32
    %c0_i32_1 = arith.constant 0 : i32
    return %c0_i32, %c0_i32_0 : i32, i32
  }
  func.func @transform_4(%arg0: i32) -> (i32, i32) {
    %c0_i32 = arith.constant 0 : i32
    %c0_i32_0 = arith.constant 0 : i32
    %c0_i32_1 = arith.constant 0 : i32
    return %c0_i32, %c0_i32_0 : i32, i32
  }
  func.func @transform_5(%arg0: i32) -> (i32, i32, i32) {
    %c0_i32 = arith.constant 0 : i32
    %c0_i32_0 = arith.constant 0 : i32
    %c0_i32_1 = arith.constant 0 : i32
    return %arg0, %c0_i32, %c0_i32_0 : i32, i32, i32
  }
}

</mosaic_0001>

<llo_original>
// kernel: simple_lstm_forward.1
$region0: #{simple_lstm_forward.1}
  #allocation0 [shape = 'u32[]', space=smem, size = 0x4, offset = 0x4, fixed_abs, tag = 'smem constant byte address 0x4 - core index']
  #allocation1 [shape = 'u32[144,128]{1,0:T(1,128)}', space=vmem, size = 0x12000, scoped, tag = 'internal scratch']
  #allocation2 [shape = 'f32[2,128]{1,0:T(2,128)}', space=vmem, size = 0x400, scoped, tag = 'scratch operand']
  #allocation3 [shape = 'f32[2,128]{1,0:T(2,128)}', space=vmem, size = 0x400, scoped, tag = 'scratch operand']
  #allocation4 [shape = 'f32[2,128]{1,0:T(2,128)}', space=vmem, size = 0x400, scoped, tag = 'scratch operand']
  #allocation5 [shape = 'f32[2,128]{1,0:T(2,128)}', space=vmem, size = 0x400, scoped, tag = 'scratch operand']
  %s0 = inlined_call_operand.vmem [shape: f32[8,2,512], index: 0, kind: input, shape index: {}]
  %s1 = inlined_call_operand.hbm [shape: bf16[128,512], index: 1, kind: input, shape index: {}]
  %s2 = inlined_call_operand.hbm [shape: bf16[128,512], index: 2, kind: input, shape index: {}]
  %s3 = inlined_call_operand.hbm [shape: bf16[128,512], index: 3, kind: input, shape index: {}]
  %s4 = inlined_call_operand.vmem [shape: f32[1,512], index: 4, kind: input, shape index: {}]
  %s5 = inlined_call_operand.vmem [shape: bf16[8,2,128], index: 5, kind: output, shape index: {}]
  %s6 = sld [smem:[#allocation0]]
  $region46: #{simple_lstm_forward.1} parent=0
    _
  %s8 = ssub.s32 1, %s6
  %s9 = scalar_select 0, %s8, %s6
  $region1: #{simple_lstm_forward.1} parent=0
    #allocation6 [shape = 'u8[131072]{0}', space=vmem, size = 0x20000, scoped, tag = 'input window, operand 1, single buffered']
    #allocation7 [shape = 's32[1]{0}', space=sflag, size = 0x4, scoped, tag = 'scoped memory for simple_lstm_forward.1']
    #allocation8 [shape = 'u8[131072]{0}', space=vmem, size = 0x20000, scoped, tag = 'input window, operand 2, single buffered']
    #allocation9 [shape = 's32[1]{0}', space=sflag, size = 0x4, scoped, tag = 'scoped memory for simple_lstm_forward.1']
    #allocation10 [shape = 'u8[131072]{0}', space=vmem, size = 0x20000, scoped, tag = 'input window, operand 3, single buffered']
    %10 = vsyncpa [#allocation7], 0
    %11 = vsyncpa [#allocation9], 0
    // Predicated region
    $region2: #{simple_lstm_forward.1} parent=1 // pred_check
      _
    $region3: #{simple_lstm_forward.1} parent=1 // pred_check_branch
      %13 = sbr.rel (0) target = $region5
    $region4: #{simple_lstm_forward.1} parent=1 // pred_region
      _
    $region5: #{simple_lstm_forward.1} parent=1 // pred_fallthru
      _
    // Predicated region
    $region6: #{simple_lstm_forward.1} parent=1 // pred_check
      _
    $region7: #{simple_lstm_forward.1} parent=1 // pred_check_branch
      %15 = sbr.rel (0) target = $region9
    $region8: #{simple_lstm_forward.1} parent=1 // pred_region
      %s17 = ssub.s32 4096, 4096
      %18 = vsyncadd [#allocation7], %s17
      %s19 = sshll.u32 [#allocation6], 4
      %s20 = int_to_ptr.vmem [resolvable:$true] %s19
      %25 = dma.hbm_to_vmem [thread:$0]  %s1, 4096, %s20, [#allocation7], 256, 256, 16
    $region9: #{simple_lstm_forward.1} parent=1 // pred_fallthru
      _
    // Predicated region
    $region10: #{simple_lstm_forward.1} parent=1 // pred_check
      _
    $region11: #{simple_lstm_forward.1} parent=1 // pred_check_branch
      %27 = sbr.rel (0) target = $region13
    $region12: #{simple_lstm_forward.1} parent=1 // pred_region
      %s29 = ssub.s32 4096, 4096
      %30 = vsyncadd [#allocation9], %s29
      %s31 = sshll.u32 [#allocation8], 4
      %s32 = int_to_ptr.vmem [resolvable:$true] %s31
      %37 = dma.hbm_to_vmem [thread:$0]  %s2, 4096, %s32, [#allocation9], 256, 256, 16
    $region13: #{simple_lstm_forward.1} parent=1 // pred_fallthru
      _
    // Predicated region
    $region14: #{simple_lstm_forward.1} parent=1 // pred_check
      _
    $region15: #{simple_lstm_forward.1} parent=1 // pred_check_branch
      %39 = sbr.rel (0) target = $region17
    $region16: #{simple_lstm_forward.1} parent=1 // pred_region
      %s41 = ssub.s32 4096, 4096
      %42 = vsyncadd [#allocation9], %s41
      %s43 = sshll.u32 [#allocation10], 4
      %s44 = int_to_ptr.vmem [resolvable:$true] %s43
      %49 = dma.hbm_to_vmem [thread:$0]  %s3, 4096, %s44, [#allocation9], 256, 256, 16
    $region17: #{simple_lstm_forward.1} parent=1 // pred_fallthru
      _
    // Predicated region
    $region18: #{simple_lstm_forward.1} parent=1 // pred_check
      _
    $region19: #{simple_lstm_forward.1} parent=1 // pred_check_branch
      %51 = sbr.rel (0) target = $region21
    $region20: #{simple_lstm_forward.1} parent=1 // pred_region
      _
    $region21: #{simple_lstm_forward.1} parent=1 // pred_fallthru
      _
    // Predicated region
    $region22: #{simple_lstm_forward.1} parent=1 // pred_check
      _
    $region23: #{simple_lstm_forward.1} parent=1 // pred_check_branch
      %53 = sbr.rel (0) target = $region25
    $region24: #{simple_lstm_forward.1} parent=1 // pred_region
      %54 = dma.done [#allocation7], 4096
    $region25: #{simple_lstm_forward.1} parent=1 // pred_fallthru
      _
    // Predicated region
    $region26: #{simple_lstm_forward.1} parent=1 // pred_check
      _
    $region27: #{simple_lstm_forward.1} parent=1 // pred_check_branch
      %56 = sbr.rel (0) target = $region29
    $region28: #{simple_lstm_forward.1} parent=1 // pred_region
      %57 = dma.done [#allocation9], 4096
    $region29: #{simple_lstm_forward.1} parent=1 // pred_fallthru
      _
    // Predicated region
    $region30: #{simple_lstm_forward.1} parent=1 // pred_check
      _
    $region31: #{simple_lstm_forward.1} parent=1 // pred_check_branch
      %59 = sbr.rel (0) target = $region33
    $region32: #{simple_lstm_forward.1} parent=1 // pred_region
      %60 = dma.done [#allocation9], 4096
    $region33: #{simple_lstm_forward.1} parent=1 // pred_fallthru
      _
    %p62 = scmp.eq.s32.totalorder 0, 0
    // Predicated region
    $region34: #{simple_lstm_forward.1} parent=1 // pred_check
      %p63 = pneg %p62
    $region35: #{simple_lstm_forward.1} parent=1 // pred_check_branch
      %65 = sbr.rel (%p63) target = $region37
    $region36: #{simple_lstm_forward.1} parent=1 // pred_region
      %66 = vst [vmem:[#allocation2] sm:$0x3] 0.0
      %67 = vst [vmem:[#allocation3] sm:$0x3] 0.0
      %68 = vst [vmem:[#allocation4] sm:$0x3] 0.0
      %69 = vst [vmem:[#allocation5] sm:$0x3] 0.0
    $region37: #{simple_lstm_forward.1} parent=1 // pred_fallthru
      _
    %v70 = vld [vmem:[#allocation6] sm:$0xff]
    %v71 = vld [vmem:[#allocation6 + $0x8] sm:$0xff]
    %v72 = vld [vmem:[#allocation6 + $0x10] sm:$0xff]
    %v73 = vld [vmem:[#allocation6 + $0x18] sm:$0xff]
    %v74 = vld [vmem:[#allocation6 + $0x20] sm:$0xff]
    %v75 = vld [vmem:[#allocation6 + $0x28] sm:$0xff]
    %v76 = vld [vmem:[#allocation6 + $0x30] sm:$0xff]
    %v77 = vld [vmem:[#allocation6 + $0x38] sm:$0xff]
    %v78 = vld [vmem:[#allocation6 + $0x40] sm:$0xff]
    %v79 = vld [vmem:[#allocation6 + $0x48] sm:$0xff]
    %v80 = vld [vmem:[#allocation6 + $0x50] sm:$0xff]
    %v81 = vld [vmem:[#allocation6 + $0x58] sm:$0xff]
    %v82 = vld [vmem:[#allocation6 + $0x60] sm:$0xff]
    %v83 = vld [vmem:[#allocation6 + $0x68] sm:$0xff]
    %v84 = vld [vmem:[#allocation6 + $0x70] sm:$0xff]
    %v85 = vld [vmem:[#allocation6 + $0x78] sm:$0xff]
    %v86 = vld [vmem:[#allocation6 + $0x80] sm:$0xff]
    %v87 = vld [vmem:[#allocation6 + $0x88] sm:$0xff]
    %v88 = vld [vmem:[#allocation6 + $0x90] sm:$0xff]
    %v89 = vld [vmem:[#allocation6 + $0x98] sm:$0xff]
    %v90 = vld [vmem:[#allocation6 + $0xa0] sm:$0xff]
    %v91 = vld [vmem:[#allocation6 + $0xa8] sm:$0xff]
    %v92 = vld [vmem:[#allocation6 + $0xb0] sm:$0xff]
    %v93 = vld [vmem:[#allocation6 + $0xb8] sm:$0xff]
    %v94 = vld [vmem:[#allocation6 + $0xc0] sm:$0xff]
    %v95 = vld [vmem:[#allocation6 + $0xc8] sm:$0xff]
    %v96 = vld [vmem:[#allocation6 + $0xd0] sm:$0xff]
    %v97 = vld [vmem:[#allocation6 + $0xd8] sm:$0xff]
    %v98 = vld [vmem:[#allocation6 + $0xe0] sm:$0xff]
    %v99 = vld [vmem:[#allocation6 + $0xe8] sm:$0xff]
    %v100 = vld [vmem:[#allocation6 + $0xf0] sm:$0xff]
    %v101 = vld [vmem:[#allocation6 + $0xf8] sm:$0xff]
    %v102 = vld [vmem:[#allocation8] sm:$0xff]
    %v103 = vld [vmem:[#allocation8 + $0x8] sm:$0xff]
    %v104 = vld [vmem:[#allocation8 + $0x10] sm:$0xff]
    %v105 = vld [vmem:[#allocation8 + $0x18] sm:$0xff]
    %v106 = vld [vmem:[#allocation8 + $0x20] sm:$0xff]
    %v107 = vld [vmem:[#allocation8 + $0x28] sm:$0xff]
    %v108 = vld [vmem:[#allocation8 + $0x30] sm:$0xff]
    %v109 = vld [vmem:[#allocation8 + $0x38] sm:$0xff]
    %v110 = vld [vmem:[#allocation8 + $0x40] sm:$0xff]
    %v111 = vld [vmem:[#allocation8 + $0x48] sm:$0xff]
    %v112 = vld [vmem:[#allocation8 + $0x50] sm:$0xff]
    %v113 = vld [vmem:[#allocation8 + $0x58] sm:$0xff]
    %v114 = vld [vmem:[#allocation8 + $0x60] sm:$0xff]
    %v115 = vld [vmem:[#allocation8 + $0x68] sm:$0xff]
    %v116 = vld [vmem:[#allocation8 + $0x70] sm:$0xff]
    %v117 = vld [vmem:[#allocation8 + $0x78] sm:$0xff]
    %v118 = vld [vmem:[#allocation8 + $0x80] sm:$0xff]
    %v119 = vld [vmem:[#allocation8 + $0x88] sm:$0xff]
    %v120 = vld [vmem:[#allocation8 + $0x90] sm:$0xff]
    %v121 = vld [vmem:[#allocation8 + $0x98] sm:$0xff]
    %v122 = vld [vmem:[#allocation8 + $0xa0] sm:$0xff]
    %v123 = vld [vmem:[#allocation8 + $0xa8] sm:$0xff]
    %v124 = vld [vmem:[#allocation8 + $0xb0] sm:$0xff]
    %v125 = vld [vmem:[#allocation8 + $0xb8] sm:$0xff]
    %v126 = vld [vmem:[#allocation8 + $0xc0] sm:$0xff]
    %v127 = vld [vmem:[#allocation8 + $0xc8] sm:$0xff]
    %v128 = vld [vmem:[#allocation8 + $0xd0] sm:$0xff]
    %v129 = vld [vmem:[#allocation8 + $0xd8] sm:$0xff]
    %v130 = vld [vmem:[#allocation8 + $0xe0] sm:$0xff]
    %v131 = vld [vmem:[#allocation8 + $0xe8] sm:$0xff]
    %v132 = vld [vmem:[#allocation8 + $0xf0] sm:$0xff]
    %v133 = vld [vmem:[#allocation8 + $0xf8] sm:$0xff]
    %v134 = vld [vmem:[#allocation10] sm:$0xff]
    %v135 = vld [vmem:[#allocation10 + $0x8] sm:$0xff]
    %v136 = vld [vmem:[#allocation10 + $0x10] sm:$0xff]
    %v137 = vld [vmem:[#allocation10 + $0x18] sm:$0xff]
    %v138 = vld [vmem:[#allocation10 + $0x20] sm:$0xff]
    %v139 = vld [vmem:[#allocation10 + $0x28] sm:$0xff]
    %v140 = vld [vmem:[#allocation10 + $0x30] sm:$0xff]
    %v141 = vld [vmem:[#allocation10 + $0x38] sm:$0xff]
    %v142 = vld [vmem:[#allocation10 + $0x40] sm:$0xff]
    %v143 = vld [vmem:[#allocation10 + $0x48] sm:$0xff]
    %v144 = vld [vmem:[#allocation10 + $0x50] sm:$0xff]
    %v145 = vld [vmem:[#allocation10 + $0x58] sm:$0xff]
    %v146 = vld [vmem:[#allocation10 + $0x60] sm:$0xff]
    %v147 = vld [vmem:[#allocation10 + $0x68] sm:$0xff]
    %v148 = vld [vmem:[#allocation10 + $0x70] sm:$0xff]
    %v149 = vld [vmem:[#allocation10 + $0x78] sm:$0xff]
    %v150 = vld [vmem:[#allocation10 + $0x80] sm:$0xff]
    %v151 = vld [vmem:[#allocation10 + $0x88] sm:$0xff]
    %v152 = vld [vmem:[#allocation10 + $0x90] sm:$0xff]
    %v153 = vld [vmem:[#allocation10 + $0x98] sm:$0xff]
    %v154 = vld [vmem:[#allocation10 + $0xa0] sm:$0xff]
    %v155 = vld [vmem:[#allocation10 + $0xa8] sm:$0xff]
    %v156 = vld [vmem:[#allocation10 + $0xb0] sm:$0xff]
    %v157 = vld [vmem:[#allocation10 + $0xb8] sm:$0xff]
    %v158 = vld [vmem:[#allocation10 + $0xc0] sm:$0xff]
    %v159 = vld [vmem:[#allocation10 + $0xc8] sm:$0xff]
    %v160 = vld [vmem:[#allocation10 + $0xd0] sm:$0xff]
    %v161 = vld [vmem:[#allocation10 + $0xd8] sm:$0xff]
    %v162 = vld [vmem:[#allocation10 + $0xe0] sm:$0xff]
    %v163 = vld [vmem:[#allocation10 + $0xe8] sm:$0xff]
    %v164 = vld [vmem:[#allocation10 + $0xf0] sm:$0xff]
    %v165 = vld [vmem:[#allocation10 + $0xf8] sm:$0xff]
    %v166 = vld [vmem:[%s4] sm:$0xf]
    %v168 = vlaneseq
    %v169 = vshrl.u32 %v168, 7
    %v170 = vsub.s32 0, %v169
    %v171 = vrot.slane %v166, %v170
    %v172 = vlaneseq
    %v173 = vshrl.u32 %v172, 7
    %v174 = vsub.s32 1, %v173
    %v175 = vrot.slane %v166, %v174
    %v176 = vlaneseq
    %v177 = vshrl.u32 %v176, 7
    %v178 = vsub.s32 2, %v177
    %v179 = vrot.slane %v166, %v178
    %v180 = vlaneseq
    %v181 = vshrl.u32 %v180, 7
    %v182 = vsub.s32 3, %v181
    %v183 = vrot.slane %v166, %v182
    %v188 = vld [vmem:[#allocation2] sm:$0x3]
    %v189 = vld [vmem:[#allocation3] sm:$0x3]
    %v190 = vld [vmem:[#allocation4] sm:$0x3]
    %v191 = vld [vmem:[#allocation5] sm:$0x3]
    %v192 = vld [vmem:[%s0] sm:$0xff]
    %v193 = vpack.c.bf16 %v188, %v188
    %v226 = vunpack.c.l.b16 %v70
    %v227 = vunpack.c.h.b16 %v70
    %v228 = vunpack.c.l.b16 %v71
    %v229 = vunpack.c.h.b16 %v71
    %v230 = vunpack.c.l.b16 %v72
    %v231 = vunpack.c.h.b16 %v72
    %v232 = vunpack.c.l.b16 %v73
    %v233 = vunpack.c.h.b16 %v73
    %v234 = vunpack.c.l.b16 %v74
    %v235 = vunpack.c.h.b16 %v74
    %v236 = vunpack.c.l.b16 %v75
    %v237 = vunpack.c.h.b16 %v75
    %v238 = vunpack.c.l.b16 %v76
    %v239 = vunpack.c.h.b16 %v76
    %v240 = vunpack.c.l.b16 %v77
    %v241 = vunpack.c.h.b16 %v77
    %v242 = vunpack.c.l.b16 %v78
    %v243 = vunpack.c.h.b16 %v78
    %v244 = vunpack.c.l.b16 %v79
    %v245 = vunpack.c.h.b16 %v79
    %v246 = vunpack.c.l.b16 %v80
    %v247 = vunpack.c.h.b16 %v80
    %v248 = vunpack.c.l.b16 %v81
    %v249 = vunpack.c.h.b16 %v81
    %v250 = vunpack.c.l.b16 %v82
    %v251 = vunpack.c.h.b16 %v82
    %v252 = vunpack.c.l.b16 %v83
    %v253 = vunpack.c.h.b16 %v83
    %v254 = vunpack.c.l.b16 %v84
    %v255 = vunpack.c.h.b16 %v84
    %v256 = vunpack.c.l.b16 %v85
    %v257 = vunpack.c.h.b16 %v85
    %v258 = vunpack.c.l.b16 %v86
    %v259 = vunpack.c.h.b16 %v86
    %v260 = vunpack.c.l.b16 %v87
    %v261 = vunpack.c.h.b16 %v87
    %v262 = vunpack.c.l.b16 %v88
    %v263 = vunpack.c.h.b16 %v88
    %v264 = vunpack.c.l.b16 %v89
    %v265 = vunpack.c.h.b16 %v89
    %v266 = vunpack.c.l.b16 %v90
    %v267 = vunpack.c.h.b16 %v90
    %v268 = vunpack.c.l.b16 %v91
    %v269 = vunpack.c.h.b16 %v91
    %v270 = vunpack.c.l.b16 %v92
    %v271 = vunpack.c.h.b16 %v92
    %v272 = vunpack.c.l.b16 %v93
    %v273 = vunpack.c.h.b16 %v93
    %v274 = vunpack.c.l.b16 %v94
    %v275 = vunpack.c.h.b16 %v94
    %v276 = vunpack.c.l.b16 %v95
    %v277 = vunpack.c.h.b16 %v95
    %v278 = vunpack.c.l.b16 %v96
    %v279 = vunpack.c.h.b16 %v96
    %v280 = vunpack.c.l.b16 %v97
    %v281 = vunpack.c.h.b16 %v97
    %v282 = vunpack.c.l.b16 %v98
    %v283 = vunpack.c.h.b16 %v98
    %v284 = vunpack.c.l.b16 %v99
    %v285 = vunpack.c.h.b16 %v99
    %v286 = vunpack.c.l.b16 %v100
    %v287 = vunpack.c.h.b16 %v100
    %v288 = vunpack.c.l.b16 %v101
    %v289 = vunpack.c.h.b16 %v101
    %v290 = vpack.c.b16 %v230, %v226
    %v291 = vpack.c.b16 %v231, %v227
    %v292 = vpack.c.b16 %v232, %v228
    %v293 = vpack.c.b16 %v233, %v229
    %v294 = vpack.c.b16 %v238, %v234
    %v295 = vpack.c.b16 %v239, %v235
    %v296 = vpack.c.b16 %v240, %v236
    %v297 = vpack.c.b16 %v241, %v237
    %v298 = vpack.c.b16 %v246, %v242
    %v299 = vpack.c.b16 %v247, %v243
    %v300 = vpack.c.b16 %v248, %v244
    %v301 = vpack.c.b16 %v249, %v245
    %v302 = vpack.c.b16 %v254, %v250
    %v303 = vpack.c.b16 %v255, %v251
    %v304 = vpack.c.b16 %v256, %v252
    %v305 = vpack.c.b16 %v257, %v253
    %v306 = vpack.c.b16 %v262, %v258
    %v307 = vpack.c.b16 %v263, %v259
    %v308 = vpack.c.b16 %v264, %v260
    %v309 = vpack.c.b16 %v265, %v261
    %v310 = vpack.c.b16 %v270, %v266
    %v311 = vpack.c.b16 %v271, %v267
    %v312 = vpack.c.b16 %v272, %v268
    %v313 = vpack.c.b16 %v273, %v269
    %v314 = vpack.c.b16 %v278, %v274
    %v315 = vpack.c.b16 %v279, %v275
    %v316 = vpack.c.b16 %v280, %v276
    %v317 = vpack.c.b16 %v281, %v277
    %v318 = vpack.c.b16 %v286, %v282
    %v319 = vpack.c.b16 %v287, %v283
    %v320 = vpack.c.b16 %v288, %v284
    %v321 = vpack.c.b16 %v289, %v285
    %354 = vmatprep.subr.bf16.mxu0 %v291
    %355 = vmatpush1.bf16.msra.mxu0 %v290
    %356 = vmatprep.subr.bf16.mxu0 %v295
    %357 = vmatpush1.bf16.msra.mxu0 %v294
    %358 = vmatprep.subr.bf16.mxu0 %v299
    %359 = vmatpush1.bf16.msra.mxu0 %v298
    %360 = vmatprep.subr.bf16.mxu0 %v303
    %361 = vmatpush1.bf16.msra.mxu0 %v302
    %362 = vmatprep.subr.bf16.mxu0 %v307
    %363 = vmatpush1.bf16.msra.mxu0 %v306
    %364 = vmatprep.subr.bf16.mxu0 %v311
    %365 = vmatpush1.bf16.msra.mxu0 %v310
    %366 = vmatprep.subr.bf16.mxu0 %v315
    %367 = vmatpush1.bf16.msra.mxu0 %v314
    %368 = vmatprep.subr.bf16.mxu0 %v319
    %369 = vmatpush1.bf16.msra.mxu0 %v318
    %370 = vmatprep.subr.bf16.mxu0 0
    %371 = vmatpush1.bf16.msra.mxu0 0
    %372 = vmatprep.subr.bf16.mxu0 0
    %373 = vmatpush1.bf16.msra.mxu0 0
    %374 = vmatprep.subr.bf16.mxu0 0
    %375 = vmatpush1.bf16.msra.mxu0 0
    %376 = vmatprep.subr.bf16.mxu0 0
    %377 = vmatpush1.bf16.msra.mxu0 0
    %378 = vmatprep.subr.bf16.mxu0 0
    %379 = vmatpush1.bf16.msra.mxu0 0
    %380 = vmatprep.subr.bf16.mxu0 0
    %381 = vmatpush1.bf16.msra.mxu0 0
    %382 = vmatprep.subr.bf16.mxu0 0
    %383 = vmatpush1.bf16.msra.mxu0 0
    %384 = vmatprep.subr.bf16.mxu0 0
    %385 = vmatpush1.bf16.msra.mxu0 0
    %386 = vmatprep.mubr.bf16.mxu0 0
    %387 = vmatmul.mubr.bf16.gmra.mrb[0].mxu0 %v193
    %v388 = vpop.f32.mrb[0].mxu0
    %v389 = vadd.f32 0.0, %v388
    %v390 = vpop.f32.mrb[0].mxu0
    %v391 = vadd.f32 0.0, %v390
    %v392 = vpop.f32.mrb[0].mxu0
    %v393 = vpop.f32.mrb[0].mxu0
    %394 = vdwg.mxu0
    %395 = vmatprep.subr.bf16.mxu0 %v293
    %396 = vmatpush1.bf16.msra.mxu0 %v292
    %397 = vmatprep.subr.bf16.mxu0 %v297
    %398 = vmatpush1.bf16.msra.mxu0 %v296
    %399 = vmatprep.subr.bf16.mxu0 %v301
    %400 = vmatpush1.bf16.msra.mxu0 %v300
    %401 = vmatprep.subr.bf16.mxu0 %v305
    %402 = vmatpush1.bf16.msra.mxu0 %v304
    %403 = vmatprep.subr.bf16.mxu0 %v309
    %404 = vmatpush1.bf16.msra.mxu0 %v308
    %405 = vmatprep.subr.bf16.mxu0 %v313
    %406 = vmatpush1.bf16.msra.mxu0 %v312
    %407 = vmatprep.subr.bf16.mxu0 %v317
    %408 = vmatpush1.bf16.msra.mxu0 %v316
    %409 = vmatprep.subr.bf16.mxu0 %v321
    %410 = vmatpush1.bf16.msra.mxu0 %v320
    %411 = vmatprep.subr.bf16.mxu0 0
    %412 = vmatpush1.bf16.msra.mxu0 0
    %413 = vmatprep.subr.bf16.mxu0 0
    %414 = vmatpush1.bf16.msra.mxu0 0
    %415 = vmatprep.subr.bf16.mxu0 0
    %416 = vmatpush1.bf16.msra.mxu0 0
    %417 = vmatprep.subr.bf16.mxu0 0
    %418 = vmatpush1.bf16.msra.mxu0 0
    %419 = vmatprep.subr.bf16.mxu0 0
    %420 = vmatpush1.bf16.msra.mxu0 0
    %421 = vmatprep.subr.bf16.mxu0 0
    %422 = vmatpush1.bf16.msra.mxu0 0
    %423 = vmatprep.subr.bf16.mxu0 0
    %424 = vmatpush1.bf16.msra.mxu0 0
    %425 = vmatprep.subr.bf16.mxu0 0
    %426 = vmatpush1.bf16.msra.mxu0 0
    %427 = vmatprep.mubr.bf16.mxu0 0
    %428 = vmatmul.mubr.bf16.gmra.mrb[0].mxu0 %v193
    %v429 = vpop.f32.mrb[0].mxu0
    %v430 = vadd.f32 0.0, %v429
    %v431 = vpop.f32.mrb[0].mxu0
    %v432 = vadd.f32 0.0, %v431
    %v433 = vpop.f32.mrb[0].mxu0
    %v434 = vpop.f32.mrb[0].mxu0
    %435 = vdwg.mxu0
    %v440 = vcombine.low %v389, %v391
    %v441 = vcombine.low %v430, %v432
    %v443 = vunpack.c.l.s4 1983009808
    %v444 = vunpack.c.0.s8 %v443
    %v445 = vlaneseq
    %v446 = vshrl.u32 %v445, 7
    %v447 = vsub.s32 %v444, %v446
    %v448 = vrot.slane %v440, %v447
    %v450 = vunpack.c.l.s4 1983009808
    %v451 = vunpack.c.0.s8 %v450
    %v452 = vlaneseq
    %v453 = vshrl.u32 %v452, 7
    %v454 = vsub.s32 %v451, %v453
    %v455 = vrot.slane %v441, %v454
    %v456 = vcombine.low %v448, %v455
    %v458 = vadd.f32 %v192, %v456
    %v459 = vxor.u32 %v458, 2147483648
    %v460 = vmul.f32 %v459, 1.442695
    %v461 = vpow.pop %v460
    %v462 = vadd.f32 %v461, 1.0
    %v463 = vrcp.pop %v462
    %v464 = vmul.f32 1.0, %v463
    %v466 = vrot.slane %v458, 2
    %v468 = vxor.u32 %v466, 2147483648
    %v469 = vmul.f32 %v468, 1.442695
    %v470 = vpow.pop %v469
    %v471 = vadd.f32 %v470, 1.0
    %v472 = vrcp.pop %v471
    %v473 = vmul.f32 1.0, %v472
    %v474 = vrot.slane %v458, 4
    %v476 = vtanh.pop %v474
    %v477 = vrot.slane %v458, 6
    %v479 = vxor.u32 %v477, 2147483648
    %v480 = vmul.f32 %v479, 1.442695
    %v481 = vpow.pop %v480
    %v482 = vadd.f32 %v481, 1.0
    %v483 = vrcp.pop %v482
    %v484 = vmul.f32 1.0, %v483
    %v485 = vmul.f32 %v473, %v189
    %v486 = vmul.f32 %v464, %v476
    %v487 = vadd.f32 %v485, %v486
    %v488 = vtanh.pop %v487
    %v489 = vmul.f32 %v484, %v488
    %v490 = vpack.c.bf16 %v489, %v489
    %v491 = vpack.c.bf16 %v190, %v190
    %v524 = vunpack.c.l.b16 %v134
    %v525 = vunpack.c.h.b16 %v134
    %v526 = vunpack.c.l.b16 %v135
    %v527 = vunpack.c.h.b16 %v135
    %v528 = vunpack.c.l.b16 %v136
    %v529 = vunpack.c.h.b16 %v136
    %v530 = vunpack.c.l.b16 %v137
    %v531 = vunpack.c.h.b16 %v137
    %v532 = vunpack.c.l.b16 %v138
    %v533 = vunpack.c.h.b16 %v138
    %v534 = vunpack.c.l.b16 %v139
    %v535 = vunpack.c.h.b16 %v139
    %v536 = vunpack.c.l.b16 %v140
    %v537 = vunpack.c.h.b16 %v140
    %v538 = vunpack.c.l.b16 %v141
    %v539 = vunpack.c.h.b16 %v141
    %v540 = vunpack.c.l.b16 %v142
    %v541 = vunpack.c.h.b16 %v142
    %v542 = vunpack.c.l.b16 %v143
    %v543 = vunpack.c.h.b16 %v143
    %v544 = vunpack.c.l.b16 %v144
    %v545 = vunpack.c.h.b16 %v144
    %v546 = vunpack.c.l.b16 %v145
    %v547 = vunpack.c.h.b16 %v145
    %v548 = vunpack.c.l.b16 %v146
    %v549 = vunpack.c.h.b16 %v146
    %v550 = vunpack.c.l.b16 %v147
    %v551 = vunpack.c.h.b16 %v147
    %v552 = vunpack.c.l.b16 %v148
    %v553 = vunpack.c.h.b16 %v148
    %v554 = vunpack.c.l.b16 %v149
    %v555 = vunpack.c.h.b16 %v149
    %v556 = vunpack.c.l.b16 %v150
    %v557 = vunpack.c.h.b16 %v150
    %v558 = vunpack.c.l.b16 %v151
    %v559 = vunpack.c.h.b16 %v151
    %v560 = vunpack.c.l.b16 %v152
    %v561 = vunpack.c.h.b16 %v152
    %v562 = vunpack.c.l.b16 %v153
    %v563 = vunpack.c.h.b16 %v153
    %v564 = vunpack.c.l.b16 %v154
    %v565 = vunpack.c.h.b16 %v154
    %v566 = vunpack.c.l.b16 %v155
    %v567 = vunpack.c.h.b16 %v155
    %v568 = vunpack.c.l.b16 %v156
    %v569 = vunpack.c.h.b16 %v156
    %v570 = vunpack.c.l.b16 %v157
    %v571 = vunpack.c.h.b16 %v157
    %v572 = vunpack.c.l.b16 %v158
    %v573 = vunpack.c.h.b16 %v158
    %v574 = vunpack.c.l.b16 %v159
    %v575 = vunpack.c.h.b16 %v159
    %v576 = vunpack.c.l.b16 %v160
    %v577 = vunpack.c.h.b16 %v160
    %v578 = vunpack.c.l.b16 %v161
    %v579 = vunpack.c.h.b16 %v161
    %v580 = vunpack.c.l.b16 %v162
    %v581 = vunpack.c.h.b16 %v162
    %v582 = vunpack.c.l.b16 %v163
    %v583 = vunpack.c.h.b16 %v163
    %v584 = vunpack.c.l.b16 %v164
    %v585 = vunpack.c.h.b16 %v164
    %v586 = vunpack.c.l.b16 %v165
    %v587 = vunpack.c.h.b16 %v165
    %v588 = vpack.c.b16 %v528, %v524
    %v589 = vpack.c.b16 %v529, %v525
    %v590 = vpack.c.b16 %v530, %v526
    %v591 = vpack.c.b16 %v531, %v527
    %v592 = vpack.c.b16 %v536, %v532
    %v593 = vpack.c.b16 %v537, %v533
    %v594 = vpack.c.b16 %v538, %v534
    %v595 = vpack.c.b16 %v539, %v535
    %v596 = vpack.c.b16 %v544, %v540
    %v597 = vpack.c.b16 %v545, %v541
    %v598 = vpack.c.b16 %v546, %v542
    %v599 = vpack.c.b16 %v547, %v543
    %v600 = vpack.c.b16 %v552, %v548
    %v601 = vpack.c.b16 %v553, %v549
    %v602 = vpack.c.b16 %v554, %v550
    %v603 = vpack.c.b16 %v555, %v551
    %v604 = vpack.c.b16 %v560, %v556
    %v605 = vpack.c.b16 %v561, %v557
    %v606 = vpack.c.b16 %v562, %v558
    %v607 = vpack.c.b16 %v563, %v559
    %v608 = vpack.c.b16 %v568, %v564
    %v609 = vpack.c.b16 %v569, %v565
    %v610 = vpack.c.b16 %v570, %v566
    %v611 = vpack.c.b16 %v571, %v567
    %v612 = vpack.c.b16 %v576, %v572
    %v613 = vpack.c.b16 %v577, %v573
    %v614 = vpack.c.b16 %v578, %v574
    %v615 = vpack.c.b16 %v579, %v575
    %v616 = vpack.c.b16 %v584, %v580
    %v617 = vpack.c.b16 %v585, %v581
    %v618 = vpack.c.b16 %v586, %v582
    %v619 = vpack.c.b16 %v587, %v583
    %652 = vmatprep.subr.bf16.mxu0 %v589
    %653 = vmatpush1.bf16.msra.mxu0 %v588
    %654 = vmatprep.subr.bf16.mxu0 %v593
    %655 = vmatpush1.bf16.msra.mxu0 %v592
    %656 = vmatprep.subr.bf16.mxu0 %v597
    %657 = vmatpush1.bf16.msra.mxu0 %v596
    %658 = vmatprep.subr.bf16.mxu0 %v601
    %659 = vmatpush1.bf16.msra.mxu0 %v600
    %660 = vmatprep.subr.bf16.mxu0 %v605
    %661 = vmatpush1.bf16.msra.mxu0 %v604
    %662 = vmatprep.subr.bf16.mxu0 %v609
    %663 = vmatpush1.bf16.msra.mxu0 %v608
    %664 = vmatprep.subr.bf16.mxu0 %v613
    %665 = vmatpush1.bf16.msra.mxu0 %v612
    %666 = vmatprep.subr.bf16.mxu0 %v617
    %667 = vmatpush1.bf16.msra.mxu0 %v616
    %668 = vmatprep.subr.bf16.mxu0 0
    %669 = vmatpush1.bf16.msra.mxu0 0
    %670 = vmatprep.subr.bf16.mxu0 0
    %671 = vmatpush1.bf16.msra.mxu0 0
    %672 = vmatprep.subr.bf16.mxu0 0
    %673 = vmatpush1.bf16.msra.mxu0 0
    %674 = vmatprep.subr.bf16.mxu0 0
    %675 = vmatpush1.bf16.msra.mxu0 0
    %676 = vmatprep.subr.bf16.mxu0 0
    %677 = vmatpush1.bf16.msra.mxu0 0
    %678 = vmatprep.subr.bf16.mxu0 0
    %679 = vmatpush1.bf16.msra.mxu0 0
    %680 = vmatprep.subr.bf16.mxu0 0
    %681 = vmatpush1.bf16.msra.mxu0 0
    %682 = vmatprep.subr.bf16.mxu0 0
    %683 = vmatpush1.bf16.msra.mxu0 0
    %684 = vmatprep.mubr.bf16.mxu0 0
    %685 = vmatmul.mubr.bf16.gmra.mrb[0].mxu0 %v491
    %v686 = vpop.f32.mrb[0].mxu0
    %v687 = vadd.f32 0.0, %v686
    %v688 = vpop.f32.mrb[0].mxu0
    %v689 = vadd.f32 0.0, %v688
    %v690 = vpop.f32.mrb[0].mxu0
    %v691 = vpop.f32.mrb[0].mxu0
    %692 = vdwg.mxu0
    %693 = vmatprep.subr.bf16.mxu0 %v591
    %694 = vmatpush1.bf16.msra.mxu0 %v590
    %695 = vmatprep.subr.bf16.mxu0 %v595
    %696 = vmatpush1.bf16.msra.mxu0 %v594
    %697 = vmatprep.subr.bf16.mxu0 %v599
    %698 = vmatpush1.bf16.msra.mxu0 %v598
    %699 = vmatprep.subr.bf16.mxu0 %v603
    %700 = vmatpush1.bf16.msra.mxu0 %v602
    %701 = vmatprep.subr.bf16.mxu0 %v607
    %702 = vmatpush1.bf16.msra.mxu0 %v606
    %703 = vmatprep.subr.bf16.mxu0 %v611
    %704 = vmatpush1.bf16.msra.mxu0 %v610
    %705 = vmatprep.subr.bf16.mxu0 %v615
    %706 = vmatpush1.bf16.msra.mxu0 %v614
    %707 = vmatprep.subr.bf16.mxu0 %v619
    %708 = vmatpush1.bf16.msra.mxu0 %v618
    %709 = vmatprep.subr.bf16.mxu0 0
    %710 = vmatpush1.bf16.msra.mxu0 0
    %711 = vmatprep.subr.bf16.mxu0 0
    %712 = vmatpush1.bf16.msra.mxu0 0
    %713 = vmatprep.subr.bf16.mxu0 0
    %714 = vmatpush1.bf16.msra.mxu0 0
    %715 = vmatprep.subr.bf16.mxu0 0
    %716 = vmatpush1.bf16.msra.mxu0 0
    %717 = vmatprep.subr.bf16.mxu0 0
    %718 = vmatpush1.bf16.msra.mxu0 0
    %719 = vmatprep.subr.bf16.mxu0 0
    %720 = vmatpush1.bf16.msra.mxu0 0
    %721 = vmatprep.subr.bf16.mxu0 0
    %722 = vmatpush1.bf16.msra.mxu0 0
    %723 = vmatprep.subr.bf16.mxu0 0
    %724 = vmatpush1.bf16.msra.mxu0 0
    %725 = vmatprep.mubr.bf16.mxu0 0
    %726 = vmatmul.mubr.bf16.gmra.mrb[0].mxu0 %v491
    %v727 = vpop.f32.mrb[0].mxu0
    %v728 = vadd.f32 0.0, %v727
    %v729 = vpop.f32.mrb[0].mxu0
    %v730 = vadd.f32 0.0, %v729
    %v731 = vpop.f32.mrb[0].mxu0
    %v732 = vpop.f32.mrb[0].mxu0
    %733 = vdwg.mxu0
    %v766 = vunpack.c.l.b16 %v102
    %v767 = vunpack.c.h.b16 %v102
    %v768 = vunpack.c.l.b16 %v103
    %v769 = vunpack.c.h.b16 %v103
    %v770 = vunpack.c.l.b16 %v104
    %v771 = vunpack.c.h.b16 %v104
    %v772 = vunpack.c.l.b16 %v105
    %v773 = vunpack.c.h.b16 %v105
    %v774 = vunpack.c.l.b16 %v106
    %v775 = vunpack.c.h.b16 %v106
    %v776 = vunpack.c.l.b16 %v107
    %v777 = vunpack.c.h.b16 %v107
    %v778 = vunpack.c.l.b16 %v108
    %v779 = vunpack.c.h.b16 %v108
    %v780 = vunpack.c.l.b16 %v109
    %v781 = vunpack.c.h.b16 %v109
    %v782 = vunpack.c.l.b16 %v110
    %v783 = vunpack.c.h.b16 %v110
    %v784 = vunpack.c.l.b16 %v111
    %v785 = vunpack.c.h.b16 %v111
    %v786 = vunpack.c.l.b16 %v112
    %v787 = vunpack.c.h.b16 %v112
    %v788 = vunpack.c.l.b16 %v113
    %v789 = vunpack.c.h.b16 %v113
    %v790 = vunpack.c.l.b16 %v114
    %v791 = vunpack.c.h.b16 %v114
    %v792 = vunpack.c.l.b16 %v115
    %v793 = vunpack.c.h.b16 %v115
    %v794 = vunpack.c.l.b16 %v116
    %v795 = vunpack.c.h.b16 %v116
    %v796 = vunpack.c.l.b16 %v117
    %v797 = vunpack.c.h.b16 %v117
    %v798 = vunpack.c.l.b16 %v118
    %v799 = vunpack.c.h.b16 %v118
    %v800 = vunpack.c.l.b16 %v119
    %v801 = vunpack.c.h.b16 %v119
    %v802 = vunpack.c.l.b16 %v120
    %v803 = vunpack.c.h.b16 %v120
    %v804 = vunpack.c.l.b16 %v121
    %v805 = vunpack.c.h.b16 %v121
    %v806 = vunpack.c.l.b16 %v122
    %v807 = vunpack.c.h.b16 %v122
    %v808 = vunpack.c.l.b16 %v123
    %v809 = vunpack.c.h.b16 %v123
    %v810 = vunpack.c.l.b16 %v124
    %v811 = vunpack.c.h.b16 %v124
    %v812 = vunpack.c.l.b16 %v125
    %v813 = vunpack.c.h.b16 %v125
    %v814 = vunpack.c.l.b16 %v126
    %v815 = vunpack.c.h.b16 %v126
    %v816 = vunpack.c.l.b16 %v127
    %v817 = vunpack.c.h.b16 %v127
    %v818 = vunpack.c.l.b16 %v128
    %v819 = vunpack.c.h.b16 %v128
    %v820 = vunpack.c.l.b16 %v129
    %v821 = vunpack.c.h.b16 %v129
    %v822 = vunpack.c.l.b16 %v130
    %v823 = vunpack.c.h.b16 %v130
    %v824 = vunpack.c.l.b16 %v131
    %v825 = vunpack.c.h.b16 %v131
    %v826 = vunpack.c.l.b16 %v132
    %v827 = vunpack.c.h.b16 %v132
    %v828 = vunpack.c.l.b16 %v133
    %v829 = vunpack.c.h.b16 %v133
    %v830 = vpack.c.b16 %v770, %v766
    %v831 = vpack.c.b16 %v771, %v767
    %v832 = vpack.c.b16 %v772, %v768
    %v833 = vpack.c.b16 %v773, %v769
    %v834 = vpack.c.b16 %v778, %v774
    %v835 = vpack.c.b16 %v779, %v775
    %v836 = vpack.c.b16 %v780, %v776
    %v837 = vpack.c.b16 %v781, %v777
    %v838 = vpack.c.b16 %v786, %v782
    %v839 = vpack.c.b16 %v787, %v783
    %v840 = vpack.c.b16 %v788, %v784
    %v841 = vpack.c.b16 %v789, %v785
    %v842 = vpack.c.b16 %v794, %v790
    %v843 = vpack.c.b16 %v795, %v791
    %v844 = vpack.c.b16 %v796, %v792
    %v845 = vpack.c.b16 %v797, %v793
    %v846 = vpack.c.b16 %v802, %v798
    %v847 = vpack.c.b16 %v803, %v799
    %v848 = vpack.c.b16 %v804, %v800
    %v849 = vpack.c.b16 %v805, %v801
    %v850 = vpack.c.b16 %v810, %v806
    %v851 = vpack.c.b16 %v811, %v807
    %v852 = vpack.c.b16 %v812, %v808
    %v853 = vpack.c.b16 %v813, %v809
    %v854 = vpack.c.b16 %v818, %v814
    %v855 = vpack.c.b16 %v819, %v815
    %v856 = vpack.c.b16 %v820, %v816
    %v857 = vpack.c.b16 %v821, %v817
    %v858 = vpack.c.b16 %v826, %v822
    %v859 = vpack.c.b16 %v827, %v823
    %v860 = vpack.c.b16 %v828, %v824
    %v861 = vpack.c.b16 %v829, %v825
    %894 = vmatprep.subr.bf16.mxu0 %v831
    %895 = vmatpush1.bf16.msra.mxu0 %v830
    %896 = vmatprep.subr.bf16.mxu0 %v835
    %897 = vmatpush1.bf16.msra.mxu0 %v834
    %898 = vmatprep.subr.bf16.mxu0 %v839
    %899 = vmatpush1.bf16.msra.mxu0 %v838
    %900 = vmatprep.subr.bf16.mxu0 %v843
    %901 = vmatpush1.bf16.msra.mxu0 %v842
    %902 = vmatprep.subr.bf16.mxu0 %v847
    %903 = vmatpush1.bf16.msra.mxu0 %v846
    %904 = vmatprep.subr.bf16.mxu0 %v851
    %905 = vmatpush1.bf16.msra.mxu0 %v850
    %906 = vmatprep.subr.bf16.mxu0 %v855
    %907 = vmatpush1.bf16.msra.mxu0 %v854
    %908 = vmatprep.subr.bf16.mxu0 %v859
    %909 = vmatpush1.bf16.msra.mxu0 %v858
    %910 = vmatprep.subr.bf16.mxu0 0
    %911 = vmatpush1.bf16.msra.mxu0 0
    %912 = vmatprep.subr.bf16.mxu0 0
    %913 = vmatpush1.bf16.msra.mxu0 0
    %914 = vmatprep.subr.bf16.mxu0 0
    %915 = vmatpush1.bf16.msra.mxu0 0
    %916 = vmatprep.subr.bf16.mxu0 0
    %917 = vmatpush1.bf16.msra.mxu0 0
    %918 = vmatprep.subr.bf16.mxu0 0
    %919 = vmatpush1.bf16.msra.mxu0 0
    %920 = vmatprep.subr.bf16.mxu0 0
    %921 = vmatpush1.bf16.msra.mxu0 0
    %922 = vmatprep.subr.bf16.mxu0 0
    %923 = vmatpush1.bf16.msra.mxu0 0
    %924 = vmatprep.subr.bf16.mxu0 0
    %925 = vmatpush1.bf16.msra.mxu0 0
    %926 = vmatprep.mubr.bf16.mxu0 0
    %927 = vmatmul.mubr.bf16.gmra.mrb[0].mxu0 %v490
    %v928 = vpop.f32.mrb[0].mxu0
    %v929 = vadd.f32 %v687, %v928
    %v930 = vpop.f32.mrb[0].mxu0
    %v931 = vadd.f32 %v689, %v930
    %v932 = vpop.f32.mrb[0].mxu0
    %v933 = vpop.f32.mrb[0].mxu0
    %934 = vdwg.mxu0
    %935 = vmatprep.subr.bf16.mxu0 %v833
    %936 = vmatpush1.bf16.msra.mxu0 %v832
    %937 = vmatprep.subr.bf16.mxu0 %v837
    %938 = vmatpush1.bf16.msra.mxu0 %v836
    %939 = vmatprep.subr.bf16.mxu0 %v841
    %940 = vmatpush1.bf16.msra.mxu0 %v840
    %941 = vmatprep.subr.bf16.mxu0 %v845
    %942 = vmatpush1.bf16.msra.mxu0 %v844
    %943 = vmatprep.subr.bf16.mxu0 %v849
    %944 = vmatpush1.bf16.msra.mxu0 %v848
    %945 = vmatprep.subr.bf16.mxu0 %v853
    %946 = vmatpush1.bf16.msra.mxu0 %v852
    %947 = vmatprep.subr.bf16.mxu0 %v857
    %948 = vmatpush1.bf16.msra.mxu0 %v856
    %949 = vmatprep.subr.bf16.mxu0 %v861
    %950 = vmatpush1.bf16.msra.mxu0 %v860
    %951 = vmatprep.subr.bf16.mxu0 0
    %952 = vmatpush1.bf16.msra.mxu0 0
    %953 = vmatprep.subr.bf16.mxu0 0
    %954 = vmatpush1.bf16.msra.mxu0 0
    %955 = vmatprep.subr.bf16.mxu0 0
    %956 = vmatpush1.bf16.msra.mxu0 0
    %957 = vmatprep.subr.bf16.mxu0 0
    %958 = vmatpush1.bf16.msra.mxu0 0
    %959 = vmatprep.subr.bf16.mxu0 0
    %960 = vmatpush1.bf16.msra.mxu0 0
    %961 = vmatprep.subr.bf16.mxu0 0
    %962 = vmatpush1.bf16.msra.mxu0 0
    %963 = vmatprep.subr.bf16.mxu0 0
    %964 = vmatpush1.bf16.msra.mxu0 0
    %965 = vmatprep.subr.bf16.mxu0 0
    %966 = vmatpush1.bf16.msra.mxu0 0
    %967 = vmatprep.mubr.bf16.mxu0 0
    %968 = vmatmul.mubr.bf16.gmra.mrb[0].mxu0 %v490
    %v969 = vpop.f32.mrb[0].mxu0
    %v970 = vadd.f32 %v728, %v969
    %v971 = vpop.f32.mrb[0].mxu0
    %v972 = vadd.f32 %v730, %v971
    %v973 = vpop.f32.mrb[0].mxu0
    %v974 = vpop.f32.mrb[0].mxu0
    %975 = vdwg.mxu0
    %v976 = vadd.f32 %v929, %v171
    %v977 = vadd.f32 %v931, %v175
    %v978 = vadd.f32 %v970, %v179
    %v979 = vadd.f32 %v972, %v183
    %v980 = vxor.u32 %v976, 2147483648
    %v981 = vmul.f32 %v980, 1.442695
    %v982 = vpow.pop %v981
    %v983 = vadd.f32 %v982, 1.0
    %v984 = vrcp.pop %v983
    %v985 = vmul.f32 1.0, %v984
    %v986 = vxor.u32 %v977, 2147483648
    %v987 = vmul.f32 %v986, 1.442695
    %v988 = vpow.pop %v987
    %v989 = vadd.f32 %v988, 1.0
    %v990 = vrcp.pop %v989
    %v991 = vmul.f32 1.0, %v990
    %v992 = vtanh.pop %v978
    %v993 = vxor.u32 %v979, 2147483648
    %v994 = vmul.f32 %v993, 1.442695
    %v995 = vpow.pop %v994
    %v996 = vadd.f32 %v995, 1.0
    %v997 = vrcp.pop %v996
    %v998 = vmul.f32 1.0, %v997
    %v999 = vmul.f32 %v991, %v191
    %v1000 = vmul.f32 %v985, %v992
    %v1001 = vadd.f32 %v999, %v1000
    %v1002 = vtanh.pop %v1001
    %v1003 = vmul.f32 %v998, %v1002
    %v1004 = vpack.c.bf16 %v1003, %v1003
    %1005 = vst [vmem:[%s5] sm:$0x1] %v1004
    %s1006 = scalar_lea.vmem %s0, 8
    %v1007 = vld [vmem:[%s1006] sm:$0xff]
    %1008 = vmatprep.subr.bf16.mxu0 %v291
    %1009 = vmatpush1.bf16.msra.mxu0 %v290
    %1010 = vmatprep.subr.bf16.mxu0 %v295
    %1011 = vmatpush1.bf16.msra.mxu0 %v294
    %1012 = vmatprep.subr.bf16.mxu0 %v299
    %1013 = vmatpush1.bf16.msra.mxu0 %v298
    %1014 = vmatprep.subr.bf16.mxu0 %v303
    %1015 = vmatpush1.bf16.msra.mxu0 %v302
    %1016 = vmatprep.subr.bf16.mxu0 %v307
    %1017 = vmatpush1.bf16.msra.mxu0 %v306
    %1018 = vmatprep.subr.bf16.mxu0 %v311
    %1019 = vmatpush1.bf16.msra.mxu0 %v310
    %1020 = vmatprep.subr.bf16.mxu0 %v315
    %1021 = vmatpush1.bf16.msra.mxu0 %v314
    %1022 = vmatprep.subr.bf16.mxu0 %v319
    %1023 = vmatpush1.bf16.msra.mxu0 %v318
    %1024 = vmatprep.subr.bf16.mxu0 0
    %1025 = vmatpush1.bf16.msra.mxu0 0
    %1026 = vmatprep.subr.bf16.mxu0 0
    %1027 = vmatpush1.bf16.msra.mxu0 0
    %1028 = vmatprep.subr.bf16.mxu0 0
    %1029 = vmatpush1.bf16.msra.mxu0 0
    %1030 = vmatprep.subr.bf16.mxu0 0
    %1031 = vmatpush1.bf16.msra.mxu0 0
    %1032 = vmatprep.subr.bf16.mxu0 0
    %1033 = vmatpush1.bf16.msra.mxu0 0
    %1034 = vmatprep.subr.bf16.mxu0 0
    %1035 = vmatpush1.bf16.msra.mxu0 0
    %1036 = vmatprep.subr.bf16.mxu0 0
    %1037 = vmatpush1.bf16.msra.mxu0 0
    %1038 = vmatprep.subr.bf16.mxu0 0
    %1039 = vmatpush1.bf16.msra.mxu0 0
    %1040 = vmatprep.mubr.bf16.mxu0 0
    %1041 = vmatmul.mubr.bf16.gmra.mrb[0].mxu0 %v490
    %v1042 = vpop.f32.mrb[0].mxu0
    %v1043 = vadd.f32 0.0, %v1042
    %v1044 = vpop.f32.mrb[0].mxu0
    %v1045 = vadd.f32 0.0, %v1044
    %v1046 = vpop.f32.mrb[0].mxu0
    %v1047 = vpop.f32.mrb[0].mxu0
    %1048 = vdwg.mxu0
    %1049 = vmatprep.subr.bf16.mxu0 %v293
    %1050 = vmatpush1.bf16.msra.mxu0 %v292
    %1051 = vmatprep.subr.bf16.mxu0 %v297
    %1052 = vmatpush1.bf16.msra.mxu0 %v296
    %1053 = vmatprep.subr.bf16.mxu0 %v301
    %1054 = vmatpush1.bf16.msra.mxu0 %v300
    %1055 = vmatprep.subr.bf16.mxu0 %v305
    %1056 = vmatpush1.bf16.msra.mxu0 %v304
    %1057 = vmatprep.subr.bf16.mxu0 %v309
    %1058 = vmatpush1.bf16.msra.mxu0 %v308
    %1059 = vmatprep.subr.bf16.mxu0 %v313
    %1060 = vmatpush1.bf16.msra.mxu0 %v312
    %1061 = vmatprep.subr.bf16.mxu0 %v317
    %1062 = vmatpush1.bf16.msra.mxu0 %v316
    %1063 = vmatprep.subr.bf16.mxu0 %v321
    %1064 = vmatpush1.bf16.msra.mxu0 %v320
    %1065 = vmatprep.subr.bf16.mxu0 0
    %1066 = vmatpush1.bf16.msra.mxu0 0
    %1067 = vmatprep.subr.bf16.mxu0 0
    %1068 = vmatpush1.bf16.msra.mxu0 0
    %1069 = vmatprep.subr.bf16.mxu0 0
    %1070 = vmatpush1.bf16.msra.mxu0 0
    %1071 = vmatprep.subr.bf16.mxu0 0
    %1072 = vmatpush1.bf16.msra.mxu0 0
    %1073 = vmatprep.subr.bf16.mxu0 0
    %1074 = vmatpush1.bf16.msra.mxu0 0
    %1075 = vmatprep.subr.bf16.mxu0 0
    %1076 = vmatpush1.bf16.msra.mxu0 0
    %1077 = vmatprep.subr.bf16.mxu0 0
    %1078 = vmatpush1.bf16.msra.mxu0 0
    %1079 = vmatprep.subr.bf16.mxu0 0
    %1080 = vmatpush1.bf16.msra.mxu0 0
    %1081 = vmatprep.mubr.bf16.mxu0 0
    %1082 = vmatmul.mubr.bf16.gmra.mrb[0].mxu0 %v490
    %v1083 = vpop.f32.mrb[0].mxu0
    %v1084 = vadd.f32 0.0, %v1083
    %v1085 = vpop.f32.mrb[0].mxu0
    %v1086 = vadd.f32 0.0, %v1085
    %v1087 = vpop.f32.mrb[0].mxu0
    %v1088 = vpop.f32.mrb[0].mxu0
    %1089 = vdwg.mxu0
    %v1094 = vcombine.low %v1043, %v1045
    %v1095 = vcombine.low %v1084, %v1086
    %v1097 = vunpack.c.l.s4 1983009808
    %v1098 = vunpack.c.0.s8 %v1097
    %v1099 = vlaneseq
    %v1100 = vshrl.u32 %v1099, 7
    %v1101 = vsub.s32 %v1098, %v1100
    %v1102 = vrot.slane %v1094, %v1101
    %v1104 = vunpack.c.l.s4 1983009808
    %v1105 = vunpack.c.0.s8 %v1104
    %v1106 = vlaneseq
    %v1107 = vshrl.u32 %v1106, 7
    %v1108 = vsub.s32 %v1105, %v1107
    %v1109 = vrot.slane %v1095, %v1108
    %v1110 = vcombine.low %v1102, %v1109
    %v1112 = vadd.f32 %v1007, %v1110
    %v1113 = vxor.u32 %v1112, 2147483648
    %v1114 = vmul.f32 %v1113, 1.442695
    %v1115 = vpow.pop %v1114
    %v1116 = vadd.f32 %v1115, 1.0
    %v1117 = vrcp.pop %v1116
    %v1118 = vmul.f32 1.0, %v1117
    %v1120 = vrot.slane %v1112, 2
    %v1122 = vxor.u32 %v1120, 2147483648
    %v1123 = vmul.f32 %v1122, 1.442695
    %v1124 = vpow.pop %v1123
    %v1125 = vadd.f32 %v1124, 1.0
    %v1126 = vrcp.pop %v1125
    %v1127 = vmul.f32 1.0, %v1126
    %v1128 = vrot.slane %v1112, 4
    %v1130 = vtanh.pop %v1128
    %v1131 = vrot.slane %v1112, 6
    %v1133 = vxor.u32 %v1131, 2147483648
    %v1134 = vmul.f32 %v1133, 1.442695
    %v1135 = vpow.pop %v1134
    %v1136 = vadd.f32 %v1135, 1.0
    %v1137 = vrcp.pop %v1136
    %v1138 = vmul.f32 1.0, %v1137
    %v1139 = vmul.f32 %v1127, %v487
    %v1140 = vmul.f32 %v1118, %v1130
    %v1141 = vadd.f32 %v1139, %v1140
    %v1142 = vtanh.pop %v1141
    %v1143 = vmul.f32 %v1138, %v1142
    %v1144 = vpack.c.bf16 %v1143, %v1143
    %1145 = vmatprep.subr.bf16.mxu0 %v589
    %1146 = vmatpush1.bf16.msra.mxu0 %v588
    %1147 = vmatprep.subr.bf16.mxu0 %v593
    %1148 = vmatpush1.bf16.msra.mxu0 %v592
    %1149 = vmatprep.subr.bf16.mxu0 %v597
    %1150 = vmatpush1.bf16.msra.mxu0 %v596
    %1151 = vmatprep.subr.bf16.mxu0 %v601
    %1152 = vmatpush1.bf16.msra.mxu0 %v600
    %1153 = vmatprep.subr.bf16.mxu0 %v605
    %1154 = vmatpush1.bf16.msra.mxu0 %v604
    %1155 = vmatprep.subr.bf16.mxu0 %v609
    %1156 = vmatpush1.bf16.msra.mxu0 %v608
    %1157 = vmatprep.subr.bf16.mxu0 %v613
    %1158 = vmatpush1.bf16.msra.mxu0 %v612
    %1159 = vmatprep.subr.bf16.mxu0 %v617
    %1160 = vmatpush1.bf16.msra.mxu0 %v616
    %1161 = vmatprep.subr.bf16.mxu0 0
    %1162 = vmatpush1.bf16.msra.mxu0 0
    %1163 = vmatprep.subr.bf16.mxu0 0
    %1164 = vmatpush1.bf16.msra.mxu0 0
    %1165 = vmatprep.subr.bf16.mxu0 0
    %1166 = vmatpush1.bf16.msra.mxu0 0
    %1167 = vmatprep.subr.bf16.mxu0 0
    %1168 = vmatpush1.bf16.msra.mxu0 0
    %1169 = vmatprep.subr.bf16.mxu0 0
    %1170 = vmatpush1.bf16.msra.mxu0 0
    %1171 = vmatprep.subr.bf16.mxu0 0
    %1172 = vmatpush1.bf16.msra.mxu0 0
    %1173 = vmatprep.subr.bf16.mxu0 0
    %1174 = vmatpush1.bf16.msra.mxu0 0
    %1175 = vmatprep.subr.bf16.mxu0 0
    %1176 = vmatpush1.bf16.msra.mxu0 0
    %1177 = vmatprep.mubr.bf16.mxu0 0
    %1178 = vmatmul.mubr.bf16.gmra.mrb[0].mxu0 %v1004
    %v1179 = vpop.f32.mrb[0].mxu0
    %v1180 = vadd.f32 0.0, %v1179
    %v1181 = vpop.f32.mrb[0].mxu0
    %v1182 = vadd.f32 0.0, %v1181
    %v1183 = vpop.f32.mrb[0].mxu0
    %v1184 = vpop.f32.mrb[0].mxu0
    %1185 = vdwg.mxu0
    %1186 = vmatprep.subr.bf16.mxu0 %v591
    %1187 = vmatpush1.bf16.msra.mxu0 %v590
    %1188 = vmatprep.subr.bf16.mxu0 %v595
    %1189 = vmatpush1.bf16.msra.mxu0 %v594
    %1190 = vmatprep.subr.bf16.mxu0 %v599
    %1191 = vmatpush1.bf16.msra.mxu0 %v598
    %1192 = vmatprep.subr.bf16.mxu0 %v603
    %1193 = vmatpush1.bf16.msra.mxu0 %v602
    %1194 = vmatprep.subr.bf16.mxu0 %v607
    %1195 = vmatpush1.bf16.msra.mxu0 %v606
    %1196 = vmatprep.subr.bf16.mxu0 %v611
    %1197 = vmatpush1.bf16.msra.mxu0 %v610
    %1198 = vmatprep.subr.bf16.mxu0 %v615
    %1199 = vmatpush1.bf16.msra.mxu0 %v614
    %1200 = vmatprep.subr.bf16.mxu0 %v619
    %1201 = vmatpush1.bf16.msra.mxu0 %v618
    %1202 = vmatprep.subr.bf16.mxu0 0
    %1203 = vmatpush1.bf16.msra.mxu0 0
    %1204 = vmatprep.subr.bf16.mxu0 0
    %1205 = vmatpush1.bf16.msra.mxu0 0
    %1206 = vmatprep.subr.bf16.mxu0 0
    %1207 = vmatpush1.bf16.msra.mxu0 0
    %1208 = vmatprep.subr.bf16.mxu0 0
    %1209 = vmatpush1.bf16.msra.mxu0 0
    %1210 = vmatprep.subr.bf16.mxu0 0
    %1211 = vmatpush1.bf16.msra.mxu0 0
    %1212 = vmatprep.subr.bf16.mxu0 0
    %1213 = vmatpush1.bf16.msra.mxu0 0
    %1214 = vmatprep.subr.bf16.mxu0 0
    %1215 = vmatpush1.bf16.msra.mxu0 0
    %1216 = vmatprep.subr.bf16.mxu0 0
    %1217 = vmatpush1.bf16.msra.mxu0 0
    %1218 = vmatprep.mubr.bf16.mxu0 0
    %1219 = vmatmul.mubr.bf16.gmra.mrb[0].mxu0 %v1004
    %v1220 = vpop.f32.mrb[0].mxu0
    %v1221 = vadd.f32 0.0, %v1220
    %v1222 = vpop.f32.mrb[0].mxu0
    %v1223 = vadd.f32 0.0, %v1222
    %v1224 = vpop.f32.mrb[0].mxu0
    %v1225 = vpop.f32.mrb[0].mxu0
    %1226 = vdwg.mxu0
    %1227 = vmatprep.subr.bf16.mxu0 %v831
    %1228 = vmatpush1.bf16.msra.mxu0 %v830
    %1229 = vmatprep.subr.bf16.mxu0 %v835
    %1230 = vmatpush1.bf16.msra.mxu0 %v834
    %1231 = vmatprep.subr.bf16.mxu0 %v839
    %1232 = vmatpush1.bf16.msra.mxu0 %v838
    %1233 = vmatprep.subr.bf16.mxu0 %v843
    %1234 = vmatpush1.bf16.msra.mxu0 %v842
    %1235 = vmatprep.subr.bf16.mxu0 %v847
    %1236 = vmatpush1.bf16.msra.mxu0 %v846
    %1237 = vmatprep.subr.bf16.mxu0 %v851
    %1238 = vmatpush1.bf16.msra.mxu0 %v850
    %1239 = vmatprep.subr.bf16.mxu0 %v855
    %1240 = vmatpush1.bf16.msra.mxu0 %v854
    %1241 = vmatprep.subr.bf16.mxu0 %v859
    %1242 = vmatpush1.bf16.msra.mxu0 %v858
    %1243 = vmatprep.subr.bf16.mxu0 0
    %1244 = vmatpush1.bf16.msra.mxu0 0
    %1245 = vmatprep.subr.bf16.mxu0 0
    %1246 = vmatpush1.bf16.msra.mxu0 0
    %1247 = vmatprep.subr.bf16.mxu0 0
    %1248 = vmatpush1.bf16.msra.mxu0 0
    %1249 = vmatprep.subr.bf16.mxu0 0
    %1250 = vmatpush1.bf16.msra.mxu0 0
    %1251 = vmatprep.subr.bf16.mxu0 0
    %1252 = vmatpush1.bf16.msra.mxu0 0
    %1253 = vmatprep.subr.bf16.mxu0 0
    %1254 = vmatpush1.bf16.msra.mxu0 0
    %1255 = vmatprep.subr.bf16.mxu0 0
    %1256 = vmatpush1.bf16.msra.mxu0 0
    %1257 = vmatprep.subr.bf16.mxu0 0
    %1258 = vmatpush1.bf16.msra.mxu0 0
    %1259 = vmatprep.mubr.bf16.mxu0 0
    %1260 = vmatmul.mubr.bf16.gmra.mrb[0].mxu0 %v1144
    %v1261 = vpop.f32.mrb[0].mxu0
    %v1262 = vadd.f32 %v1180, %v1261
    %v1263 = vpop.f32.mrb[0].mxu0
    %v1264 = vadd.f32 %v1182, %v1263
    %v1265 = vpop.f32.mrb[0].mxu0
    %v1266 = vpop.f32.mrb[0].mxu0
    %1267 = vdwg.mxu0
    %1268 = vmatprep.subr.bf16.mxu0 %v833
    %1269 = vmatpush1.bf16.msra.mxu0 %v832
    %1270 = vmatprep.subr.bf16.mxu0 %v837
    %1271 = vmatpush1.bf16.msra.mxu0 %v836
    %1272 = vmatprep.subr.bf16.mxu0 %v841
    %1273 = vmatpush1.bf16.msra.mxu0 %v840
    %1274 = vmatprep.subr.bf16.mxu0 %v845
    %1275 = vmatpush1.bf16.msra.mxu0 %v844
    %1276 = vmatprep.subr.bf16.mxu0 %v849
    %1277 = vmatpush1.bf16.msra.mxu0 %v848
    %1278 = vmatprep.subr.bf16.mxu0 %v853
    %1279 = vmatpush1.bf16.msra.mxu0 %v852
    %1280 = vmatprep.subr.bf16.mxu0 %v857
    %1281 = vmatpush1.bf16.msra.mxu0 %v856
    %1282 = vmatprep.subr.bf16.mxu0 %v861
    %1283 = vmatpush1.bf16.msra.mxu0 %v860
    %1284 = vmatprep.subr.bf16.mxu0 0
    %1285 = vmatpush1.bf16.msra.mxu0 0
    %1286 = vmatprep.subr.bf16.mxu0 0
    %1287 = vmatpush1.bf16.msra.mxu0 0
    %1288 = vmatprep.subr.bf16.mxu0 0
    %1289 = vmatpush1.bf16.msra.mxu0 0
    %1290 = vmatprep.subr.bf16.mxu0 0
    %1291 = vmatpush1.bf16.msra.mxu0 0
    %1292 = vmatprep.subr.bf16.mxu0 0
    %1293 = vmatpush1.bf16.msra.mxu0 0
    %1294 = vmatprep.subr.bf16.mxu0 0
    %1295 = vmatpush1.bf16.msra.mxu0 0
    %1296 = vmatprep.subr.bf16.mxu0 0
    %1297 = vmatpush1.bf16.msra.mxu0 0
    %1298 = vmatprep.subr.bf16.mxu0 0
    %1299 = vmatpush1.bf16.msra.mxu0 0
    %1300 = vmatprep.mubr.bf16.mxu0 0
    %1301 = vmatmul.mubr.bf16.gmra.mrb[0].mxu0 %v1144
    %v1302 = vpop.f32.mrb[0].mxu0
    %v1303 = vadd.f32 %v1221, %v1302
    %v1304 = vpop.f32.mrb[0].mxu0
    %v1305 = vadd.f32 %v1223, %v1304
    %v1306 = vpop.f32.mrb[0].mxu0
    %v1307 = vpop.f32.mrb[0].mxu0
    %1308 = vdwg.mxu0
    %v1309 = vadd.f32 %v1262, %v171
    %v1310 = vadd.f32 %v1264, %v175
    %v1311 = vadd.f32 %v1303, %v179
    %v1312 = vadd.f32 %v1305, %v183
    %v1313 = vxor.u32 %v1309, 2147483648
    %v1314 = vmul.f32 %v1313, 1.442695
    %v1315 = vpow.pop %v1314
    %v1316 = vadd.f32 %v1315, 1.0
    %v1317 = vrcp.pop %v1316
    %v1318 = vmul.f32 1.0, %v1317
    %v1319 = vxor.u32 %v1310, 2147483648
    %v1320 = vmul.f32 %v1319, 1.442695
    %v1321 = vpow.pop %v1320
    %v1322 = vadd.f32 %v1321, 1.0
    %v1323 = vrcp.pop %v1322
    %v1324 = vmul.f32 1.0, %v1323
    %v1325 = vtanh.pop %v1311
    %v1326 = vxor.u32 %v1312, 2147483648
    %v1327 = vmul.f32 %v1326, 1.442695
    %v1328 = vpow.pop %v1327
    %v1329 = vadd.f32 %v1328, 1.0
    %v1330 = vrcp.pop %v1329
    %v1331 = vmul.f32 1.0, %v1330
    %v1332 = vmul.f32 %v1324, %v1001
    %v1333 = vmul.f32 %v1318, %v1325
    %v1334 = vadd.f32 %v1332, %v1333
    %v1335 = vtanh.pop %v1334
    %v1336 = vmul.f32 %v1331, %v1335
    %v1337 = vpack.c.bf16 %v1336, %v1336
    %s1338 = scalar_lea.vmem %s5, 1
    %1339 = vst [vmem:[%s1338] sm:$0x1] %v1337
    %s1340 = scalar_lea.vmem %s0, 16
    %v1341 = vld [vmem:[%s1340] sm:$0xff]
    %1342 = vmatprep.subr.bf16.mxu0 %v291
    %1343 = vmatpush1.bf16.msra.mxu0 %v290
    %1344 = vmatprep.subr.bf16.mxu0 %v295
    %1345 = vmatpush1.bf16.msra.mxu0 %v294
    %1346 = vmatprep.subr.bf16.mxu0 %v299
    %1347 = vmatpush1.bf16.msra.mxu0 %v298
    %1348 = vmatprep.subr.bf16.mxu0 %v303
    %1349 = vmatpush1.bf16.msra.mxu0 %v302
    %1350 = vmatprep.subr.bf16.mxu0 %v307
    %1351 = vmatpush1.bf16.msra.mxu0 %v306
    %1352 = vmatprep.subr.bf16.mxu0 %v311
    %1353 = vmatpush1.bf16.msra.mxu0 %v310
    %1354 = vmatprep.subr.bf16.mxu0 %v315
    %1355 = vmatpush1.bf16.msra.mxu0 %v314
    %1356 = vmatprep.subr.bf16.mxu0 %v319
    %1357 = vmatpush1.bf16.msra.mxu0 %v318
    %1358 = vmatprep.subr.bf16.mxu0 0
    %1359 = vmatpush1.bf16.msra.mxu0 0
    %1360 = vmatprep.subr.bf16.mxu0 0
    %1361 = vmatpush1.bf16.msra.mxu0 0
    %1362 = vmatprep.subr.bf16.mxu0 0
    %1363 = vmatpush1.bf16.msra.mxu0 0
    %1364 = vmatprep.subr.bf16.mxu0 0
    %1365 = vmatpush1.bf16.msra.mxu0 0
    %1366 = vmatprep.subr.bf16.mxu0 0
    %1367 = vmatpush1.bf16.msra.mxu0 0
    %1368 = vmatprep.subr.bf16.mxu0 0
    %1369 = vmatpush1.bf16.msra.mxu0 0
    %1370 = vmatprep.subr.bf16.mxu0 0
    %1371 = vmatpush1.bf16.msra.mxu0 0
    %1372 = vmatprep.subr.bf16.mxu0 0
    %1373 = vmatpush1.bf16.msra.mxu0 0
    %1374 = vmatprep.mubr.bf16.mxu0 0
    %1375 = vmatmul.mubr.bf16.gmra.mrb[0].mxu0 %v1144
    %v1376 = vpop.f32.mrb[0].mxu0
    %v1377 = vadd.f32 0.0, %v1376
    %v1378 = vpop.f32.mrb[0].mxu0
    %v1379 = vadd.f32 0.0, %v1378
    %v1380 = vpop.f32.mrb[0].mxu0
    %v1381 = vpop.f32.mrb[0].mxu0
    %1382 = vdwg.mxu0
    %1383 = vmatprep.subr.bf16.mxu0 %v293
    %1384 = vmatpush1.bf16.msra.mxu0 %v292
    %1385 = vmatprep.subr.bf16.mxu0 %v297
    %1386 = vmatpush1.bf16.msra.mxu0 %v296
    %1387 = vmatprep.subr.bf16.mxu0 %v301
    %1388 = vmatpush1.bf16.msra.mxu0 %v300
    %1389 = vmatprep.subr.bf16.mxu0 %v305
    %1390 = vmatpush1.bf16.msra.mxu0 %v304
    %1391 = vmatprep.subr.bf16.mxu0 %v309
    %1392 = vmatpush1.bf16.msra.mxu0 %v308
    %1393 = vmatprep.subr.bf16.mxu0 %v313
    %1394 = vmatpush1.bf16.msra.mxu0 %v312
    %1395 = vmatprep.subr.bf16.mxu0 %v317
    %1396 = vmatpush1.bf16.msra.mxu0 %v316
    %1397 = vmatprep.subr.bf16.mxu0 %v321
    %1398 = vmatpush1.bf16.msra.mxu0 %v320
    %1399 = vmatprep.subr.bf16.mxu0 0
    %1400 = vmatpush1.bf16.msra.mxu0 0
    %1401 = vmatprep.subr.bf16.mxu0 0
    %1402 = vmatpush1.bf16.msra.mxu0 0
    %1403 = vmatprep.subr.bf16.mxu0 0
    %1404 = vmatpush1.bf16.msra.mxu0 0
    %1405 = vmatprep.subr.bf16.mxu0 0
    %1406 = vmatpush1.bf16.msra.mxu0 0
    %1407 = vmatprep.subr.bf16.mxu0 0
    %1408 = vmatpush1.bf16.msra.mxu0 0
    %1409 = vmatprep.subr.bf16.mxu0 0
    %1410 = vmatpush1.bf16.msra.mxu0 0
    %1411 = vmatprep.subr.bf16.mxu0 0
    %1412 = vmatpush1.bf16.msra.mxu0 0
    %1413 = vmatprep.subr.bf16.mxu0 0
    %1414 = vmatpush1.bf16.msra.mxu0 0
    %1415 = vmatprep.mubr.bf16.mxu0 0
    %1416 = vmatmul.mubr.bf16.gmra.mrb[0].mxu0 %v1144
    %v1417 = vpop.f32.mrb[0].mxu0
    %v1418 = vadd.f32 0.0, %v1417
    %v1419 = vpop.f32.mrb[0].mxu0
    %v1420 = vadd.f32 0.0, %v1419
    %v1421 = vpop.f32.mrb[0].mxu0
    %v1422 = vpop.f32.mrb[0].mxu0
    %1423 = vdwg.mxu0
    %v1428 = vcombine.low %v1377, %v1379
    %v1429 = vcombine.low %v1418, %v1420
    %v1431 = vunpack.c.l.s4 1983009808
    %v1432 = vunpack.c.0.s8 %v1431
    %v1433 = vlaneseq
    %v1434 = vshrl.u32 %v1433, 7
    %v1435 = vsub.s32 %v1432, %v1434
    %v1436 = vrot.slane %v1428, %v1435
    %v1438 = vunpack.c.l.s4 1983009808
    %v1439 = vunpack.c.0.s8 %v1438
    %v1440 = vlaneseq
    %v1441 = vshrl.u32 %v1440, 7
    %v1442 = vsub.s32 %v1439, %v1441
    %v1443 = vrot.slane %v1429, %v1442
    %v1444 = vcombine.low %v1436, %v1443
    %v1446 = vadd.f32 %v1341, %v1444
    %v1447 = vxor.u32 %v1446, 2147483648
    %v1448 = vmul.f32 %v1447, 1.442695
    %v1449 = vpow.pop %v1448
    %v1450 = vadd.f32 %v1449, 1.0
    %v1451 = vrcp.pop %v1450
    %v1452 = vmul.f32 1.0, %v1451
    %v1454 = vrot.slane %v1446, 2
    %v1456 = vxor.u32 %v1454, 2147483648
    %v1457 = vmul.f32 %v1456, 1.442695
    %v1458 = vpow.pop %v1457
    %v1459 = vadd.f32 %v1458, 1.0
    %v1460 = vrcp.pop %v1459
    %v1461 = vmul.f32 1.0, %v1460
    %v1462 = vrot.slane %v1446, 4
    %v1464 = vtanh.pop %v1462
    %v1465 = vrot.slane %v1446, 6
    %v1467 = vxor.u32 %v1465, 2147483648
    %v1468 = vmul.f32 %v1467, 1.442695
    %v1469 = vpow.pop %v1468
    %v1470 = vadd.f32 %v1469, 1.0
    %v1471 = vrcp.pop %v1470
    %v1472 = vmul.f32 1.0, %v1471
    %v1473 = vmul.f32 %v1461, %v1141
    %v1474 = vmul.f32 %v1452, %v1464
    %v1475 = vadd.f32 %v1473, %v1474
    %v1476 = vtanh.pop %v1475
    %v1477 = vmul.f32 %v1472, %v1476
    %v1478 = vpack.c.bf16 %v1477, %v1477
    %1479 = vmatprep.subr.bf16.mxu0 %v589
    %1480 = vmatpush1.bf16.msra.mxu0 %v588
    %1481 = vmatprep.subr.bf16.mxu0 %v593
    %1482 = vmatpush1.bf16.msra.mxu0 %v592
    %1483 = vmatprep.subr.bf16.mxu0 %v597
    %1484 = vmatpush1.bf16.msra.mxu0 %v596
    %1485 = vmatprep.subr.bf16.mxu0 %v601
    %1486 = vmatpush1.bf16.msra.mxu0 %v600
    %1487 = vmatprep.subr.bf16.mxu0 %v605
    %1488 = vmatpush1.bf16.msra.mxu0 %v604
    %1489 = vmatprep.subr.bf16.mxu0 %v609
    %1490 = vmatpush1.bf16.msra.mxu0 %v608
    %1491 = vmatprep.subr.bf16.mxu0 %v613
    %1492 = vmatpush1.bf16.msra.mxu0 %v612
    %1493 = vmatprep.subr.bf16.mxu0 %v617
    %1494 = vmatpush1.bf16.msra.mxu0 %v616
    %1495 = vmatprep.subr.bf16.mxu0 0
    %1496 = vmatpush1.bf16.msra.mxu0 0
    %1497 = vmatprep.subr.bf16.mxu0 0
    %1498 = vmatpush1.bf16.msra.mxu0 0
    %1499 = vmatprep.subr.bf16.mxu0 0
    %1500 = vmatpush1.bf16.msra.mxu0 0
    %1501 = vmatprep.subr.bf16.mxu0 0
    %1502 = vmatpush1.bf16.msra.mxu0 0
    %1503 = vmatprep.subr.bf16.mxu0 0
    %1504 = vmatpush1.bf16.msra.mxu0 0
    %1505 = vmatprep.subr.bf16.mxu0 0
    %1506 = vmatpush1.bf16.msra.mxu0 0
    %1507 = vmatprep.subr.bf16.mxu0 0
    %1508 = vmatpush1.bf16.msra.mxu0 0
    %1509 = vmatprep.subr.bf16.mxu0 0
    %1510 = vmatpush1.bf16.msra.mxu0 0
    %1511 = vmatprep.mubr.bf16.mxu0 0
    %1512 = vmatmul.mubr.bf16.gmra.mrb[0].mxu0 %v1337
    %v1513 = vpop.f32.mrb[0].mxu0
    %v1514 = vadd.f32 0.0, %v1513
    %v1515 = vpop.f32.mrb[0].mxu0
    %v1516 = vadd.f32 0.0, %v1515
    %v1517 = vpop.f32.mrb[0].mxu0
    %v1518 = vpop.f32.mrb[0].mxu0
    %1519 = vdwg.mxu0
    %1520 = vmatprep.subr.bf16.mxu0 %v591
    %1521 = vmatpush1.bf16.msra.mxu0 %v590
    %1522 = vmatprep.subr.bf16.mxu0 %v595
    %1523 = vmatpush1.bf16.msra.mxu0 %v594
    %1524 = vmatprep.subr.bf16.mxu0 %v599
    %1525 = vmatpush1.bf16.msra.mxu0 %v598
    %1526 = vmatprep.subr.bf16.mxu0 %v603
    %1527 = vmatpush1.bf16.msra.mxu0 %v602
    %1528 = vmatprep.subr.bf16.mxu0 %v607
    %1529 = vmatpush1.bf16.msra.mxu0 %v606
    %1530 = vmatprep.subr.bf16.mxu0 %v611
    %1531 = vmatpush1.bf16.msra.mxu0 %v610
    %1532 = vmatprep.subr.bf16.mxu0 %v615
    %1533 = vmatpush1.bf16.msra.mxu0 %v614
    %1534 = vmatprep.subr.bf16.mxu0 %v619
    %1535 = vmatpush1.bf16.msra.mxu0 %v618
    %1536 = vmatprep.subr.bf16.mxu0 0
    %1537 = vmatpush1.bf16.msra.mxu0 0
    %1538 = vmatprep.subr.bf16.mxu0 0
    %1539 = vmatpush1.bf16.msra.mxu0 0
    %1540 = vmatprep.subr.bf16.mxu0 0
    %1541 = vmatpush1.bf16.msra.mxu0 0
    %1542 = vmatprep.subr.bf16.mxu0 0
    %1543 = vmatpush1.bf16.msra.mxu0 0
    %1544 = vmatprep.subr.bf16.mxu0 0
    %1545 = vmatpush1.bf16.msra.mxu0 0
    %1546 = vmatprep.subr.bf16.mxu0 0
    %1547 = vmatpush1.bf16.msra.mxu0 0
    %1548 = vmatprep.subr.bf16.mxu0 0
    %1549 = vmatpush1.bf16.msra.mxu0 0
    %1550 = vmatprep.subr.bf16.mxu0 0
    %1551 = vmatpush1.bf16.msra.mxu0 0
    %1552 = vmatprep.mubr.bf16.mxu0 0
    %1553 = vmatmul.mubr.bf16.gmra.mrb[0].mxu0 %v1337
    %v1554 = vpop.f32.mrb[0].mxu0
    %v1555 = vadd.f32 0.0, %v1554
    %v1556 = vpop.f32.mrb[0].mxu0
    %v1557 = vadd.f32 0.0, %v1556
    %v1558 = vpop.f32.mrb[0].mxu0
    %v1559 = vpop.f32.mrb[0].mxu0
    %1560 = vdwg.mxu0
    %1561 = vmatprep.subr.bf16.mxu0 %v831
    %1562 = vmatpush1.bf16.msra.mxu0 %v830
    %1563 = vmatprep.subr.bf16.mxu0 %v835
    %1564 = vmatpush1.bf16.msra.mxu0 %v834
    %1565 = vmatprep.subr.bf16.mxu0 %v839
    %1566 = vmatpush1.bf16.msra.mxu0 %v838
    %1567 = vmatprep.subr.bf16.mxu0 %v843
    %1568 = vmatpush1.bf16.msra.mxu0 %v842
    %1569 = vmatprep.subr.bf16.mxu0 %v847
    %1570 = vmatpush1.bf16.msra.mxu0 %v846
    %1571 = vmatprep.subr.bf16.mxu0 %v851
    %1572 = vmatpush1.bf16.msra.mxu0 %v850
    %1573 = vmatprep.subr.bf16.mxu0 %v855
    %1574 = vmatpush1.bf16.msra.mxu0 %v854
    %1575 = vmatprep.subr.bf16.mxu0 %v859
    %1576 = vmatpush1.bf16.msra.mxu0 %v858
    %1577 = vmatprep.subr.bf16.mxu0 0
    %1578 = vmatpush1.bf16.msra.mxu0 0
    %1579 = vmatprep.subr.bf16.mxu0 0
    %1580 = vmatpush1.bf16.msra.mxu0 0
    %1581 = vmatprep.subr.bf16.mxu0 0
    %1582 = vmatpush1.bf16.msra.mxu0 0
    %1583 = vmatprep.subr.bf16.mxu0 0
    %1584 = vmatpush1.bf16.msra.mxu0 0
    %1585 = vmatprep.subr.bf16.mxu0 0
    %1586 = vmatpush1.bf16.msra.mxu0 0
    %1587 = vmatprep.subr.bf16.mxu0 0
    %1588 = vmatpush1.bf16.msra.mxu0 0
    %1589 = vmatprep.subr.bf16.mxu0 0
    %1590 = vmatpush1.bf16.msra.mxu0 0
    %1591 = vmatprep.subr.bf16.mxu0 0
    %1592 = vmatpush1.bf16.msra.mxu0 0
    %1593 = vmatprep.mubr.bf16.mxu0 0
    %1594 = vmatmul.mubr.bf16.gmra.mrb[0].mxu0 %v1478
    %v1595 = vpop.f32.mrb[0].mxu0
    %v1596 = vadd.f32 %v1514, %v1595
    %v1597 = vpop.f32.mrb[0].mxu0
    %v1598 = vadd.f32 %v1516, %v1597
    %v1599 = vpop.f32.mrb[0].mxu0
    %v1600 = vpop.f32.mrb[0].mxu0
    %1601 = vdwg.mxu0
    %1602 = vmatprep.subr.bf16.mxu0 %v833
    %1603 = vmatpush1.bf16.msra.mxu0 %v832
    %1604 = vmatprep.subr.bf16.mxu0 %v837
    %1605 = vmatpush1.bf16.msra.mxu0 %v836
    %1606 = vmatprep.subr.bf16.mxu0 %v841
    %1607 = vmatpush1.bf16.msra.mxu0 %v840
    %1608 = vmatprep.subr.bf16.mxu0 %v845
    %1609 = vmatpush1.bf16.msra.mxu0 %v844
    %1610 = vmatprep.subr.bf16.mxu0 %v849
    %1611 = vmatpush1.bf16.msra.mxu0 %v848
    %1612 = vmatprep.subr.bf16.mxu0 %v853
    %1613 = vmatpush1.bf16.msra.mxu0 %v852
    %1614 = vmatprep.subr.bf16.mxu0 %v857
    %1615 = vmatpush1.bf16.msra.mxu0 %v856
    %1616 = vmatprep.subr.bf16.mxu0 %v861
    %1617 = vmatpush1.bf16.msra.mxu0 %v860
    %1618 = vmatprep.subr.bf16.mxu0 0
    %1619 = vmatpush1.bf16.msra.mxu0 0
    %1620 = vmatprep.subr.bf16.mxu0 0
    %1621 = vmatpush1.bf16.msra.mxu0 0
    %1622 = vmatprep.subr.bf16.mxu0 0
    %1623 = vmatpush1.bf16.msra.mxu0 0
    %1624 = vmatprep.subr.bf16.mxu0 0
    %1625 = vmatpush1.bf16.msra.mxu0 0
    %1626 = vmatprep.subr.bf16.mxu0 0
    %1627 = vmatpush1.bf16.msra.mxu0 0
    %1628 = vmatprep.subr.bf16.mxu0 0
    %1629 = vmatpush1.bf16.msra.mxu0 0
    %1630 = vmatprep.subr.bf16.mxu0 0
    %1631 = vmatpush1.bf16.msra.mxu0 0
    %1632 = vmatprep.subr.bf16.mxu0 0
    %1633 = vmatpush1.bf16.msra.mxu0 0
    %1634 = vmatprep.mubr.bf16.mxu0 0
    %1635 = vmatmul.mubr.bf16.gmra.mrb[0].mxu0 %v1478
    %v1636 = vpop.f32.mrb[0].mxu0
    %v1637 = vadd.f32 %v1555, %v1636
    %v1638 = vpop.f32.mrb[0].mxu0
    %v1639 = vadd.f32 %v1557, %v1638
    %v1640 = vpop.f32.mrb[0].mxu0
    %v1641 = vpop.f32.mrb[0].mxu0
    %1642 = vdwg.mxu0
    %v1643 = vadd.f32 %v1596, %v171
    %v1644 = vadd.f32 %v1598, %v175
    %v1645 = vadd.f32 %v1637, %v179
    %v1646 = vadd.f32 %v1639, %v183
    %v1647 = vxor.u32 %v1643, 2147483648
    %v1648 = vmul.f32 %v1647, 1.442695
    %v1649 = vpow.pop %v1648
    %v1650 = vadd.f32 %v1649, 1.0
    %v1651 = vrcp.pop %v1650
    %v1652 = vmul.f32 1.0, %v1651
    %v1653 = vxor.u32 %v1644, 2147483648
    %v1654 = vmul.f32 %v1653, 1.442695
    %v1655 = vpow.pop %v1654
    %v1656 = vadd.f32 %v1655, 1.0
    %v1657 = vrcp.pop %v1656
    %v1658 = vmul.f32 1.0, %v1657
    %v1659 = vtanh.pop %v1645
    %v1660 = vxor.u32 %v1646, 2147483648
    %v1661 = vmul.f32 %v1660, 1.442695
    %v1662 = vpow.pop %v1661
    %v1663 = vadd.f32 %v1662, 1.0
    %v1664 = vrcp.pop %v1663
    %v1665 = vmul.f32 1.0, %v1664
    %v1666 = vmul.f32 %v1658, %v1334
    %v1667 = vmul.f32 %v1652, %v1659
    %v1668 = vadd.f32 %v1666, %v1667
    %v1669 = vtanh.pop %v1668
    %v1670 = vmul.f32 %v1665, %v1669
    %v1671 = vpack.c.bf16 %v1670, %v1670
    %s1672 = scalar_lea.vmem %s5, 2
    %1673 = vst [vmem:[%s1672] sm:$0x1] %v1671
    %s1674 = scalar_lea.vmem %s0, 24
    %v1675 = vld [vmem:[%s1674] sm:$0xff]
    %1676 = vmatprep.subr.bf16.mxu0 %v291
    %1677 = vmatpush1.bf16.msra.mxu0 %v290
    %1678 = vmatprep.subr.bf16.mxu0 %v295
    %1679 = vmatpush1.bf16.msra.mxu0 %v294
    %1680 = vmatprep.subr.bf16.mxu0 %v299
    %1681 = vmatpush1.bf16.msra.mxu0 %v298
    %1682 = vmatprep.subr.bf16.mxu0 %v303
    %1683 = vmatpush1.bf16.msra.mxu0 %v302
    %1684 = vmatprep.subr.bf16.mxu0 %v307
    %1685 = vmatpush1.bf16.msra.mxu0 %v306
    %1686 = vmatprep.subr.bf16.mxu0 %v311
    %1687 = vmatpush1.bf16.msra.mxu0 %v310
    %1688 = vmatprep.subr.bf16.mxu0 %v315
    %1689 = vmatpush1.bf16.msra.mxu0 %v314
    %1690 = vmatprep.subr.bf16.mxu0 %v319
    %1691 = vmatpush1.bf16.msra.mxu0 %v318
    %1692 = vmatprep.subr.bf16.mxu0 0
    %1693 = vmatpush1.bf16.msra.mxu0 0
    %1694 = vmatprep.subr.bf16.mxu0 0
    %1695 = vmatpush1.bf16.msra.mxu0 0
    %1696 = vmatprep.subr.bf16.mxu0 0
    %1697 = vmatpush1.bf16.msra.mxu0 0
    %1698 = vmatprep.subr.bf16.mxu0 0
    %1699 = vmatpush1.bf16.msra.mxu0 0
    %1700 = vmatprep.subr.bf16.mxu0 0
    %1701 = vmatpush1.bf16.msra.mxu0 0
    %1702 = vmatprep.subr.bf16.mxu0 0
    %1703 = vmatpush1.bf16.msra.mxu0 0
    %1704 = vmatprep.subr.bf16.mxu0 0
    %1705 = vmatpush1.bf16.msra.mxu0 0
    %1706 = vmatprep.subr.bf16.mxu0 0
    %1707 = vmatpush1.bf16.msra.mxu0 0
    %1708 = vmatprep.mubr.bf16.mxu0 0
    %1709 = vmatmul.mubr.bf16.gmra.mrb[0].mxu0 %v1478
    %v1710 = vpop.f32.mrb[0].mxu0
    %v1711 = vadd.f32 0.0, %v1710
    %v1712 = vpop.f32.mrb[0].mxu0
    %v1713 = vadd.f32 0.0, %v1712
    %v1714 = vpop.f32.mrb[0].mxu0
    %v1715 = vpop.f32.mrb[0].mxu0
    %1716 = vdwg.mxu0
    %1717 = vmatprep.subr.bf16.mxu0 %v293
    %1718 = vmatpush1.bf16.msra.mxu0 %v292
    %1719 = vmatprep.subr.bf16.mxu0 %v297
    %1720 = vmatpush1.bf16.msra.mxu0 %v296
    %1721 = vmatprep.subr.bf16.mxu0 %v301
    %1722 = vmatpush1.bf16.msra.mxu0 %v300
    %1723 = vmatprep.subr.bf16.mxu0 %v305
    %1724 = vmatpush1.bf16.msra.mxu0 %v304
    %1725 = vmatprep.subr.bf16.mxu0 %v309
    %1726 = vmatpush1.bf16.msra.mxu0 %v308
    %1727 = vmatprep.subr.bf16.mxu0 %v313
    %1728 = vmatpush1.bf16.msra.mxu0 %v312
    %1729 = vmatprep.subr.bf16.mxu0 %v317
    %1730 = vmatpush1.bf16.msra.mxu0 %v316
    %1731 = vmatprep.subr.bf16.mxu0 %v321
    %1732 = vmatpush1.bf16.msra.mxu0 %v320
    %1733 = vmatprep.subr.bf16.mxu0 0
    %1734 = vmatpush1.bf16.msra.mxu0 0
    %1735 = vmatprep.subr.bf16.mxu0 0
    %1736 = vmatpush1.bf16.msra.mxu0 0
    %1737 = vmatprep.subr.bf16.mxu0 0
    %1738 = vmatpush1.bf16.msra.mxu0 0
    %1739 = vmatprep.subr.bf16.mxu0 0
    %1740 = vmatpush1.bf16.msra.mxu0 0
    %1741 = vmatprep.subr.bf16.mxu0 0
    %1742 = vmatpush1.bf16.msra.mxu0 0
    %1743 = vmatprep.subr.bf16.mxu0 0
    %1744 = vmatpush1.bf16.msra.mxu0 0
    %1745 = vmatprep.subr.bf16.mxu0 0
    %1746 = vmatpush1.bf16.msra.mxu0 0
    %1747 = vmatprep.subr.bf16.mxu0 0
    %1748 = vmatpush1.bf16.msra.mxu0 0
    %1749 = vmatprep.mubr.bf16.mxu0 0
    %1750 = vmatmul.mubr.bf16.gmra.mrb[0].mxu0 %v1478
    %v1751 = vpop.f32.mrb[0].mxu0
    %v1752 = vadd.f32 0.0, %v1751
    %v1753 = vpop.f32.mrb[0].mxu0
    %v1754 = vadd.f32 0.0, %v1753
    %v1755 = vpop.f32.mrb[0].mxu0
    %v1756 = vpop.f32.mrb[0].mxu0
    %1757 = vdwg.mxu0
    %v1762 = vcombine.low %v1711, %v1713
    %v1763 = vcombine.low %v1752, %v1754
    %v1765 = vunpack.c.l.s4 1983009808
    %v1766 = vunpack.c.0.s8 %v1765
    %v1767 = vlaneseq
    %v1768 = vshrl.u32 %v1767, 7
    %v1769 = vsub.s32 %v1766, %v1768
    %v1770 = vrot.slane %v1762, %v1769
    %v1772 = vunpack.c.l.s4 1983009808
    %v1773 = vunpack.c.0.s8 %v1772
    %v1774 = vlaneseq
    %v1775 = vshrl.u32 %v1774, 7
    %v1776 = vsub.s32 %v1773, %v1775
    %v1777 = vrot.slane %v1763, %v1776
    %v1778 = vcombine.low %v1770, %v1777
    %v1780 = vadd.f32 %v1675, %v1778
    %v1781 = vxor.u32 %v1780, 2147483648
    %v1782 = vmul.f32 %v1781, 1.442695
    %v1783 = vpow.pop %v1782
    %v1784 = vadd.f32 %v1783, 1.0
    %v1785 = vrcp.pop %v1784
    %v1786 = vmul.f32 1.0, %v1785
    %v1788 = vrot.slane %v1780, 2
    %v1790 = vxor.u32 %v1788, 2147483648
    %v1791 = vmul.f32 %v1790, 1.442695
    %v1792 = vpow.pop %v1791
    %v1793 = vadd.f32 %v1792, 1.0
    %v1794 = vrcp.pop %v1793
    %v1795 = vmul.f32 1.0, %v1794
    %v1796 = vrot.slane %v1780, 4
    %v1798 = vtanh.pop %v1796
    %v1799 = vrot.slane %v1780, 6
    %v1801 = vxor.u32 %v1799, 2147483648
    %v1802 = vmul.f32 %v1801, 1.442695
    %v1803 = vpow.pop %v1802
    %v1804 = vadd.f32 %v1803, 1.0
    %v1805 = vrcp.pop %v1804
    %v1806 = vmul.f32 1.0, %v1805
    %v1807 = vmul.f32 %v1795, %v1475
    %v1808 = vmul.f32 %v1786, %v1798
    %v1809 = vadd.f32 %v1807, %v1808
    %v1810 = vtanh.pop %v1809
    %v1811 = vmul.f32 %v1806, %v1810
    %v1812 = vpack.c.bf16 %v1811, %v1811
    %1813 = vmatprep.subr.bf16.mxu0 %v589
    %1814 = vmatpush1.bf16.msra.mxu0 %v588
    %1815 = vmatprep.subr.bf16.mxu0 %v593
    %1816 = vmatpush1.bf16.msra.mxu0 %v592
    %1817 = vmatprep.subr.bf16.mxu0 %v597
    %1818 = vmatpush1.bf16.msra.mxu0 %v596
    %1819 = vmatprep.subr.bf16.mxu0 %v601
    %1820 = vmatpush1.bf16.msra.mxu0 %v600
    %1821 = vmatprep.subr.bf16.mxu0 %v605
    %1822 = vmatpush1.bf16.msra.mxu0 %v604
    %1823 = vmatprep.subr.bf16.mxu0 %v609
    %1824 = vmatpush1.bf16.msra.mxu0 %v608
    %1825 = vmatprep.subr.bf16.mxu0 %v613
    %1826 = vmatpush1.bf16.msra.mxu0 %v612
    %1827 = vmatprep.subr.bf16.mxu0 %v617
    %1828 = vmatpush1.bf16.msra.mxu0 %v616
    %1829 = vmatprep.subr.bf16.mxu0 0
    %1830 = vmatpush1.bf16.msra.mxu0 0
    %1831 = vmatprep.subr.bf16.mxu0 0
    %1832 = vmatpush1.bf16.msra.mxu0 0
    %1833 = vmatprep.subr.bf16.mxu0 0
    %1834 = vmatpush1.bf16.msra.mxu0 0
    %1835 = vmatprep.subr.bf16.mxu0 0
    %1836 = vmatpush1.bf16.msra.mxu0 0
    %1837 = vmatprep.subr.bf16.mxu0 0
    %1838 = vmatpush1.bf16.msra.mxu0 0
    %1839 = vmatprep.subr.bf16.mxu0 0
    %1840 = vmatpush1.bf16.msra.mxu0 0
    %1841 = vmatprep.subr.bf16.mxu0 0
    %1842 = vmatpush1.bf16.msra.mxu0 0
    %1843 = vmatprep.subr.bf16.mxu0 0
    %1844 = vmatpush1.bf16.msra.mxu0 0
    %1845 = vmatprep.mubr.bf16.mxu0 0
    %1846 = vmatmul.mubr.bf16.gmra.mrb[0].mxu0 %v1671
    %v1847 = vpop.f32.mrb[0].mxu0
    %v1848 = vadd.f32 0.0, %v1847
    %v1849 = vpop.f32.mrb[0].mxu0
    %v1850 = vadd.f32 0.0, %v1849
    %v1851 = vpop.f32.mrb[0].mxu0
    %v1852 = vpop.f32.mrb[0].mxu0
    %1853 = vdwg.mxu0
    %1854 = vmatprep.subr.bf16.mxu0 %v591
    %1855 = vmatpush1.bf16.msra.mxu0 %v590
    %1856 = vmatprep.subr.bf16.mxu0 %v595
    %1857 = vmatpush1.bf16.msra.mxu0 %v594
    %1858 = vmatprep.subr.bf16.mxu0 %v599
    %1859 = vmatpush1.bf16.msra.mxu0 %v598
    %1860 = vmatprep.subr.bf16.mxu0 %v603
    %1861 = vmatpush1.bf16.msra.mxu0 %v602
    %1862 = vmatprep.subr.bf16.mxu0 %v607
    %1863 = vmatpush1.bf16.msra.mxu0 %v606
    %1864 = vmatprep.subr.bf16.mxu0 %v611
    %1865 = vmatpush1.bf16.msra.mxu0 %v610
    %1866 = vmatprep.subr.bf16.mxu0 %v615
    %1867 = vmatpush1.bf16.msra.mxu0 %v614
    %1868 = vmatprep.subr.bf16.mxu0 %v619
    %1869 = vmatpush1.bf16.msra.mxu0 %v618
    %1870 = vmatprep.subr.bf16.mxu0 0
    %1871 = vmatpush1.bf16.msra.mxu0 0
    %1872 = vmatprep.subr.bf16.mxu0 0
    %1873 = vmatpush1.bf16.msra.mxu0 0
    %1874 = vmatprep.subr.bf16.mxu0 0
    %1875 = vmatpush1.bf16.msra.mxu0 0
    %1876 = vmatprep.subr.bf16.mxu0 0
    %1877 = vmatpush1.bf16.msra.mxu0 0
    %1878 = vmatprep.subr.bf16.mxu0 0
    %1879 = vmatpush1.bf16.msra.mxu0 0
    %1880 = vmatprep.subr.bf16.mxu0 0
    %1881 = vmatpush1.bf16.msra.mxu0 0
    %1882 = vmatprep.subr.bf16.mxu0 0
    %1883 = vmatpush1.bf16.msra.mxu0 0
    %1884 = vmatprep.subr.bf16.mxu0 0
    %1885 = vmatpush1.bf16.msra.mxu0 0
    %1886 = vmatprep.mubr.bf16.mxu0 0
    %1887 = vmatmul.mubr.bf16.gmra.mrb[0].mxu0 %v1671
    %v1888 = vpop.f32.mrb[0].mxu0
    %v1889 = vadd.f32 0.0, %v1888
    %v1890 = vpop.f32.mrb[0].mxu0
    %v1891 = vadd.f32 0.0, %v1890
    %v1892 = vpop.f32.mrb[0].mxu0
    %v1893 = vpop.f32.mrb[0].mxu0
    %1894 = vdwg.mxu0
    %1895 = vmatprep.subr.bf16.mxu0 %v831
    %1896 = vmatpush1.bf16.msra.mxu0 %v830
    %1897 = vmatprep.subr.bf16.mxu0 %v835
    %1898 = vmatpush1.bf16.msra.mxu0 %v834
    %1899 = vmatprep.subr.bf16.mxu0 %v839
    %1900 = vmatpush1.bf16.msra.mxu0 %v838
    %1901 = vmatprep.subr.bf16.mxu0 %v843
    %1902 = vmatpush1.bf16.msra.mxu0 %v842
    %1903 = vmatprep.subr.bf16.mxu0 %v847
    %1904 = vmatpush1.bf16.msra.mxu0 %v846
    %1905 = vmatprep.subr.bf16.mxu0 %v851
    %1906 = vmatpush1.bf16.msra.mxu0 %v850
    %1907 = vmatprep.subr.bf16.mxu0 %v855
    %1908 = vmatpush1.bf16.msra.mxu0 %v854
    %1909 = vmatprep.subr.bf16.mxu0 %v859
    %1910 = vmatpush1.bf16.msra.mxu0 %v858
    %1911 = vmatprep.subr.bf16.mxu0 0
    %1912 = vmatpush1.bf16.msra.mxu0 0
    %1913 = vmatprep.subr.bf16.mxu0 0
    %1914 = vmatpush1.bf16.msra.mxu0 0
    %1915 = vmatprep.subr.bf16.mxu0 0
    %1916 = vmatpush1.bf16.msra.mxu0 0
    %1917 = vmatprep.subr.bf16.mxu0 0
    %1918 = vmatpush1.bf16.msra.mxu0 0
    %1919 = vmatprep.subr.bf16.mxu0 0
    %1920 = vmatpush1.bf16.msra.mxu0 0
    %1921 = vmatprep.subr.bf16.mxu0 0
    %1922 = vmatpush1.bf16.msra.mxu0 0
    %1923 = vmatprep.subr.bf16.mxu0 0
    %1924 = vmatpush1.bf16.msra.mxu0 0
    %1925 = vmatprep.subr.bf16.mxu0 0
    %1926 = vmatpush1.bf16.msra.mxu0 0
    %1927 = vmatprep.mubr.bf16.mxu0 0
    %1928 = vmatmul.mubr.bf16.gmra.mrb[0].mxu0 %v1812
    %v1929 = vpop.f32.mrb[0].mxu0
    %v1930 = vadd.f32 %v1848, %v1929
    %v1931 = vpop.f32.mrb[0].mxu0
    %v1932 = vadd.f32 %v1850, %v1931
    %v1933 = vpop.f32.mrb[0].mxu0
    %v1934 = vpop.f32.mrb[0].mxu0
    %1935 = vdwg.mxu0
    %1936 = vmatprep.subr.bf16.mxu0 %v833
    %1937 = vmatpush1.bf16.msra.mxu0 %v832
    %1938 = vmatprep.subr.bf16.mxu0 %v837
    %1939 = vmatpush1.bf16.msra.mxu0 %v836
    %1940 = vmatprep.subr.bf16.mxu0 %v841
    %1941 = vmatpush1.bf16.msra.mxu0 %v840
    %1942 = vmatprep.subr.bf16.mxu0 %v845
    %1943 = vmatpush1.bf16.msra.mxu0 %v844
    %1944 = vmatprep.subr.bf16.mxu0 %v849
    %1945 = vmatpush1.bf16.msra.mxu0 %v848
    %1946 = vmatprep.subr.bf16.mxu0 %v853
    %1947 = vmatpush1.bf16.msra.mxu0 %v852
    %1948 = vmatprep.subr.bf16.mxu0 %v857
    %1949 = vmatpush1.bf16.msra.mxu0 %v856
    %1950 = vmatprep.subr.bf16.mxu0 %v861
    %1951 = vmatpush1.bf16.msra.mxu0 %v860
    %1952 = vmatprep.subr.bf16.mxu0 0
    %1953 = vmatpush1.bf16.msra.mxu0 0
    %1954 = vmatprep.subr.bf16.mxu0 0
    %1955 = vmatpush1.bf16.msra.mxu0 0
    %1956 = vmatprep.subr.bf16.mxu0 0
    %1957 = vmatpush1.bf16.msra.mxu0 0
    %1958 = vmatprep.subr.bf16.mxu0 0
    %1959 = vmatpush1.bf16.msra.mxu0 0
    %1960 = vmatprep.subr.bf16.mxu0 0
    %1961 = vmatpush1.bf16.msra.mxu0 0
    %1962 = vmatprep.subr.bf16.mxu0 0
    %1963 = vmatpush1.bf16.msra.mxu0 0
    %1964 = vmatprep.subr.bf16.mxu0 0
    %1965 = vmatpush1.bf16.msra.mxu0 0
    %1966 = vmatprep.subr.bf16.mxu0 0
    %1967 = vmatpush1.bf16.msra.mxu0 0
    %1968 = vmatprep.mubr.bf16.mxu0 0
    %1969 = vmatmul.mubr.bf16.gmra.mrb[0].mxu0 %v1812
    %v1970 = vpop.f32.mrb[0].mxu0
    %v1971 = vadd.f32 %v1889, %v1970
    %v1972 = vpop.f32.mrb[0].mxu0
    %v1973 = vadd.f32 %v1891, %v1972
    %v1974 = vpop.f32.mrb[0].mxu0
    %v1975 = vpop.f32.mrb[0].mxu0
    %1976 = vdwg.mxu0
    %v1977 = vadd.f32 %v1930, %v171
    %v1978 = vadd.f32 %v1932, %v175
    %v1979 = vadd.f32 %v1971, %v179
    %v1980 = vadd.f32 %v1973, %v183
    %v1981 = vxor.u32 %v1977, 2147483648
    %v1982 = vmul.f32 %v1981, 1.442695
    %v1983 = vpow.pop %v1982
    %v1984 = vadd.f32 %v1983, 1.0
    %v1985 = vrcp.pop %v1984
    %v1986 = vmul.f32 1.0, %v1985
    %v1987 = vxor.u32 %v1978, 2147483648
    %v1988 = vmul.f32 %v1987, 1.442695
    %v1989 = vpow.pop %v1988
    %v1990 = vadd.f32 %v1989, 1.0
    %v1991 = vrcp.pop %v1990
    %v1992 = vmul.f32 1.0, %v1991
    %v1993 = vtanh.pop %v1979
    %v1994 = vxor.u32 %v1980, 2147483648
    %v1995 = vmul.f32 %v1994, 1.442695
    %v1996 = vpow.pop %v1995
    %v1997 = vadd.f32 %v1996, 1.0
    %v1998 = vrcp.pop %v1997
    %v1999 = vmul.f32 1.0, %v1998
    %v2000 = vmul.f32 %v1992, %v1668
    %v2001 = vmul.f32 %v1986, %v1993
    %v2002 = vadd.f32 %v2000, %v2001
    %v2003 = vtanh.pop %v2002
    %v2004 = vmul.f32 %v1999, %v2003
    %v2005 = vpack.c.bf16 %v2004, %v2004
    %s2006 = scalar_lea.vmem %s5, 3
    %2007 = vst [vmem:[%s2006] sm:$0x1] %v2005
    %s2008 = scalar_lea.vmem %s0, 32
    %v2009 = vld [vmem:[%s2008] sm:$0xff]
    %2010 = vmatprep.subr.bf16.mxu0 %v291
    %2011 = vmatpush1.bf16.msra.mxu0 %v290
    %2012 = vmatprep.subr.bf16.mxu0 %v295
    %2013 = vmatpush1.bf16.msra.mxu0 %v294
    %2014 = vmatprep.subr.bf16.mxu0 %v299
    %2015 = vmatpush1.bf16.msra.mxu0 %v298
    %2016 = vmatprep.subr.bf16.mxu0 %v303
    %2017 = vmatpush1.bf16.msra.mxu0 %v302
    %2018 = vmatprep.subr.bf16.mxu0 %v307
    %2019 = vmatpush1.bf16.msra.mxu0 %v306
    %2020 = vmatprep.subr.bf16.mxu0 %v311
    %2021 = vmatpush1.bf16.msra.mxu0 %v310
    %2022 = vmatprep.subr.bf16.mxu0 %v315
    %2023 = vmatpush1.bf16.msra.mxu0 %v314
    %2024 = vmatprep.subr.bf16.mxu0 %v319
    %2025 = vmatpush1.bf16.msra.mxu0 %v318
    %2026 = vmatprep.subr.bf16.mxu0 0
    %2027 = vmatpush1.bf16.msra.mxu0 0
    %2028 = vmatprep.subr.bf16.mxu0 0
    %2029 = vmatpush1.bf16.msra.mxu0 0
    %2030 = vmatprep.subr.bf16.mxu0 0
    %2031 = vmatpush1.bf16.msra.mxu0 0
    %2032 = vmatprep.subr.bf16.mxu0 0
    %2033 = vmatpush1.bf16.msra.mxu0 0
    %2034 = vmatprep.subr.bf16.mxu0 0
    %2035 = vmatpush1.bf16.msra.mxu0 0
    %2036 = vmatprep.subr.bf16.mxu0 0
    %2037 = vmatpush1.bf16.msra.mxu0 0
    %2038 = vmatprep.subr.bf16.mxu0 0
    %2039 = vmatpush1.bf16.msra.mxu0 0
    %2040 = vmatprep.subr.bf16.mxu0 0
    %2041 = vmatpush1.bf16.msra.mxu0 0
    %2042 = vmatprep.mubr.bf16.mxu0 0
    %2043 = vmatmul.mubr.bf16.gmra.mrb[0].mxu0 %v1812
    %v2044 = vpop.f32.mrb[0].mxu0
    %v2045 = vadd.f32 0.0, %v2044
    %v2046 = vpop.f32.mrb[0].mxu0
    %v2047 = vadd.f32 0.0, %v2046
    %v2048 = vpop.f32.mrb[0].mxu0
    %v2049 = vpop.f32.mrb[0].mxu0
    %2050 = vdwg.mxu0
    %2051 = vmatprep.subr.bf16.mxu0 %v293
    %2052 = vmatpush1.bf16.msra.mxu0 %v292
    %2053 = vmatprep.subr.bf16.mxu0 %v297
    %2054 = vmatpush1.bf16.msra.mxu0 %v296
    %2055 = vmatprep.subr.bf16.mxu0 %v301
    %2056 = vmatpush1.bf16.msra.mxu0 %v300
    %2057 = vmatprep.subr.bf16.mxu0 %v305
    %2058 = vmatpush1.bf16.msra.mxu0 %v304
    %2059 = vmatprep.subr.bf16.mxu0 %v309
    %2060 = vmatpush1.bf16.msra.mxu0 %v308
    %2061 = vmatprep.subr.bf16.mxu0 %v313
    %2062 = vmatpush1.bf16.msra.mxu0 %v312
    %2063 = vmatprep.subr.bf16.mxu0 %v317
    %2064 = vmatpush1.bf16.msra.mxu0 %v316
    %2065 = vmatprep.subr.bf16.mxu0 %v321
    %2066 = vmatpush1.bf16.msra.mxu0 %v320
    %2067 = vmatprep.subr.bf16.mxu0 0
    %2068 = vmatpush1.bf16.msra.mxu0 0
    %2069 = vmatprep.subr.bf16.mxu0 0
    %2070 = vmatpush1.bf16.msra.mxu0 0
    %2071 = vmatprep.subr.bf16.mxu0 0
    %2072 = vmatpush1.bf16.msra.mxu0 0
    %2073 = vmatprep.subr.bf16.mxu0 0
    %2074 = vmatpush1.bf16.msra.mxu0 0
    %2075 = vmatprep.subr.bf16.mxu0 0
    %2076 = vmatpush1.bf16.msra.mxu0 0
    %2077 = vmatprep.subr.bf16.mxu0 0
    %2078 = vmatpush1.bf16.msra.mxu0 0
    %2079 = vmatprep.subr.bf16.mxu0 0
    %2080 = vmatpush1.bf16.msra.mxu0 0
    %2081 = vmatprep.subr.bf16.mxu0 0
    %2082 = vmatpush1.bf16.msra.mxu0 0
    %2083 = vmatprep.mubr.bf16.mxu0 0
    %2084 = vmatmul.mubr.bf16.gmra.mrb[0].mxu0 %v1812
    %v2085 = vpop.f32.mrb[0].mxu0
    %v2086 = vadd.f32 0.0, %v2085
    %v2087 = vpop.f32.mrb[0].mxu0
    %v2088 = vadd.f32 0.0, %v2087
    %v2089 = vpop.f32.mrb[0].mxu0
    %v2090 = vpop.f32.mrb[0].mxu0
    %2091 = vdwg.mxu0
    %v2096 = vcombine.low %v2045, %v2047
    %v2097 = vcombine.low %v2086, %v2088
    %v2099 = vunpack.c.l.s4 1983009808
    %v2100 = vunpack.c.0.s8 %v2099
    %v2101 = vlaneseq
    %v2102 = vshrl.u32 %v2101, 7
    %v2103 = vsub.s32 %v2100, %v2102
    %v2104 = vrot.slane %v2096, %v2103
    %v2106 = vunpack.c.l.s4 1983009808
    %v2107 = vunpack.c.0.s8 %v2106
    %v2108 = vlaneseq
    %v2109 = vshrl.u32 %v2108, 7
    %v2110 = vsub.s32 %v2107, %v2109
    %v2111 = vrot.slane %v2097, %v2110
    %v2112 = vcombine.low %v2104, %v2111
    %v2114 = vadd.f32 %v2009, %v2112
    %v2115 = vxor.u32 %v2114, 2147483648
    %v2116 = vmul.f32 %v2115, 1.442695
    %v2117 = vpow.pop %v2116
    %v2118 = vadd.f32 %v2117, 1.0
    %v2119 = vrcp.pop %v2118
    %v2120 = vmul.f32 1.0, %v2119
    %v2122 = vrot.slane %v2114, 2
    %v2124 = vxor.u32 %v2122, 2147483648
    %v2125 = vmul.f32 %v2124, 1.442695
    %v2126 = vpow.pop %v2125
    %v2127 = vadd.f32 %v2126, 1.0
    %v2128 = vrcp.pop %v2127
    %v2129 = vmul.f32 1.0, %v2128
    %v2130 = vrot.slane %v2114, 4
    %v2132 = vtanh.pop %v2130
    %v2133 = vrot.slane %v2114, 6
    %v2135 = vxor.u32 %v2133, 2147483648
    %v2136 = vmul.f32 %v2135, 1.442695
    %v2137 = vpow.pop %v2136
    %v2138 = vadd.f32 %v2137, 1.0
    %v2139 = vrcp.pop %v2138
    %v2140 = vmul.f32 1.0, %v2139
    %v2141 = vmul.f32 %v2129, %v1809
    %v2142 = vmul.f32 %v2120, %v2132
    %v2143 = vadd.f32 %v2141, %v2142
    %v2144 = vtanh.pop %v2143
    %v2145 = vmul.f32 %v2140, %v2144
    %v2146 = vpack.c.bf16 %v2145, %v2145
    %2147 = vmatprep.subr.bf16.mxu0 %v589
    %2148 = vmatpush1.bf16.msra.mxu0 %v588
    %2149 = vmatprep.subr.bf16.mxu0 %v593
    %2150 = vmatpush1.bf16.msra.mxu0 %v592
    %2151 = vmatprep.subr.bf16.mxu0 %v597
    %2152 = vmatpush1.bf16.msra.mxu0 %v596
    %2153 = vmatprep.subr.bf16.mxu0 %v601
    %2154 = vmatpush1.bf16.msra.mxu0 %v600
    %2155 = vmatprep.subr.bf16.mxu0 %v605
    %2156 = vmatpush1.bf16.msra.mxu0 %v604
    %2157 = vmatprep.subr.bf16.mxu0 %v609
    %2158 = vmatpush1.bf16.msra.mxu0 %v608
    %2159 = vmatprep.subr.bf16.mxu0 %v613
    %2160 = vmatpush1.bf16.msra.mxu0 %v612
    %2161 = vmatprep.subr.bf16.mxu0 %v617
    %2162 = vmatpush1.bf16.msra.mxu0 %v616
    %2163 = vmatprep.subr.bf16.mxu0 0
    %2164 = vmatpush1.bf16.msra.mxu0 0
    %2165 = vmatprep.subr.bf16.mxu0 0
    %2166 = vmatpush1.bf16.msra.mxu0 0
    %2167 = vmatprep.subr.bf16.mxu0 0
    %2168 = vmatpush1.bf16.msra.mxu0 0
    %2169 = vmatprep.subr.bf16.mxu0 0
    %2170 = vmatpush1.bf16.msra.mxu0 0
    %2171 = vmatprep.subr.bf16.mxu0 0
    %2172 = vmatpush1.bf16.msra.mxu0 0
    %2173 = vmatprep.subr.bf16.mxu0 0
    %2174 = vmatpush1.bf16.msra.mxu0 0
    %2175 = vmatprep.subr.bf16.mxu0 0
    %2176 = vmatpush1.bf16.msra.mxu0 0
    %2177 = vmatprep.subr.bf16.mxu0 0
    %2178 = vmatpush1.bf16.msra.mxu0 0
    %2179 = vmatprep.mubr.bf16.mxu0 0
    %2180 = vmatmul.mubr.bf16.gmra.mrb[0].mxu0 %v2005
    %v2181 = vpop.f32.mrb[0].mxu0
    %v2182 = vadd.f32 0.0, %v2181
    %v2183 = vpop.f32.mrb[0].mxu0
    %v2184 = vadd.f32 0.0, %v2183
    %v2185 = vpop.f32.mrb[0].mxu0
    %v2186 = vpop.f32.mrb[0].mxu0
    %2187 = vdwg.mxu0
    %2188 = vmatprep.subr.bf16.mxu0 %v591
    %2189 = vmatpush1.bf16.msra.mxu0 %v590
    %2190 = vmatprep.subr.bf16.mxu0 %v595
    %2191 = vmatpush1.bf16.msra.mxu0 %v594
    %2192 = vmatprep.subr.bf16.mxu0 %v599
    %2193 = vmatpush1.bf16.msra.mxu0 %v598
    %2194 = vmatprep.subr.bf16.mxu0 %v603
    %2195 = vmatpush1.bf16.msra.mxu0 %v602
    %2196 = vmatprep.subr.bf16.mxu0 %v607
    %2197 = vmatpush1.bf16.msra.mxu0 %v606
    %2198 = vmatprep.subr.bf16.mxu0 %v611
    %2199 = vmatpush1.bf16.msra.mxu0 %v610
    %2200 = vmatprep.subr.bf16.mxu0 %v615
    %2201 = vmatpush1.bf16.msra.mxu0 %v614
    %2202 = vmatprep.subr.bf16.mxu0 %v619
    %2203 = vmatpush1.bf16.msra.mxu0 %v618
    %2204 = vmatprep.subr.bf16.mxu0 0
    %2205 = vmatpush1.bf16.msra.mxu0 0
    %2206 = vmatprep.subr.bf16.mxu0 0
    %2207 = vmatpush1.bf16.msra.mxu0 0
    %2208 = vmatprep.subr.bf16.mxu0 0
    %2209 = vmatpush1.bf16.msra.mxu0 0
    %2210 = vmatprep.subr.bf16.mxu0 0
    %2211 = vmatpush1.bf16.msra.mxu0 0
    %2212 = vmatprep.subr.bf16.mxu0 0
    %2213 = vmatpush1.bf16.msra.mxu0 0
    %2214 = vmatprep.subr.bf16.mxu0 0
    %2215 = vmatpush1.bf16.msra.mxu0 0
    %2216 = vmatprep.subr.bf16.mxu0 0
    %2217 = vmatpush1.bf16.msra.mxu0 0
    %2218 = vmatprep.subr.bf16.mxu0 0
    %2219 = vmatpush1.bf16.msra.mxu0 0
    %2220 = vmatprep.mubr.bf16.mxu0 0
    %2221 = vmatmul.mubr.bf16.gmra.mrb[0].mxu0 %v2005
    %v2222 = vpop.f32.mrb[0].mxu0
    %v2223 = vadd.f32 0.0, %v2222
    %v2224 = vpop.f32.mrb[0].mxu0
    %v2225 = vadd.f32 0.0, %v2224
    %v2226 = vpop.f32.mrb[0].mxu0
    %v2227 = vpop.f32.mrb[0].mxu0
    %2228 = vdwg.mxu0
    %2229 = vmatprep.subr.bf16.mxu0 %v831
    %2230 = vmatpush1.bf16.msra.mxu0 %v830
    %2231 = vmatprep.subr.bf16.mxu0 %v835
    %2232 = vmatpush1.bf16.msra.mxu0 %v834
    %2233 = vmatprep.subr.bf16.mxu0 %v839
    %2234 = vmatpush1.bf16.msra.mxu0 %v838
    %2235 = vmatprep.subr.bf16.mxu0 %v843
    %2236 = vmatpush1.bf16.msra.mxu0 %v842
    %2237 = vmatprep.subr.bf16.mxu0 %v847
    %2238 = vmatpush1.bf16.msra.mxu0 %v846
    %2239 = vmatprep.subr.bf16.mxu0 %v851
    %2240 = vmatpush1.bf16.msra.mxu0 %v850
    %2241 = vmatprep.subr.bf16.mxu0 %v855
    %2242 = vmatpush1.bf16.msra.mxu0 %v854
    %2243 = vmatprep.subr.bf16.mxu0 %v859
    %2244 = vmatpush1.bf16.msra.mxu0 %v858
    %2245 = vmatprep.subr.bf16.mxu0 0
    %2246 = vmatpush1.bf16.msra.mxu0 0
    %2247 = vmatprep.subr.bf16.mxu0 0
    %2248 = vmatpush1.bf16.msra.mxu0 0
    %2249 = vmatprep.subr.bf16.mxu0 0
    %2250 = vmatpush1.bf16.msra.mxu0 0
    %2251 = vmatprep.subr.bf16.mxu0 0
    %2252 = vmatpush1.bf16.msra.mxu0 0
    %2253 = vmatprep.subr.bf16.mxu0 0
    %2254 = vmatpush1.bf16.msra.mxu0 0
    %2255 = vmatprep.subr.bf16.mxu0 0
    %2256 = vmatpush1.bf16.msra.mxu0 0
    %2257 = vmatprep.subr.bf16.mxu0 0
    %2258 = vmatpush1.bf16.msra.mxu0 0
    %2259 = vmatprep.subr.bf16.mxu0 0
    %2260 = vmatpush1.bf16.msra.mxu0 0
    %2261 = vmatprep.mubr.bf16.mxu0 0
    %2262 = vmatmul.mubr.bf16.gmra.mrb[0].mxu0 %v2146
    %v2263 = vpop.f32.mrb[0].mxu0
    %v2264 = vadd.f32 %v2182, %v2263
    %v2265 = vpop.f32.mrb[0].mxu0
    %v2266 = vadd.f32 %v2184, %v2265
    %v2267 = vpop.f32.mrb[0].mxu0
    %v2268 = vpop.f32.mrb[0].mxu0
    %2269 = vdwg.mxu0
    %2270 = vmatprep.subr.bf16.mxu0 %v833
    %2271 = vmatpush1.bf16.msra.mxu0 %v832
    %2272 = vmatprep.subr.bf16.mxu0 %v837
    %2273 = vmatpush1.bf16.msra.mxu0 %v836
    %2274 = vmatprep.subr.bf16.mxu0 %v841
    %2275 = vmatpush1.bf16.msra.mxu0 %v840
    %2276 = vmatprep.subr.bf16.mxu0 %v845
    %2277 = vmatpush1.bf16.msra.mxu0 %v844
    %2278 = vmatprep.subr.bf16.mxu0 %v849
    %2279 = vmatpush1.bf16.msra.mxu0 %v848
    %2280 = vmatprep.subr.bf16.mxu0 %v853
    %2281 = vmatpush1.bf16.msra.mxu0 %v852
    %2282 = vmatprep.subr.bf16.mxu0 %v857
    %2283 = vmatpush1.bf16.msra.mxu0 %v856
    %2284 = vmatprep.subr.bf16.mxu0 %v861
    %2285 = vmatpush1.bf16.msra.mxu0 %v860
    %2286 = vmatprep.subr.bf16.mxu0 0
    %2287 = vmatpush1.bf16.msra.mxu0 0
    %2288 = vmatprep.subr.bf16.mxu0 0
    %2289 = vmatpush1.bf16.msra.mxu0 0
    %2290 = vmatprep.subr.bf16.mxu0 0
    %2291 = vmatpush1.bf16.msra.mxu0 0
    %2292 = vmatprep.subr.bf16.mxu0 0
    %2293 = vmatpush1.bf16.msra.mxu0 0
    %2294 = vmatprep.subr.bf16.mxu0 0
    %2295 = vmatpush1.bf16.msra.mxu0 0
    %2296 = vmatprep.subr.bf16.mxu0 0
    %2297 = vmatpush1.bf16.msra.mxu0 0
    %2298 = vmatprep.subr.bf16.mxu0 0
    %2299 = vmatpush1.bf16.msra.mxu0 0
    %2300 = vmatprep.subr.bf16.mxu0 0
    %2301 = vmatpush1.bf16.msra.mxu0 0
    %2302 = vmatprep.mubr.bf16.mxu0 0
    %2303 = vmatmul.mubr.bf16.gmra.mrb[0].mxu0 %v2146
    %v2304 = vpop.f32.mrb[0].mxu0
    %v2305 = vadd.f32 %v2223, %v2304
    %v2306 = vpop.f32.mrb[0].mxu0
    %v2307 = vadd.f32 %v2225, %v2306
    %v2308 = vpop.f32.mrb[0].mxu0
    %v2309 = vpop.f32.mrb[0].mxu0
    %2310 = vdwg.mxu0
    %v2311 = vadd.f32 %v2264, %v171
    %v2312 = vadd.f32 %v2266, %v175
    %v2313 = vadd.f32 %v2305, %v179
    %v2314 = vadd.f32 %v2307, %v183
    %v2315 = vxor.u32 %v2311, 2147483648
    %v2316 = vmul.f32 %v2315, 1.442695
    %v2317 = vpow.pop %v2316
    %v2318 = vadd.f32 %v2317, 1.0
    %v2319 = vrcp.pop %v2318
    %v2320 = vmul.f32 1.0, %v2319
    %v2321 = vxor.u32 %v2312, 2147483648
    %v2322 = vmul.f32 %v2321, 1.442695
    %v2323 = vpow.pop %v2322
    %v2324 = vadd.f32 %v2323, 1.0
    %v2325 = vrcp.pop %v2324
    %v2326 = vmul.f32 1.0, %v2325
    %v2327 = vtanh.pop %v2313
    %v2328 = vxor.u32 %v2314, 2147483648
    %v2329 = vmul.f32 %v2328, 1.442695
    %v2330 = vpow.pop %v2329
    %v2331 = vadd.f32 %v2330, 1.0
    %v2332 = vrcp.pop %v2331
    %v2333 = vmul.f32 1.0, %v2332
    %v2334 = vmul.f32 %v2326, %v2002
    %v2335 = vmul.f32 %v2320, %v2327
    %v2336 = vadd.f32 %v2334, %v2335
    %v2337 = vtanh.pop %v2336
    %v2338 = vmul.f32 %v2333, %v2337
    %v2339 = vpack.c.bf16 %v2338, %v2338
    %s2340 = scalar_lea.vmem %s5, 4
    %2341 = vst [vmem:[%s2340] sm:$0x1] %v2339
    %s2342 = scalar_lea.vmem %s0, 40
    %v2343 = vld [vmem:[%s2342] sm:$0xff]
    %2344 = vmatprep.subr.bf16.mxu0 %v291
    %2345 = vmatpush1.bf16.msra.mxu0 %v290
    %2346 = vmatprep.subr.bf16.mxu0 %v295
    %2347 = vmatpush1.bf16.msra.mxu0 %v294
    %2348 = vmatprep.subr.bf16.mxu0 %v299
    %2349 = vmatpush1.bf16.msra.mxu0 %v298
    %2350 = vmatprep.subr.bf16.mxu0 %v303
    %2351 = vmatpush1.bf16.msra.mxu0 %v302
    %2352 = vmatprep.subr.bf16.mxu0 %v307
    %2353 = vmatpush1.bf16.msra.mxu0 %v306
    %2354 = vmatprep.subr.bf16.mxu0 %v311
    %2355 = vmatpush1.bf16.msra.mxu0 %v310
    %2356 = vmatprep.subr.bf16.mxu0 %v315
    %2357 = vmatpush1.bf16.msra.mxu0 %v314
    %2358 = vmatprep.subr.bf16.mxu0 %v319
    %2359 = vmatpush1.bf16.msra.mxu0 %v318
    %2360 = vmatprep.subr.bf16.mxu0 0
    %2361 = vmatpush1.bf16.msra.mxu0 0
    %2362 = vmatprep.subr.bf16.mxu0 0
    %2363 = vmatpush1.bf16.msra.mxu0 0
    %2364 = vmatprep.subr.bf16.mxu0 0
    %2365 = vmatpush1.bf16.msra.mxu0 0
    %2366 = vmatprep.subr.bf16.mxu0 0
    %2367 = vmatpush1.bf16.msra.mxu0 0
    %2368 = vmatprep.subr.bf16.mxu0 0
    %2369 = vmatpush1.bf16.msra.mxu0 0
    %2370 = vmatprep.subr.bf16.mxu0 0
    %2371 = vmatpush1.bf16.msra.mxu0 0
    %2372 = vmatprep.subr.bf16.mxu0 0
    %2373 = vmatpush1.bf16.msra.mxu0 0
    %2374 = vmatprep.subr.bf16.mxu0 0
    %2375 = vmatpush1.bf16.msra.mxu0 0
    %2376 = vmatprep.mubr.bf16.mxu0 0
    %2377 = vmatmul.mubr.bf16.gmra.mrb[0].mxu0 %v2146
    %v2378 = vpop.f32.mrb[0].mxu0
    %v2379 = vadd.f32 0.0, %v2378
    %v2380 = vpop.f32.mrb[0].mxu0
    %v2381 = vadd.f32 0.0, %v2380
    %v2382 = vpop.f32.mrb[0].mxu0
    %v2383 = vpop.f32.mrb[0].mxu0
    %2384 = vdwg.mxu0
    %2385 = vmatprep.subr.bf16.mxu0 %v293
    %2386 = vmatpush1.bf16.msra.mxu0 %v292
    %2387 = vmatprep.subr.bf16.mxu0 %v297
    %2388 = vmatpush1.bf16.msra.mxu0 %v296
    %2389 = vmatprep.subr.bf16.mxu0 %v301
    %2390 = vmatpush1.bf16.msra.mxu0 %v300
    %2391 = vmatprep.subr.bf16.mxu0 %v305
    %2392 = vmatpush1.bf16.msra.mxu0 %v304
    %2393 = vmatprep.subr.bf16.mxu0 %v309
    %2394 = vmatpush1.bf16.msra.mxu0 %v308
    %2395 = vmatprep.subr.bf16.mxu0 %v313
    %2396 = vmatpush1.bf16.msra.mxu0 %v312
    %2397 = vmatprep.subr.bf16.mxu0 %v317
    %2398 = vmatpush1.bf16.msra.mxu0 %v316
    %2399 = vmatprep.subr.bf16.mxu0 %v321
    %2400 = vmatpush1.bf16.msra.mxu0 %v320
    %2401 = vmatprep.subr.bf16.mxu0 0
    %2402 = vmatpush1.bf16.msra.mxu0 0
    %2403 = vmatprep.subr.bf16.mxu0 0
    %2404 = vmatpush1.bf16.msra.mxu0 0
    %2405 = vmatprep.subr.bf16.mxu0 0
    %2406 = vmatpush1.bf16.msra.mxu0 0
    %2407 = vmatprep.subr.bf16.mxu0 0
    %2408 = vmatpush1.bf16.msra.mxu0 0
    %2409 = vmatprep.subr.bf16.mxu0 0
    %2410 = vmatpush1.bf16.msra.mxu0 0
    %2411 = vmatprep.subr.bf16.mxu0 0
    %2412 = vmatpush1.bf16.msra.mxu0 0
    %2413 = vmatprep.subr.bf16.mxu0 0
    %2414 = vmatpush1.bf16.msra.mxu0 0
    %2415 = vmatprep.subr.bf16.mxu0 0
    %2416 = vmatpush1.bf16.msra.mxu0 0
    %2417 = vmatprep.mubr.bf16.mxu0 0
    %2418 = vmatmul.mubr.bf16.gmra.mrb[0].mxu0 %v2146
    %v2419 = vpop.f32.mrb[0].mxu0
    %v2420 = vadd.f32 0.0, %v2419
    %v2421 = vpop.f32.mrb[0].mxu0
    %v2422 = vadd.f32 0.0, %v2421
    %v2423 = vpop.f32.mrb[0].mxu0
    %v2424 = vpop.f32.mrb[0].mxu0
    %2425 = vdwg.mxu0
    %v2430 = vcombine.low %v2379, %v2381
    %v2431 = vcombine.low %v2420, %v2422
    %v2433 = vunpack.c.l.s4 1983009808
    %v2434 = vunpack.c.0.s8 %v2433
    %v2435 = vlaneseq
    %v2436 = vshrl.u32 %v2435, 7
    %v2437 = vsub.s32 %v2434, %v2436
    %v2438 = vrot.slane %v2430, %v2437
    %v2440 = vunpack.c.l.s4 1983009808
    %v2441 = vunpack.c.0.s8 %v2440
    %v2442 = vlaneseq
    %v2443 = vshrl.u32 %v2442, 7
    %v2444 = vsub.s32 %v2441, %v2443
    %v2445 = vrot.slane %v2431, %v2444
    %v2446 = vcombine.low %v2438, %v2445
    %v2448 = vadd.f32 %v2343, %v2446
    %v2449 = vxor.u32 %v2448, 2147483648
    %v2450 = vmul.f32 %v2449, 1.442695
    %v2451 = vpow.pop %v2450
    %v2452 = vadd.f32 %v2451, 1.0
    %v2453 = vrcp.pop %v2452
    %v2454 = vmul.f32 1.0, %v2453
    %v2456 = vrot.slane %v2448, 2
    %v2458 = vxor.u32 %v2456, 2147483648
    %v2459 = vmul.f32 %v2458, 1.442695
    %v2460 = vpow.pop %v2459
    %v2461 = vadd.f32 %v2460, 1.0
    %v2462 = vrcp.pop %v2461
    %v2463 = vmul.f32 1.0, %v2462
    %v2464 = vrot.slane %v2448, 4
    %v2466 = vtanh.pop %v2464
    %v2467 = vrot.slane %v2448, 6
    %v2469 = vxor.u32 %v2467, 2147483648
    %v2470 = vmul.f32 %v2469, 1.442695
    %v2471 = vpow.pop %v2470
    %v2472 = vadd.f32 %v2471, 1.0
    %v2473 = vrcp.pop %v2472
    %v2474 = vmul.f32 1.0, %v2473
    %v2475 = vmul.f32 %v2463, %v2143
    %v2476 = vmul.f32 %v2454, %v2466
    %v2477 = vadd.f32 %v2475, %v2476
    %v2478 = vtanh.pop %v2477
    %v2479 = vmul.f32 %v2474, %v2478
    %v2480 = vpack.c.bf16 %v2479, %v2479
    %2481 = vmatprep.subr.bf16.mxu0 %v589
    %2482 = vmatpush1.bf16.msra.mxu0 %v588
    %2483 = vmatprep.subr.bf16.mxu0 %v593
    %2484 = vmatpush1.bf16.msra.mxu0 %v592
    %2485 = vmatprep.subr.bf16.mxu0 %v597
    %2486 = vmatpush1.bf16.msra.mxu0 %v596
    %2487 = vmatprep.subr.bf16.mxu0 %v601
    %2488 = vmatpush1.bf16.msra.mxu0 %v600
    %2489 = vmatprep.subr.bf16.mxu0 %v605
    %2490 = vmatpush1.bf16.msra.mxu0 %v604
    %2491 = vmatprep.subr.bf16.mxu0 %v609
    %2492 = vmatpush1.bf16.msra.mxu0 %v608
    %2493 = vmatprep.subr.bf16.mxu0 %v613
    %2494 = vmatpush1.bf16.msra.mxu0 %v612
    %2495 = vmatprep.subr.bf16.mxu0 %v617
    %2496 = vmatpush1.bf16.msra.mxu0 %v616
    %2497 = vmatprep.subr.bf16.mxu0 0
    %2498 = vmatpush1.bf16.msra.mxu0 0
    %2499 = vmatprep.subr.bf16.mxu0 0
    %2500 = vmatpush1.bf16.msra.mxu0 0
    %2501 = vmatprep.subr.bf16.mxu0 0
    %2502 = vmatpush1.bf16.msra.mxu0 0
    %2503 = vmatprep.subr.bf16.mxu0 0
    %2504 = vmatpush1.bf16.msra.mxu0 0
    %2505 = vmatprep.subr.bf16.mxu0 0
    %2506 = vmatpush1.bf16.msra.mxu0 0
    %2507 = vmatprep.subr.bf16.mxu0 0
    %2508 = vmatpush1.bf16.msra.mxu0 0
    %2509 = vmatprep.subr.bf16.mxu0 0
    %2510 = vmatpush1.bf16.msra.mxu0 0
    %2511 = vmatprep.subr.bf16.mxu0 0
    %2512 = vmatpush1.bf16.msra.mxu0 0
    %2513 = vmatprep.mubr.bf16.mxu0 0
    %2514 = vmatmul.mubr.bf16.gmra.mrb[0].mxu0 %v2339
    %v2515 = vpop.f32.mrb[0].mxu0
    %v2516 = vadd.f32 0.0, %v2515
    %v2517 = vpop.f32.mrb[0].mxu0
    %v2518 = vadd.f32 0.0, %v2517
    %v2519 = vpop.f32.mrb[0].mxu0
    %v2520 = vpop.f32.mrb[0].mxu0
    %2521 = vdwg.mxu0
    %2522 = vmatprep.subr.bf16.mxu0 %v591
    %2523 = vmatpush1.bf16.msra.mxu0 %v590
    %2524 = vmatprep.subr.bf16.mxu0 %v595
    %2525 = vmatpush1.bf16.msra.mxu0 %v594
    %2526 = vmatprep.subr.bf16.mxu0 %v599
    %2527 = vmatpush1.bf16.msra.mxu0 %v598
    %2528 = vmatprep.subr.bf16.mxu0 %v603
    %2529 = vmatpush1.bf16.msra.mxu0 %v602
    %2530 = vmatprep.subr.bf16.mxu0 %v607
    %2531 = vmatpush1.bf16.msra.mxu0 %v606
    %2532 = vmatprep.subr.bf16.mxu0 %v611
    %2533 = vmatpush1.bf16.msra.mxu0 %v610
    %2534 = vmatprep.subr.bf16.mxu0 %v615
    %2535 = vmatpush1.bf16.msra.mxu0 %v614
    %2536 = vmatprep.subr.bf16.mxu0 %v619
    %2537 = vmatpush1.bf16.msra.mxu0 %v618
    %2538 = vmatprep.subr.bf16.mxu0 0
    %2539 = vmatpush1.bf16.msra.mxu0 0
    %2540 = vmatprep.subr.bf16.mxu0 0
    %2541 = vmatpush1.bf16.msra.mxu0 0
    %2542 = vmatprep.subr.bf16.mxu0 0
    %2543 = vmatpush1.bf16.msra.mxu0 0
    %2544 = vmatprep.subr.bf16.mxu0 0
    %2545 = vmatpush1.bf16.msra.mxu0 0
    %2546 = vmatprep.subr.bf16.mxu0 0
    %2547 = vmatpush1.bf16.msra.mxu0 0
    %2548 = vmatprep.subr.bf16.mxu0 0
    %2549 = vmatpush1.bf16.msra.mxu0 0
    %2550 = vmatprep.subr.bf16.mxu0 0
    %2551 = vmatpush1.bf16.msra.mxu0 0
    %2552 = vmatprep.subr.bf16.mxu0 0
    %2553 = vmatpush1.bf16.msra.mxu0 0
    %2554 = vmatprep.mubr.bf16.mxu0 0
    %2555 = vmatmul.mubr.bf16.gmra.mrb[0].mxu0 %v2339
    %v2556 = vpop.f32.mrb[0].mxu0
    %v2557 = vadd.f32 0.0, %v2556
    %v2558 = vpop.f32.mrb[0].mxu0
    %v2559 = vadd.f32 0.0, %v2558
    %v2560 = vpop.f32.mrb[0].mxu0
    %v2561 = vpop.f32.mrb[0].mxu0
    %2562 = vdwg.mxu0
    %2563 = vmatprep.subr.bf16.mxu0 %v831
    %2564 = vmatpush1.bf16.msra.mxu0 %v830
    %2565 = vmatprep.subr.bf16.mxu0 %v835
    %2566 = vmatpush1.bf16.msra.mxu0 %v834
    %2567 = vmatprep.subr.bf16.mxu0 %v839
    %2568 = vmatpush1.bf16.msra.mxu0 %v838
    %2569 = vmatprep.subr.bf16.mxu0 %v843
    %2570 = vmatpush1.bf16.msra.mxu0 %v842
    %2571 = vmatprep.subr.bf16.mxu0 %v847
    %2572 = vmatpush1.bf16.msra.mxu0 %v846
    %2573 = vmatprep.subr.bf16.mxu0 %v851
    %2574 = vmatpush1.bf16.msra.mxu0 %v850
    %2575 = vmatprep.subr.bf16.mxu0 %v855
    %2576 = vmatpush1.bf16.msra.mxu0 %v854
    %2577 = vmatprep.subr.bf16.mxu0 %v859
    %2578 = vmatpush1.bf16.msra.mxu0 %v858
    %2579 = vmatprep.subr.bf16.mxu0 0
    %2580 = vmatpush1.bf16.msra.mxu0 0
    %2581 = vmatprep.subr.bf16.mxu0 0
    %2582 = vmatpush1.bf16.msra.mxu0 0
    %2583 = vmatprep.subr.bf16.mxu0 0
    %2584 = vmatpush1.bf16.msra.mxu0 0
    %2585 = vmatprep.subr.bf16.mxu0 0
    %2586 = vmatpush1.bf16.msra.mxu0 0
    %2587 = vmatprep.subr.bf16.mxu0 0
    %2588 = vmatpush1.bf16.msra.mxu0 0
    %2589 = vmatprep.subr.bf16.mxu0 0
    %2590 = vmatpush1.bf16.msra.mxu0 0
    %2591 = vmatprep.subr.bf16.mxu0 0
    %2592 = vmatpush1.bf16.msra.mxu0 0
    %2593 = vmatprep.subr.bf16.mxu0 0
    %2594 = vmatpush1.bf16.msra.mxu0 0
    %2595 = vmatprep.mubr.bf16.mxu0 0
    %2596 = vmatmul.mubr.bf16.gmra.mrb[0].mxu0 %v2480
    %v2597 = vpop.f32.mrb[0].mxu0
    %v2598 = vadd.f32 %v2516, %v2597
    %v2599 = vpop.f32.mrb[0].mxu0
    %v2600 = vadd.f32 %v2518, %v2599
    %v2601 = vpop.f32.mrb[0].mxu0
    %v2602 = vpop.f32.mrb[0].mxu0
    %2603 = vdwg.mxu0
    %2604 = vmatprep.subr.bf16.mxu0 %v833
    %2605 = vmatpush1.bf16.msra.mxu0 %v832
    %2606 = vmatprep.subr.bf16.mxu0 %v837
    %2607 = vmatpush1.bf16.msra.mxu0 %v836
    %2608 = vmatprep.subr.bf16.mxu0 %v841
    %2609 = vmatpush1.bf16.msra.mxu0 %v840
    %2610 = vmatprep.subr.bf16.mxu0 %v845
    %2611 = vmatpush1.bf16.msra.mxu0 %v844
    %2612 = vmatprep.subr.bf16.mxu0 %v849
    %2613 = vmatpush1.bf16.msra.mxu0 %v848
    %2614 = vmatprep.subr.bf16.mxu0 %v853
    %2615 = vmatpush1.bf16.msra.mxu0 %v852
    %2616 = vmatprep.subr.bf16.mxu0 %v857
    %2617 = vmatpush1.bf16.msra.mxu0 %v856
    %2618 = vmatprep.subr.bf16.mxu0 %v861
    %2619 = vmatpush1.bf16.msra.mxu0 %v860
    %2620 = vmatprep.subr.bf16.mxu0 0
    %2621 = vmatpush1.bf16.msra.mxu0 0
    %2622 = vmatprep.subr.bf16.mxu0 0
    %2623 = vmatpush1.bf16.msra.mxu0 0
    %2624 = vmatprep.subr.bf16.mxu0 0
    %2625 = vmatpush1.bf16.msra.mxu0 0
    %2626 = vmatprep.subr.bf16.mxu0 0
    %2627 = vmatpush1.bf16.msra.mxu0 0
    %2628 = vmatprep.subr.bf16.mxu0 0
    %2629 = vmatpush1.bf16.msra.mxu0 0
    %2630 = vmatprep.subr.bf16.mxu0 0
    %2631 = vmatpush1.bf16.msra.mxu0 0
    %2632 = vmatprep.subr.bf16.mxu0 0
    %2633 = vmatpush1.bf16.msra.mxu0 0
    %2634 = vmatprep.subr.bf16.mxu0 0
    %2635 = vmatpush1.bf16.msra.mxu0 0
    %2636 = vmatprep.mubr.bf16.mxu0 0
    %2637 = vmatmul.mubr.bf16.gmra.mrb[0].mxu0 %v2480
    %v2638 = vpop.f32.mrb[0].mxu0
    %v2639 = vadd.f32 %v2557, %v2638
    %v2640 = vpop.f32.mrb[0].mxu0
    %v2641 = vadd.f32 %v2559, %v2640
    %v2642 = vpop.f32.mrb[0].mxu0
    %v2643 = vpop.f32.mrb[0].mxu0
    %2644 = vdwg.mxu0
    %v2645 = vadd.f32 %v2598, %v171
    %v2646 = vadd.f32 %v2600, %v175
    %v2647 = vadd.f32 %v2639, %v179
    %v2648 = vadd.f32 %v2641, %v183
    %v2649 = vxor.u32 %v2645, 2147483648
    %v2650 = vmul.f32 %v2649, 1.442695
    %v2651 = vpow.pop %v2650
    %v2652 = vadd.f32 %v2651, 1.0
    %v2653 = vrcp.pop %v2652
    %v2654 = vmul.f32 1.0, %v2653
    %v2655 = vxor.u32 %v2646, 2147483648
    %v2656 = vmul.f32 %v2655, 1.442695
    %v2657 = vpow.pop %v2656
    %v2658 = vadd.f32 %v2657, 1.0
    %v2659 = vrcp.pop %v2658
    %v2660 = vmul.f32 1.0, %v2659
    %v2661 = vtanh.pop %v2647
    %v2662 = vxor.u32 %v2648, 2147483648
    %v2663 = vmul.f32 %v2662, 1.442695
    %v2664 = vpow.pop %v2663
    %v2665 = vadd.f32 %v2664, 1.0
    %v2666 = vrcp.pop %v2665
    %v2667 = vmul.f32 1.0, %v2666
    %v2668 = vmul.f32 %v2660, %v2336
    %v2669 = vmul.f32 %v2654, %v2661
    %v2670 = vadd.f32 %v2668, %v2669
    %v2671 = vtanh.pop %v2670
    %v2672 = vmul.f32 %v2667, %v2671
    %v2673 = vpack.c.bf16 %v2672, %v2672
    %s2674 = scalar_lea.vmem %s5, 5
    %2675 = vst [vmem:[%s2674] sm:$0x1] %v2673
    %s2676 = scalar_lea.vmem %s0, 48
    %v2677 = vld [vmem:[%s2676] sm:$0xff]
    %2678 = vmatprep.subr.bf16.mxu0 %v291
    %2679 = vmatpush1.bf16.msra.mxu0 %v290
    %2680 = vmatprep.subr.bf16.mxu0 %v295
    %2681 = vmatpush1.bf16.msra.mxu0 %v294
    %2682 = vmatprep.subr.bf16.mxu0 %v299
    %2683 = vmatpush1.bf16.msra.mxu0 %v298
    %2684 = vmatprep.subr.bf16.mxu0 %v303
    %2685 = vmatpush1.bf16.msra.mxu0 %v302
    %2686 = vmatprep.subr.bf16.mxu0 %v307
    %2687 = vmatpush1.bf16.msra.mxu0 %v306
    %2688 = vmatprep.subr.bf16.mxu0 %v311
    %2689 = vmatpush1.bf16.msra.mxu0 %v310
    %2690 = vmatprep.subr.bf16.mxu0 %v315
    %2691 = vmatpush1.bf16.msra.mxu0 %v314
    %2692 = vmatprep.subr.bf16.mxu0 %v319
    %2693 = vmatpush1.bf16.msra.mxu0 %v318
    %2694 = vmatprep.subr.bf16.mxu0 0
    %2695 = vmatpush1.bf16.msra.mxu0 0
    %2696 = vmatprep.subr.bf16.mxu0 0
    %2697 = vmatpush1.bf16.msra.mxu0 0
    %2698 = vmatprep.subr.bf16.mxu0 0
    %2699 = vmatpush1.bf16.msra.mxu0 0
    %2700 = vmatprep.subr.bf16.mxu0 0
    %2701 = vmatpush1.bf16.msra.mxu0 0
    %2702 = vmatprep.subr.bf16.mxu0 0
    %2703 = vmatpush1.bf16.msra.mxu0 0
    %2704 = vmatprep.subr.bf16.mxu0 0
    %2705 = vmatpush1.bf16.msra.mxu0 0
    %2706 = vmatprep.subr.bf16.mxu0 0
    %2707 = vmatpush1.bf16.msra.mxu0 0
    %2708 = vmatprep.subr.bf16.mxu0 0
    %2709 = vmatpush1.bf16.msra.mxu0 0
    %2710 = vmatprep.mubr.bf16.mxu0 0
    %2711 = vmatmul.mubr.bf16.gmra.mrb[0].mxu0 %v2480
    %v2712 = vpop.f32.mrb[0].mxu0
    %v2713 = vadd.f32 0.0, %v2712
    %v2714 = vpop.f32.mrb[0].mxu0
    %v2715 = vadd.f32 0.0, %v2714
    %v2716 = vpop.f32.mrb[0].mxu0
    %v2717 = vpop.f32.mrb[0].mxu0
    %2718 = vdwg.mxu0
    %2719 = vmatprep.subr.bf16.mxu0 %v293
    %2720 = vmatpush1.bf16.msra.mxu0 %v292
    %2721 = vmatprep.subr.bf16.mxu0 %v297
    %2722 = vmatpush1.bf16.msra.mxu0 %v296
    %2723 = vmatprep.subr.bf16.mxu0 %v301
    %2724 = vmatpush1.bf16.msra.mxu0 %v300
    %2725 = vmatprep.subr.bf16.mxu0 %v305
    %2726 = vmatpush1.bf16.msra.mxu0 %v304
    %2727 = vmatprep.subr.bf16.mxu0 %v309
    %2728 = vmatpush1.bf16.msra.mxu0 %v308
    %2729 = vmatprep.subr.bf16.mxu0 %v313
    %2730 = vmatpush1.bf16.msra.mxu0 %v312
    %2731 = vmatprep.subr.bf16.mxu0 %v317
    %2732 = vmatpush1.bf16.msra.mxu0 %v316
    %2733 = vmatprep.subr.bf16.mxu0 %v321
    %2734 = vmatpush1.bf16.msra.mxu0 %v320
    %2735 = vmatprep.subr.bf16.mxu0 0
    %2736 = vmatpush1.bf16.msra.mxu0 0
    %2737 = vmatprep.subr.bf16.mxu0 0
    %2738 = vmatpush1.bf16.msra.mxu0 0
    %2739 = vmatprep.subr.bf16.mxu0 0
    %2740 = vmatpush1.bf16.msra.mxu0 0
    %2741 = vmatprep.subr.bf16.mxu0 0
    %2742 = vmatpush1.bf16.msra.mxu0 0
    %2743 = vmatprep.subr.bf16.mxu0 0
    %2744 = vmatpush1.bf16.msra.mxu0 0
    %2745 = vmatprep.subr.bf16.mxu0 0
    %2746 = vmatpush1.bf16.msra.mxu0 0
    %2747 = vmatprep.subr.bf16.mxu0 0
    %2748 = vmatpush1.bf16.msra.mxu0 0
    %2749 = vmatprep.subr.bf16.mxu0 0
    %2750 = vmatpush1.bf16.msra.mxu0 0
    %2751 = vmatprep.mubr.bf16.mxu0 0
    %2752 = vmatmul.mubr.bf16.gmra.mrb[0].mxu0 %v2480
    %v2753 = vpop.f32.mrb[0].mxu0
    %v2754 = vadd.f32 0.0, %v2753
    %v2755 = vpop.f32.mrb[0].mxu0
    %v2756 = vadd.f32 0.0, %v2755
    %v2757 = vpop.f32.mrb[0].mxu0
    %v2758 = vpop.f32.mrb[0].mxu0
    %2759 = vdwg.mxu0
    %v2764 = vcombine.low %v2713, %v2715
    %v2765 = vcombine.low %v2754, %v2756
    %v2767 = vunpack.c.l.s4 1983009808
    %v2768 = vunpack.c.0.s8 %v2767
    %v2769 = vlaneseq
    %v2770 = vshrl.u32 %v2769, 7
    %v2771 = vsub.s32 %v2768, %v2770
    %v2772 = vrot.slane %v2764, %v2771
    %v2774 = vunpack.c.l.s4 1983009808
    %v2775 = vunpack.c.0.s8 %v2774
    %v2776 = vlaneseq
    %v2777 = vshrl.u32 %v2776, 7
    %v2778 = vsub.s32 %v2775, %v2777
    %v2779 = vrot.slane %v2765, %v2778
    %v2780 = vcombine.low %v2772, %v2779
    %v2782 = vadd.f32 %v2677, %v2780
    %v2783 = vxor.u32 %v2782, 2147483648
    %v2784 = vmul.f32 %v2783, 1.442695
    %v2785 = vpow.pop %v2784
    %v2786 = vadd.f32 %v2785, 1.0
    %v2787 = vrcp.pop %v2786
    %v2788 = vmul.f32 1.0, %v2787
    %v2790 = vrot.slane %v2782, 2
    %v2792 = vxor.u32 %v2790, 2147483648
    %v2793 = vmul.f32 %v2792, 1.442695
    %v2794 = vpow.pop %v2793
    %v2795 = vadd.f32 %v2794, 1.0
    %v2796 = vrcp.pop %v2795
    %v2797 = vmul.f32 1.0, %v2796
    %v2798 = vrot.slane %v2782, 4
    %v2800 = vtanh.pop %v2798
    %v2801 = vrot.slane %v2782, 6
    %v2803 = vxor.u32 %v2801, 2147483648
    %v2804 = vmul.f32 %v2803, 1.442695
    %v2805 = vpow.pop %v2804
    %v2806 = vadd.f32 %v2805, 1.0
    %v2807 = vrcp.pop %v2806
    %v2808 = vmul.f32 1.0, %v2807
    %v2809 = vmul.f32 %v2797, %v2477
    %v2810 = vmul.f32 %v2788, %v2800
    %v2811 = vadd.f32 %v2809, %v2810
    %v2812 = vtanh.pop %v2811
    %v2813 = vmul.f32 %v2808, %v2812
    %v2814 = vpack.c.bf16 %v2813, %v2813
    %2815 = vmatprep.subr.bf16.mxu0 %v589
    %2816 = vmatpush1.bf16.msra.mxu0 %v588
    %2817 = vmatprep.subr.bf16.mxu0 %v593
    %2818 = vmatpush1.bf16.msra.mxu0 %v592
    %2819 = vmatprep.subr.bf16.mxu0 %v597
    %2820 = vmatpush1.bf16.msra.mxu0 %v596
    %2821 = vmatprep.subr.bf16.mxu0 %v601
    %2822 = vmatpush1.bf16.msra.mxu0 %v600
    %2823 = vmatprep.subr.bf16.mxu0 %v605
    %2824 = vmatpush1.bf16.msra.mxu0 %v604
    %2825 = vmatprep.subr.bf16.mxu0 %v609
    %2826 = vmatpush1.bf16.msra.mxu0 %v608
    %2827 = vmatprep.subr.bf16.mxu0 %v613
    %2828 = vmatpush1.bf16.msra.mxu0 %v612
    %2829 = vmatprep.subr.bf16.mxu0 %v617
    %2830 = vmatpush1.bf16.msra.mxu0 %v616
    %2831 = vmatprep.subr.bf16.mxu0 0
    %2832 = vmatpush1.bf16.msra.mxu0 0
    %2833 = vmatprep.subr.bf16.mxu0 0
    %2834 = vmatpush1.bf16.msra.mxu0 0
    %2835 = vmatprep.subr.bf16.mxu0 0
    %2836 = vmatpush1.bf16.msra.mxu0 0
    %2837 = vmatprep.subr.bf16.mxu0 0
    %2838 = vmatpush1.bf16.msra.mxu0 0
    %2839 = vmatprep.subr.bf16.mxu0 0
    %2840 = vmatpush1.bf16.msra.mxu0 0
    %2841 = vmatprep.subr.bf16.mxu0 0
    %2842 = vmatpush1.bf16.msra.mxu0 0
    %2843 = vmatprep.subr.bf16.mxu0 0
    %2844 = vmatpush1.bf16.msra.mxu0 0
    %2845 = vmatprep.subr.bf16.mxu0 0
    %2846 = vmatpush1.bf16.msra.mxu0 0
    %2847 = vmatprep.mubr.bf16.mxu0 0
    %2848 = vmatmul.mubr.bf16.gmra.mrb[0].mxu0 %v2673
    %v2849 = vpop.f32.mrb[0].mxu0
    %v2850 = vadd.f32 0.0, %v2849
    %v2851 = vpop.f32.mrb[0].mxu0
    %v2852 = vadd.f32 0.0, %v2851
    %v2853 = vpop.f32.mrb[0].mxu0
    %v2854 = vpop.f32.mrb[0].mxu0
    %2855 = vdwg.mxu0
    %2856 = vmatprep.subr.bf16.mxu0 %v591
    %2857 = vmatpush1.bf16.msra.mxu0 %v590
    %2858 = vmatprep.subr.bf16.mxu0 %v595
    %2859 = vmatpush1.bf16.msra.mxu0 %v594
    %2860 = vmatprep.subr.bf16.mxu0 %v599
    %2861 = vmatpush1.bf16.msra.mxu0 %v598
    %2862 = vmatprep.subr.bf16.mxu0 %v603
    %2863 = vmatpush1.bf16.msra.mxu0 %v602
    %2864 = vmatprep.subr.bf16.mxu0 %v607
    %2865 = vmatpush1.bf16.msra.mxu0 %v606
    %2866 = vmatprep.subr.bf16.mxu0 %v611
    %2867 = vmatpush1.bf16.msra.mxu0 %v610
    %2868 = vmatprep.subr.bf16.mxu0 %v615
    %2869 = vmatpush1.bf16.msra.mxu0 %v614
    %2870 = vmatprep.subr.bf16.mxu0 %v619
    %2871 = vmatpush1.bf16.msra.mxu0 %v618
    %2872 = vmatprep.subr.bf16.mxu0 0
    %2873 = vmatpush1.bf16.msra.mxu0 0
    %2874 = vmatprep.subr.bf16.mxu0 0
    %2875 = vmatpush1.bf16.msra.mxu0 0
    %2876 = vmatprep.subr.bf16.mxu0 0
    %2877 = vmatpush1.bf16.msra.mxu0 0
    %2878 = vmatprep.subr.bf16.mxu0 0
    %2879 = vmatpush1.bf16.msra.mxu0 0
    %2880 = vmatprep.subr.bf16.mxu0 0
    %2881 = vmatpush1.bf16.msra.mxu0 0
    %2882 = vmatprep.subr.bf16.mxu0 0
    %2883 = vmatpush1.bf16.msra.mxu0 0
    %2884 = vmatprep.subr.bf16.mxu0 0
    %2885 = vmatpush1.bf16.msra.mxu0 0
    %2886 = vmatprep.subr.bf16.mxu0 0
    %2887 = vmatpush1.bf16.msra.mxu0 0
    %2888 = vmatprep.mubr.bf16.mxu0 0
    %2889 = vmatmul.mubr.bf16.gmra.mrb[0].mxu0 %v2673
    %v2890 = vpop.f32.mrb[0].mxu0
    %v2891 = vadd.f32 0.0, %v2890
    %v2892 = vpop.f32.mrb[0].mxu0
    %v2893 = vadd.f32 0.0, %v2892
    %v2894 = vpop.f32.mrb[0].mxu0
    %v2895 = vpop.f32.mrb[0].mxu0
    %2896 = vdwg.mxu0
    %2897 = vmatprep.subr.bf16.mxu0 %v831
    %2898 = vmatpush1.bf16.msra.mxu0 %v830
    %2899 = vmatprep.subr.bf16.mxu0 %v835
    %2900 = vmatpush1.bf16.msra.mxu0 %v834
    %2901 = vmatprep.subr.bf16.mxu0 %v839
    %2902 = vmatpush1.bf16.msra.mxu0 %v838
    %2903 = vmatprep.subr.bf16.mxu0 %v843
    %2904 = vmatpush1.bf16.msra.mxu0 %v842
    %2905 = vmatprep.subr.bf16.mxu0 %v847
    %2906 = vmatpush1.bf16.msra.mxu0 %v846
    %2907 = vmatprep.subr.bf16.mxu0 %v851
    %2908 = vmatpush1.bf16.msra.mxu0 %v850
    %2909 = vmatprep.subr.bf16.mxu0 %v855
    %2910 = vmatpush1.bf16.msra.mxu0 %v854
    %2911 = vmatprep.subr.bf16.mxu0 %v859
    %2912 = vmatpush1.bf16.msra.mxu0 %v858
    %2913 = vmatprep.subr.bf16.mxu0 0
    %2914 = vmatpush1.bf16.msra.mxu0 0
    %2915 = vmatprep.subr.bf16.mxu0 0
    %2916 = vmatpush1.bf16.msra.mxu0 0
    %2917 = vmatprep.subr.bf16.mxu0 0
    %2918 = vmatpush1.bf16.msra.mxu0 0
    %2919 = vmatprep.subr.bf16.mxu0 0
    %2920 = vmatpush1.bf16.msra.mxu0 0
    %2921 = vmatprep.subr.bf16.mxu0 0
    %2922 = vmatpush1.bf16.msra.mxu0 0
    %2923 = vmatprep.subr.bf16.mxu0 0
    %2924 = vmatpush1.bf16.msra.mxu0 0
    %2925 = vmatprep.subr.bf16.mxu0 0
    %2926 = vmatpush1.bf16.msra.mxu0 0
    %2927 = vmatprep.subr.bf16.mxu0 0
    %2928 = vmatpush1.bf16.msra.mxu0 0
    %2929 = vmatprep.mubr.bf16.mxu0 0
    %2930 = vmatmul.mubr.bf16.gmra.mrb[0].mxu0 %v2814
    %v2931 = vpop.f32.mrb[0].mxu0
    %v2932 = vadd.f32 %v2850, %v2931
    %v2933 = vpop.f32.mrb[0].mxu0
    %v2934 = vadd.f32 %v2852, %v2933
    %v2935 = vpop.f32.mrb[0].mxu0
    %v2936 = vpop.f32.mrb[0].mxu0
    %2937 = vdwg.mxu0
    %2938 = vmatprep.subr.bf16.mxu0 %v833
    %2939 = vmatpush1.bf16.msra.mxu0 %v832
    %2940 = vmatprep.subr.bf16.mxu0 %v837
    %2941 = vmatpush1.bf16.msra.mxu0 %v836
    %2942 = vmatprep.subr.bf16.mxu0 %v841
    %2943 = vmatpush1.bf16.msra.mxu0 %v840
    %2944 = vmatprep.subr.bf16.mxu0 %v845
    %2945 = vmatpush1.bf16.msra.mxu0 %v844
    %2946 = vmatprep.subr.bf16.mxu0 %v849
    %2947 = vmatpush1.bf16.msra.mxu0 %v848
    %2948 = vmatprep.subr.bf16.mxu0 %v853
    %2949 = vmatpush1.bf16.msra.mxu0 %v852
    %2950 = vmatprep.subr.bf16.mxu0 %v857
    %2951 = vmatpush1.bf16.msra.mxu0 %v856
    %2952 = vmatprep.subr.bf16.mxu0 %v861
    %2953 = vmatpush1.bf16.msra.mxu0 %v860
    %2954 = vmatprep.subr.bf16.mxu0 0
    %2955 = vmatpush1.bf16.msra.mxu0 0
    %2956 = vmatprep.subr.bf16.mxu0 0
    %2957 = vmatpush1.bf16.msra.mxu0 0
    %2958 = vmatprep.subr.bf16.mxu0 0
    %2959 = vmatpush1.bf16.msra.mxu0 0
    %2960 = vmatprep.subr.bf16.mxu0 0
    %2961 = vmatpush1.bf16.msra.mxu0 0
    %2962 = vmatprep.subr.bf16.mxu0 0
    %2963 = vmatpush1.bf16.msra.mxu0 0
    %2964 = vmatprep.subr.bf16.mxu0 0
    %2965 = vmatpush1.bf16.msra.mxu0 0
    %2966 = vmatprep.subr.bf16.mxu0 0
    %2967 = vmatpush1.bf16.msra.mxu0 0
    %2968 = vmatprep.subr.bf16.mxu0 0
    %2969 = vmatpush1.bf16.msra.mxu0 0
    %2970 = vmatprep.mubr.bf16.mxu0 0
    %2971 = vmatmul.mubr.bf16.gmra.mrb[0].mxu0 %v2814
    %v2972 = vpop.f32.mrb[0].mxu0
    %v2973 = vadd.f32 %v2891, %v2972
    %v2974 = vpop.f32.mrb[0].mxu0
    %v2975 = vadd.f32 %v2893, %v2974
    %v2976 = vpop.f32.mrb[0].mxu0
    %v2977 = vpop.f32.mrb[0].mxu0
    %2978 = vdwg.mxu0
    %v2979 = vadd.f32 %v2932, %v171
    %v2980 = vadd.f32 %v2934, %v175
    %v2981 = vadd.f32 %v2973, %v179
    %v2982 = vadd.f32 %v2975, %v183
    %v2983 = vxor.u32 %v2979, 2147483648
    %v2984 = vmul.f32 %v2983, 1.442695
    %v2985 = vpow.pop %v2984
    %v2986 = vadd.f32 %v2985, 1.0
    %v2987 = vrcp.pop %v2986
    %v2988 = vmul.f32 1.0, %v2987
    %v2989 = vxor.u32 %v2980, 2147483648
    %v2990 = vmul.f32 %v2989, 1.442695
    %v2991 = vpow.pop %v2990
    %v2992 = vadd.f32 %v2991, 1.0
    %v2993 = vrcp.pop %v2992
    %v2994 = vmul.f32 1.0, %v2993
    %v2995 = vtanh.pop %v2981
    %v2996 = vxor.u32 %v2982, 2147483648
    %v2997 = vmul.f32 %v2996, 1.442695
    %v2998 = vpow.pop %v2997
    %v2999 = vadd.f32 %v2998, 1.0
    %v3000 = vrcp.pop %v2999
    %v3001 = vmul.f32 1.0, %v3000
    %v3002 = vmul.f32 %v2994, %v2670
    %v3003 = vmul.f32 %v2988, %v2995
    %v3004 = vadd.f32 %v3002, %v3003
    %v3005 = vtanh.pop %v3004
    %v3006 = vmul.f32 %v3001, %v3005
    %v3007 = vpack.c.bf16 %v3006, %v3006
    %s3008 = scalar_lea.vmem %s5, 6
    %3009 = vst [vmem:[%s3008] sm:$0x1] %v3007
    %s3010 = scalar_lea.vmem %s0, 56
    %v3011 = vld [vmem:[%s3010] sm:$0xff]
    %3012 = vmatprep.subr.bf16.mxu0 %v291
    %3013 = vmatpush1.bf16.msra.mxu0 %v290
    %3014 = vmatprep.subr.bf16.mxu0 %v295
    %3015 = vmatpush1.bf16.msra.mxu0 %v294
    %3016 = vmatprep.subr.bf16.mxu0 %v299
    %3017 = vmatpush1.bf16.msra.mxu0 %v298
    %3018 = vmatprep.subr.bf16.mxu0 %v303
    %3019 = vmatpush1.bf16.msra.mxu0 %v302
    %3020 = vmatprep.subr.bf16.mxu0 %v307
    %3021 = vmatpush1.bf16.msra.mxu0 %v306
    %3022 = vmatprep.subr.bf16.mxu0 %v311
    %3023 = vmatpush1.bf16.msra.mxu0 %v310
    %3024 = vmatprep.subr.bf16.mxu0 %v315
    %3025 = vmatpush1.bf16.msra.mxu0 %v314
    %3026 = vmatprep.subr.bf16.mxu0 %v319
    %3027 = vmatpush1.bf16.msra.mxu0 %v318
    %3028 = vmatprep.subr.bf16.mxu0 0
    %3029 = vmatpush1.bf16.msra.mxu0 0
    %3030 = vmatprep.subr.bf16.mxu0 0
    %3031 = vmatpush1.bf16.msra.mxu0 0
    %3032 = vmatprep.subr.bf16.mxu0 0
    %3033 = vmatpush1.bf16.msra.mxu0 0
    %3034 = vmatprep.subr.bf16.mxu0 0
    %3035 = vmatpush1.bf16.msra.mxu0 0
    %3036 = vmatprep.subr.bf16.mxu0 0
    %3037 = vmatpush1.bf16.msra.mxu0 0
    %3038 = vmatprep.subr.bf16.mxu0 0
    %3039 = vmatpush1.bf16.msra.mxu0 0
    %3040 = vmatprep.subr.bf16.mxu0 0
    %3041 = vmatpush1.bf16.msra.mxu0 0
    %3042 = vmatprep.subr.bf16.mxu0 0
    %3043 = vmatpush1.bf16.msra.mxu0 0
    %3044 = vmatprep.mubr.bf16.mxu0 0
    %3045 = vmatmul.mubr.bf16.gmra.mrb[0].mxu0 %v2814
    %v3046 = vpop.f32.mrb[0].mxu0
    %v3047 = vadd.f32 0.0, %v3046
    %v3048 = vpop.f32.mrb[0].mxu0
    %v3049 = vadd.f32 0.0, %v3048
    %v3050 = vpop.f32.mrb[0].mxu0
    %v3051 = vpop.f32.mrb[0].mxu0
    %3052 = vdwg.mxu0
    %3053 = vmatprep.subr.bf16.mxu0 %v293
    %3054 = vmatpush1.bf16.msra.mxu0 %v292
    %3055 = vmatprep.subr.bf16.mxu0 %v297
    %3056 = vmatpush1.bf16.msra.mxu0 %v296
    %3057 = vmatprep.subr.bf16.mxu0 %v301
    %3058 = vmatpush1.bf16.msra.mxu0 %v300
    %3059 = vmatprep.subr.bf16.mxu0 %v305
    %3060 = vmatpush1.bf16.msra.mxu0 %v304
    %3061 = vmatprep.subr.bf16.mxu0 %v309
    %3062 = vmatpush1.bf16.msra.mxu0 %v308
    %3063 = vmatprep.subr.bf16.mxu0 %v313
    %3064 = vmatpush1.bf16.msra.mxu0 %v312
    %3065 = vmatprep.subr.bf16.mxu0 %v317
    %3066 = vmatpush1.bf16.msra.mxu0 %v316
    %3067 = vmatprep.subr.bf16.mxu0 %v321
    %3068 = vmatpush1.bf16.msra.mxu0 %v320
    %3069 = vmatprep.subr.bf16.mxu0 0
    %3070 = vmatpush1.bf16.msra.mxu0 0
    %3071 = vmatprep.subr.bf16.mxu0 0
    %3072 = vmatpush1.bf16.msra.mxu0 0
    %3073 = vmatprep.subr.bf16.mxu0 0
    %3074 = vmatpush1.bf16.msra.mxu0 0
    %3075 = vmatprep.subr.bf16.mxu0 0
    %3076 = vmatpush1.bf16.msra.mxu0 0
    %3077 = vmatprep.subr.bf16.mxu0 0
    %3078 = vmatpush1.bf16.msra.mxu0 0
    %3079 = vmatprep.subr.bf16.mxu0 0
    %3080 = vmatpush1.bf16.msra.mxu0 0
    %3081 = vmatprep.subr.bf16.mxu0 0
    %3082 = vmatpush1.bf16.msra.mxu0 0
    %3083 = vmatprep.subr.bf16.mxu0 0
    %3084 = vmatpush1.bf16.msra.mxu0 0
    %3085 = vmatprep.mubr.bf16.mxu0 0
    %3086 = vmatmul.mubr.bf16.gmra.mrb[0].mxu0 %v2814
    %v3087 = vpop.f32.mrb[0].mxu0
    %v3088 = vadd.f32 0.0, %v3087
    %v3089 = vpop.f32.mrb[0].mxu0
    %v3090 = vadd.f32 0.0, %v3089
    %v3091 = vpop.f32.mrb[0].mxu0
    %v3092 = vpop.f32.mrb[0].mxu0
    %3093 = vdwg.mxu0
    %v3098 = vcombine.low %v3047, %v3049
    %v3099 = vcombine.low %v3088, %v3090
    %v3101 = vunpack.c.l.s4 1983009808
    %v3102 = vunpack.c.0.s8 %v3101
    %v3103 = vlaneseq
    %v3104 = vshrl.u32 %v3103, 7
    %v3105 = vsub.s32 %v3102, %v3104
    %v3106 = vrot.slane %v3098, %v3105
    %v3108 = vunpack.c.l.s4 1983009808
    %v3109 = vunpack.c.0.s8 %v3108
    %v3110 = vlaneseq
    %v3111 = vshrl.u32 %v3110, 7
    %v3112 = vsub.s32 %v3109, %v3111
    %v3113 = vrot.slane %v3099, %v3112
    %v3114 = vcombine.low %v3106, %v3113
    %v3116 = vadd.f32 %v3011, %v3114
    %v3117 = vxor.u32 %v3116, 2147483648
    %v3118 = vmul.f32 %v3117, 1.442695
    %v3119 = vpow.pop %v3118
    %v3120 = vadd.f32 %v3119, 1.0
    %v3121 = vrcp.pop %v3120
    %v3122 = vmul.f32 1.0, %v3121
    %v3124 = vrot.slane %v3116, 2
    %v3126 = vxor.u32 %v3124, 2147483648
    %v3127 = vmul.f32 %v3126, 1.442695
    %v3128 = vpow.pop %v3127
    %v3129 = vadd.f32 %v3128, 1.0
    %v3130 = vrcp.pop %v3129
    %v3131 = vmul.f32 1.0, %v3130
    %v3132 = vrot.slane %v3116, 4
    %v3134 = vtanh.pop %v3132
    %v3135 = vrot.slane %v3116, 6
    %v3137 = vxor.u32 %v3135, 2147483648
    %v3138 = vmul.f32 %v3137, 1.442695
    %v3139 = vpow.pop %v3138
    %v3140 = vadd.f32 %v3139, 1.0
    %v3141 = vrcp.pop %v3140
    %v3142 = vmul.f32 1.0, %v3141
    %v3143 = vmul.f32 %v3131, %v2811
    %v3144 = vmul.f32 %v3122, %v3134
    %v3145 = vadd.f32 %v3143, %v3144
    %v3146 = vtanh.pop %v3145
    %v3147 = vmul.f32 %v3142, %v3146
    %v3148 = vpack.c.bf16 %v3147, %v3147
    %3149 = vmatprep.subr.bf16.mxu0 %v589
    %3150 = vmatpush1.bf16.msra.mxu0 %v588
    %3151 = vmatprep.subr.bf16.mxu0 %v593
    %3152 = vmatpush1.bf16.msra.mxu0 %v592
    %3153 = vmatprep.subr.bf16.mxu0 %v597
    %3154 = vmatpush1.bf16.msra.mxu0 %v596
    %3155 = vmatprep.subr.bf16.mxu0 %v601
    %3156 = vmatpush1.bf16.msra.mxu0 %v600
    %3157 = vmatprep.subr.bf16.mxu0 %v605
    %3158 = vmatpush1.bf16.msra.mxu0 %v604
    %3159 = vmatprep.subr.bf16.mxu0 %v609
    %3160 = vmatpush1.bf16.msra.mxu0 %v608
    %3161 = vmatprep.subr.bf16.mxu0 %v613
    %3162 = vmatpush1.bf16.msra.mxu0 %v612
    %3163 = vmatprep.subr.bf16.mxu0 %v617
    %3164 = vmatpush1.bf16.msra.mxu0 %v616
    %3165 = vmatprep.subr.bf16.mxu0 0
    %3166 = vmatpush1.bf16.msra.mxu0 0
    %3167 = vmatprep.subr.bf16.mxu0 0
    %3168 = vmatpush1.bf16.msra.mxu0 0
    %3169 = vmatprep.subr.bf16.mxu0 0
    %3170 = vmatpush1.bf16.msra.mxu0 0
    %3171 = vmatprep.subr.bf16.mxu0 0
    %3172 = vmatpush1.bf16.msra.mxu0 0
    %3173 = vmatprep.subr.bf16.mxu0 0
    %3174 = vmatpush1.bf16.msra.mxu0 0
    %3175 = vmatprep.subr.bf16.mxu0 0
    %3176 = vmatpush1.bf16.msra.mxu0 0
    %3177 = vmatprep.subr.bf16.mxu0 0
    %3178 = vmatpush1.bf16.msra.mxu0 0
    %3179 = vmatprep.subr.bf16.mxu0 0
    %3180 = vmatpush1.bf16.msra.mxu0 0
    %3181 = vmatprep.mubr.bf16.mxu0 0
    %3182 = vmatmul.mubr.bf16.gmra.mrb[0].mxu0 %v3007
    %v3183 = vpop.f32.mrb[0].mxu0
    %v3184 = vadd.f32 0.0, %v3183
    %v3185 = vpop.f32.mrb[0].mxu0
    %v3186 = vadd.f32 0.0, %v3185
    %v3187 = vpop.f32.mrb[0].mxu0
    %v3188 = vpop.f32.mrb[0].mxu0
    %3189 = vdwg.mxu0
    %3190 = vmatprep.subr.bf16.mxu0 %v591
    %3191 = vmatpush1.bf16.msra.mxu0 %v590
    %3192 = vmatprep.subr.bf16.mxu0 %v595
    %3193 = vmatpush1.bf16.msra.mxu0 %v594
    %3194 = vmatprep.subr.bf16.mxu0 %v599
    %3195 = vmatpush1.bf16.msra.mxu0 %v598
    %3196 = vmatprep.subr.bf16.mxu0 %v603
    %3197 = vmatpush1.bf16.msra.mxu0 %v602
    %3198 = vmatprep.subr.bf16.mxu0 %v607
    %3199 = vmatpush1.bf16.msra.mxu0 %v606
    %3200 = vmatprep.subr.bf16.mxu0 %v611
    %3201 = vmatpush1.bf16.msra.mxu0 %v610
    %3202 = vmatprep.subr.bf16.mxu0 %v615
    %3203 = vmatpush1.bf16.msra.mxu0 %v614
    %3204 = vmatprep.subr.bf16.mxu0 %v619
    %3205 = vmatpush1.bf16.msra.mxu0 %v618
    %3206 = vmatprep.subr.bf16.mxu0 0
    %3207 = vmatpush1.bf16.msra.mxu0 0
    %3208 = vmatprep.subr.bf16.mxu0 0
    %3209 = vmatpush1.bf16.msra.mxu0 0
    %3210 = vmatprep.subr.bf16.mxu0 0
    %3211 = vmatpush1.bf16.msra.mxu0 0
    %3212 = vmatprep.subr.bf16.mxu0 0
    %3213 = vmatpush1.bf16.msra.mxu0 0
    %3214 = vmatprep.subr.bf16.mxu0 0
    %3215 = vmatpush1.bf16.msra.mxu0 0
    %3216 = vmatprep.subr.bf16.mxu0 0
    %3217 = vmatpush1.bf16.msra.mxu0 0
    %3218 = vmatprep.subr.bf16.mxu0 0
    %3219 = vmatpush1.bf16.msra.mxu0 0
    %3220 = vmatprep.subr.bf16.mxu0 0
    %3221 = vmatpush1.bf16.msra.mxu0 0
    %3222 = vmatprep.mubr.bf16.mxu0 0
    %3223 = vmatmul.mubr.bf16.gmra.mrb[0].mxu0 %v3007
    %v3224 = vpop.f32.mrb[0].mxu0
    %v3225 = vadd.f32 0.0, %v3224
    %v3226 = vpop.f32.mrb[0].mxu0
    %v3227 = vadd.f32 0.0, %v3226
    %v3228 = vpop.f32.mrb[0].mxu0
    %v3229 = vpop.f32.mrb[0].mxu0
    %3230 = vdwg.mxu0
    %3231 = vmatprep.subr.bf16.mxu0 %v831
    %3232 = vmatpush1.bf16.msra.mxu0 %v830
    %3233 = vmatprep.subr.bf16.mxu0 %v835
    %3234 = vmatpush1.bf16.msra.mxu0 %v834
    %3235 = vmatprep.subr.bf16.mxu0 %v839
    %3236 = vmatpush1.bf16.msra.mxu0 %v838
    %3237 = vmatprep.subr.bf16.mxu0 %v843
    %3238 = vmatpush1.bf16.msra.mxu0 %v842
    %3239 = vmatprep.subr.bf16.mxu0 %v847
    %3240 = vmatpush1.bf16.msra.mxu0 %v846
    %3241 = vmatprep.subr.bf16.mxu0 %v851
    %3242 = vmatpush1.bf16.msra.mxu0 %v850
    %3243 = vmatprep.subr.bf16.mxu0 %v855
    %3244 = vmatpush1.bf16.msra.mxu0 %v854
    %3245 = vmatprep.subr.bf16.mxu0 %v859
    %3246 = vmatpush1.bf16.msra.mxu0 %v858
    %3247 = vmatprep.subr.bf16.mxu0 0
    %3248 = vmatpush1.bf16.msra.mxu0 0
    %3249 = vmatprep.subr.bf16.mxu0 0
    %3250 = vmatpush1.bf16.msra.mxu0 0
    %3251 = vmatprep.subr.bf16.mxu0 0
    %3252 = vmatpush1.bf16.msra.mxu0 0
    %3253 = vmatprep.subr.bf16.mxu0 0
    %3254 = vmatpush1.bf16.msra.mxu0 0
    %3255 = vmatprep.subr.bf16.mxu0 0
    %3256 = vmatpush1.bf16.msra.mxu0 0
    %3257 = vmatprep.subr.bf16.mxu0 0
    %3258 = vmatpush1.bf16.msra.mxu0 0
    %3259 = vmatprep.subr.bf16.mxu0 0
    %3260 = vmatpush1.bf16.msra.mxu0 0
    %3261 = vmatprep.subr.bf16.mxu0 0
    %3262 = vmatpush1.bf16.msra.mxu0 0
    %3263 = vmatprep.mubr.bf16.mxu0 0
    %3264 = vmatmul.mubr.bf16.gmra.mrb[0].mxu0 %v3148
    %v3265 = vpop.f32.mrb[0].mxu0
    %v3266 = vadd.f32 %v3184, %v3265
    %v3267 = vpop.f32.mrb[0].mxu0
    %v3268 = vadd.f32 %v3186, %v3267
    %v3269 = vpop.f32.mrb[0].mxu0
    %v3270 = vpop.f32.mrb[0].mxu0
    %3271 = vdwg.mxu0
    %3272 = vmatprep.subr.bf16.mxu0 %v833
    %3273 = vmatpush1.bf16.msra.mxu0 %v832
    %3274 = vmatprep.subr.bf16.mxu0 %v837
    %3275 = vmatpush1.bf16.msra.mxu0 %v836
    %3276 = vmatprep.subr.bf16.mxu0 %v841
    %3277 = vmatpush1.bf16.msra.mxu0 %v840
    %3278 = vmatprep.subr.bf16.mxu0 %v845
    %3279 = vmatpush1.bf16.msra.mxu0 %v844
    %3280 = vmatprep.subr.bf16.mxu0 %v849
    %3281 = vmatpush1.bf16.msra.mxu0 %v848
    %3282 = vmatprep.subr.bf16.mxu0 %v853
    %3283 = vmatpush1.bf16.msra.mxu0 %v852
    %3284 = vmatprep.subr.bf16.mxu0 %v857
    %3285 = vmatpush1.bf16.msra.mxu0 %v856
    %3286 = vmatprep.subr.bf16.mxu0 %v861
    %3287 = vmatpush1.bf16.msra.mxu0 %v860
    %3288 = vmatprep.subr.bf16.mxu0 0
    %3289 = vmatpush1.bf16.msra.mxu0 0
    %3290 = vmatprep.subr.bf16.mxu0 0
    %3291 = vmatpush1.bf16.msra.mxu0 0
    %3292 = vmatprep.subr.bf16.mxu0 0
    %3293 = vmatpush1.bf16.msra.mxu0 0
    %3294 = vmatprep.subr.bf16.mxu0 0
    %3295 = vmatpush1.bf16.msra.mxu0 0
    %3296 = vmatprep.subr.bf16.mxu0 0
    %3297 = vmatpush1.bf16.msra.mxu0 0
    %3298 = vmatprep.subr.bf16.mxu0 0
    %3299 = vmatpush1.bf16.msra.mxu0 0
    %3300 = vmatprep.subr.bf16.mxu0 0
    %3301 = vmatpush1.bf16.msra.mxu0 0
    %3302 = vmatprep.subr.bf16.mxu0 0
    %3303 = vmatpush1.bf16.msra.mxu0 0
    %3304 = vmatprep.mubr.bf16.mxu0 0
    %3305 = vmatmul.mubr.bf16.gmra.mrb[0].mxu0 %v3148
    %v3306 = vpop.f32.mrb[0].mxu0
    %v3307 = vadd.f32 %v3225, %v3306
    %v3308 = vpop.f32.mrb[0].mxu0
    %v3309 = vadd.f32 %v3227, %v3308
    %v3310 = vpop.f32.mrb[0].mxu0
    %v3311 = vpop.f32.mrb[0].mxu0
    %3312 = vdwg.mxu0
    %v3313 = vadd.f32 %v3266, %v171
    %v3314 = vadd.f32 %v3268, %v175
    %v3315 = vadd.f32 %v3307, %v179
    %v3316 = vadd.f32 %v3309, %v183
    %v3317 = vxor.u32 %v3313, 2147483648
    %v3318 = vmul.f32 %v3317, 1.442695
    %v3319 = vpow.pop %v3318
    %v3320 = vadd.f32 %v3319, 1.0
    %v3321 = vrcp.pop %v3320
    %v3322 = vmul.f32 1.0, %v3321
    %v3323 = vxor.u32 %v3314, 2147483648
    %v3324 = vmul.f32 %v3323, 1.442695
    %v3325 = vpow.pop %v3324
    %v3326 = vadd.f32 %v3325, 1.0
    %v3327 = vrcp.pop %v3326
    %v3328 = vmul.f32 1.0, %v3327
    %v3329 = vtanh.pop %v3315
    %v3330 = vxor.u32 %v3316, 2147483648
    %v3331 = vmul.f32 %v3330, 1.442695
    %v3332 = vpow.pop %v3331
    %v3333 = vadd.f32 %v3332, 1.0
    %v3334 = vrcp.pop %v3333
    %v3335 = vmul.f32 1.0, %v3334
    %v3336 = vmul.f32 %v3328, %v3004
    %v3337 = vmul.f32 %v3322, %v3329
    %v3338 = vadd.f32 %v3336, %v3337
    %v3339 = vtanh.pop %v3338
    %v3340 = vmul.f32 %v3335, %v3339
    %v3341 = vpack.c.bf16 %v3340, %v3340
    %s3342 = scalar_lea.vmem %s5, 7
    %3343 = vst [vmem:[%s3342] sm:$0x1] %v3341
    %3344 = vst [vmem:[#allocation2] sm:$0x3] %v3147
    %3345 = vst [vmem:[#allocation3] sm:$0x3] %v3145
    %3346 = vst [vmem:[#allocation4] sm:$0x3] %v3340
    %3347 = vst [vmem:[#allocation5] sm:$0x3] %v3338
    // Predicated region
    $region38: #{simple_lstm_forward.1} parent=1 // pred_check
      _
    $region39: #{simple_lstm_forward.1} parent=1 // pred_check_branch
      %3349 = sbr.rel (0) target = $region41
    $region40: #{simple_lstm_forward.1} parent=1 // pred_region
      _
    $region41: #{simple_lstm_forward.1} parent=1 // pred_fallthru
      _
    // Predicated region
    $region42: #{simple_lstm_forward.1} parent=1 // pred_check
      _
    $region43: #{simple_lstm_forward.1} parent=1 // pred_check_branch
      %3351 = sbr.rel (0) target = $region45
    $region44: #{simple_lstm_forward.1} parent=1 // pred_region
      _
    $region45: #{simple_lstm_forward.1} parent=1 // pred_fallthru
      _
    %3352 = vsyncpa [#allocation7], 1
    %3353 = vsyncpa [#allocation9], 1

</llo_original>
